<compile_context>
chip_gen: v6e
topology: v6e:2x2x1
jax: 0.10.0
libtpu: 0.0.40
codegen_flags: <defaults>
</compile_context>

<pallas_src>
import functools

import jax
import jax.numpy as jnp
from jax import lax
from jax.experimental import pallas as pl
from jax.experimental.pallas import tpu as pltpu


def _fused_conv2_identity_store(taps2, xid_flat, wcat_ref, bcat_ref, o_ref, hw):
    """One trans_b GEMM for conv2 + identity (+ pre-added biases), lane-dense output."""
    patch2 = jnp.concatenate(taps2 + [xid_flat], axis=-1)        # (M2, 9*Cout + Cin) bf16
    out_t = lax.dot_general(wcat_ref[...], patch2,
                            (((1,), (1,)), ((), ())),            # A @ B^T
                            preferred_element_type=jnp.float32)
    out_t = out_t + bcat_ref[...]                                 # (Cout, M2) f32
    nb = o_ref.shape[0]
    for b in range(nb):                                           # store-only loop; nb is small
        o_ref[b] = out_t[:, b * hw:(b + 1) * hw].astype(o_ref.dtype)


def _disc_block_down_kernel(H2, W2, xq_ref, xid_ref, w1g_ref, b1_ref,
                            wcat_ref, bcat_ref, o_ref, s_ref):
    # xq_ref  : (nb, 4, H2+1, W2+1, Cin)  bf16  padded input, parity planes k=2*p+q,
    #                                          plane[p][q][a,b] == xpad[2a+p, 2b+q]
    # xid_ref : (nb, H2, W2, Cin)         bf16  x at even positions (identity branch)
    # w1g_ref : (3, 3*Cin, Cout)          bf16  conv1 weights grouped by dx, rows (dy, ci)
    # b1_ref  : (1, Cout)                 f32
    # wcat_ref: (Cout, 9*Cout + Cin)      bf16  [conv2 taps (row-major dy,dx) | identity]^T
    # bcat_ref: (Cout, 1)                 f32   b2 + b_identity
    # o_ref   : (nb, Cout, H2*W2)         f32   flat NCHW output block
    # s_ref   : (nb, 4, H2+1, W2+1, Cout) bf16  padded parity planes of the conv1 activation
    nb = xq_ref.shape[0]
    Cin = xq_ref.shape[-1]
    Cout = o_ref.shape[1]
    M1 = nb * 4 * H2 * W2            # conv1 rows: 4 output-parity classes, full resolution
    M2 = nb * H2 * W2                # conv2/identity rows: downsampled positions only

    # 4x4 neighborhood blocks: xt[ry][rx][n, a, b, :] == xpad[n, 2a+ry, 2b+rx, :]
    xt = [[xq_ref[:, 2 * (ry & 1) + (rx & 1),
                  (ry >> 1):(ry >> 1) + H2,
                  (rx >> 1):(rx >> 1) + W2, :]
           for rx in range(4)] for ry in range(4)]

    # ---------------- conv1 (ReLU is a no-op on the zero padding) ----------------
    # Input is already bf16 and >= 0 after this max; dx-grouped im2col: 3 accumulating
    # GEMMs with K = 3*Cin, batched over (nb, 4 parity classes, H2, W2).
    classes = ((0, 0), (0, 1), (1, 0), (1, 1))
    acc1 = None
    for g in range(3):               # g == dx
        per_class = []
        for (py, px) in classes:
            per_class.append(jnp.concatenate(
                [jnp.maximum(xt[py + dy][px + g], 0.0) for dy in range(3)], axis=-1))
        patch = jnp.stack(per_class, axis=1)               # (nb, 4, H2, W2, 3*Cin) bf16
        patch = patch.reshape(M1, 3 * Cin)
        part = jnp.dot(patch, w1g_ref[g], preferred_element_type=jnp.float32)
        acc1 = part if acc1 is None else acc1 + part
    y1 = jnp.maximum(acc1 + b1_ref[...], 0.0).astype(jnp.bfloat16)
    y1 = y1.reshape(nb, 2, 2, H2, W2, Cout)                # (nb, cy, cx, H2, W2, Cout)

    # -------- stage conv1 activation as padded parity planes (bf16 scratch) --------
    # plane (p, q)[a, b] == padded-y1[2a+p, 2b+q]; class (cy, cx) lands in plane
    # (1-cy, 1-cx) at offset (cy, cx).  Only two thin border strips need zeroing.
    s_ref[:, 0:2, 0, :, :] = jnp.zeros((nb, 2, W2 + 1, Cout), jnp.bfloat16)  # p=0 planes, row 0
    zcol = jnp.zeros((nb, H2 + 1, Cout), jnp.bfloat16)
    s_ref[:, 0, :, 0, :] = zcol                                              # plane (0,0), col 0
    s_ref[:, 2, :, 0, :] = zcol                                              # plane (1,0), col 0
    for cy in range(2):
        for cx in range(2):
            k = 2 * (1 - cy) + (1 - cx)
            s_ref[:, k, cy:cy + H2, cx:cx + W2, :] = y1[:, cy, cx]

    # ---------- conv2 + identity at the downsampled positions (dense taps) ----------
    taps2 = []
    for dy in range(3):
        for dx in range(3):
            k = 2 * (dy & 1) + (dx & 1)
            t = s_ref[:, k, (dy >> 1):(dy >> 1) + H2, (dx >> 1):(dx >> 1) + W2, :]
            taps2.append(t.reshape(M2, Cout))
    xid = xid_ref[...].reshape(M2, Cin)
    _fused_conv2_identity_store(taps2, xid, wcat_ref, bcat_ref, o_ref, H2 * W2)


def _disc_block_full_kernel(H, W, xp_ref, w1g_ref, b1_ref, wcat_ref, bcat_ref,
                            o_ref, y1p_ref):
    # No-downsample path: same structure, full-resolution everywhere, dense taps from a
    # plainly padded scratch (stride == 1, so no parity machinery is needed).
    nb, Hp, Wp, Cin = xp_ref.shape
    Cout = o_ref.shape[1]
    M = nb * H * W

    h = jnp.maximum(xp_ref[...], 0.0)                       # bf16 ReLU; padding stays 0

    acc1 = None
    for g in range(3):                                      # g == dx
        hg = h[:, :, g:g + W, :]                            # (nb, Hp, W, Cin)
        patch = jnp.concatenate([hg[:, dy:dy + H] for dy in range(3)], axis=-1)
        patch = patch.reshape(M, 3 * Cin)
        part = jnp.dot(patch, w1g_ref[g], preferred_element_type=jnp.float32)
        acc1 = part if acc1 is None else acc1 + part
    y1 = jnp.maximum(acc1 + b1_ref[...], 0.0).astype(jnp.bfloat16)

    zrow = jnp.zeros((nb, Wp, Cout), jnp.bfloat16)
    zcol = jnp.zeros((nb, Hp, Cout), jnp.bfloat16)
    y1p_ref[:, 0, :, :] = zrow
    y1p_ref[:, Hp - 1, :, :] = zrow
    y1p_ref[:, :, 0, :] = zcol
    y1p_ref[:, :, Wp - 1, :] = zcol
    y1p_ref[:, 1:H + 1, 1:W + 1, :] = y1.reshape(nb, H, W, Cout)

    taps2 = [y1p_ref[:, dy:dy + H, dx:dx + W, :].reshape(M, Cout)
             for dy in range(3) for dx in range(3)]
    xid = xp_ref[:, 1:H + 1, 1:W + 1, :].reshape(M, Cin)    # un-ReLU'd original input
    _fused_conv2_identity_store(taps2, xid, wcat_ref, bcat_ref, o_ref, H * W)


def _pick_block_n(N, H, W, Cin, Cout, downsample=True, budget_bytes=8 << 20):
    """Largest divisor of N (capped at N//2) whose VMEM footprint fits the budget."""
    H2 = H // 2 if downsample else H
    W2 = W // 2 if downsample else W
    Hp, Wp = H + 2, W + 2
    b_in = 2 * Hp * Wp * Cin * 2                       # bf16 input block, double-buffered
    b_xid = 2 * H2 * W2 * Cin * 2
    b_out = 2 * Cout * H2 * W2 * 4                     # f32 output block, double-buffered
    b_scr = (4 * (H2 + 1) * (W2 + 1) if downsample else Hp * Wp) * Cout * 2
    b_tmp = (H * W * (3 * Cin * 2 + Cout * 4 + Cout * 2)   # conv1 patch / f32 acc / y1
             + H2 * W2 * (9 * Cout + Cin) * 2               # fused conv2 patch
             + Cout * H2 * W2 * 4)                          # transposed f32 result
    per_elem = int(1.5 * (b_in + b_xid + b_out + b_scr + b_tmp))
    nb = int(max(1, min(N, budget_bytes // max(per_elem, 1))))
    if N >= 2:
        nb = max(1, min(nb, N // 2))   # >= 2 grid steps: feeds both v7x TCs + the pipeline
    while N % nb:
        nb -= 1
    return nb


def discriminator_block(x_nchw, w1, b1, w2, b2, wid, bid, downsample=True,
                        block_n=None):
    """Fused SAGAN DiscriminatorBlock forward.

    x_nchw : (N, Cin, H, W) float32
    w1     : (3, 3, Cin,  Cout) HWIO conv1 weight (already spectral-normalized)
    w2     : (3, 3, Cout, Cout) HWIO conv2 weight
    wid    : (Cin, Cout) identity 1x1 conv weight (identity matrix if Cin == Cout)
    b1, b2, bid : (Cout,) biases
    Returns NCHW float32: (N, Cout, H/2, W/2) if downsample else (N, Cout, H, W).
    """
    N, Cin, H, W = x_nchw.shape
    Cout = w1.shape[-1]
    if downsample:
        assert H % 2 == 0 and W % 2 == 0, "downsample needs even H, W"
    H2, W2 = (H // 2, W // 2) if downsample else (H, W)

    # ----- kernel-side parameter layouts (tiny; bf16 at the MXU inputs) -----
    w1g = jnp.transpose(w1, (1, 0, 2, 3)).reshape(3, 3 * Cin, Cout).astype(jnp.bfloat16)
    b1r = b1.reshape(1, Cout).astype(jnp.float32)
    w2_blocks = [jnp.transpose(w2[dy, dx]) for dy in range(3) for dx in range(3)]
    wcat = jnp.concatenate(w2_blocks + [jnp.transpose(wid)], axis=1).astype(jnp.bfloat16)
    bcat = (b2 + bid).reshape(Cout, 1).astype(jnp.float32)

    # ----- bf16 activations, padded + (for downsample) parity-split in one XLA pass -----
    x_nhwc = jnp.transpose(x_nchw, (0, 2, 3, 1)).astype(jnp.bfloat16)
    xp = jnp.pad(x_nhwc, ((0, 0), (1, 1), (1, 1), (0, 0)))

    nb = block_n or _pick_block_n(N, H, W, Cin, Cout, downsample)
    assert N % nb == 0
    grid = (N // nb,)

    if downsample:
        xq = xp.reshape(N, H2 + 1, 2, W2 + 1, 2, Cin)
        xq = jnp.transpose(xq, (0, 2, 4, 1, 3, 5)).reshape(N, 4, H2 + 1, W2 + 1, Cin)
        xid = x_nhwc[:, ::2, ::2, :]                    # identity taps (nearest 0.5x)
        kernel = functools.partial(_disc_block_down_kernel, H2, W2)
        in_specs = [
            pl.BlockSpec((nb, 4, H2 + 1, W2 + 1, Cin), lambda n: (n, 0, 0, 0, 0)),
            pl.BlockSpec((nb, H2, W2, Cin), lambda n: (n, 0, 0, 0)),
            pl.BlockSpec((3, 3 * Cin, Cout), lambda n: (0, 0, 0)),
            pl.BlockSpec((1, Cout), lambda n: (0, 0)),
            pl.BlockSpec((Cout, 9 * Cout + Cin), lambda n: (0, 0)),
            pl.BlockSpec((Cout, 1), lambda n: (0, 0)),
        ]
        inputs = (xq, xid, w1g, b1r, wcat, bcat)
        scratch = [pltpu.VMEM((nb, 4, H2 + 1, W2 + 1, Cout), jnp.bfloat16)]
        in_bytes = xq.size * 2 + xid.size * 2
    else:
        kernel = functools.partial(_disc_block_full_kernel, H, W)
        in_specs = [
            pl.BlockSpec((nb, H + 2, W + 2, Cin), lambda n: (n, 0, 0, 0)),
            pl.BlockSpec((3, 3 * Cin, Cout), lambda n: (0, 0, 0)),
            pl.BlockSpec((1, Cout), lambda n: (0, 0)),
            pl.BlockSpec((Cout, 9 * Cout + Cin), lambda n: (0, 0)),
            pl.BlockSpec((Cout, 1), lambda n: (0, 0)),
        ]
        inputs = (xp, w1g, b1r, wcat, bcat)
        scratch = [pltpu.VMEM((nb, H + 2, W + 2, Cout), jnp.bfloat16)]
        in_bytes = xp.size * 2

    flops = 2 * N * (H * W * 9 * Cin * Cout + H2 * W2 * (9 * Cout + Cin) * Cout)
    bytes_accessed = int(in_bytes + N * Cout * H2 * W2 * 4
                         + (w1g.size + wcat.size) * 2 + (b1r.size + bcat.size) * 4)

    out_flat = pl.pallas_call(
        kernel,
        out_shape=jax.ShapeDtypeStruct((N, Cout, H2 * W2), jnp.float32),
        grid_spec=pltpu.PrefetchScalarGridSpec(
            num_scalar_prefetch=0,
            grid=grid,
            in_specs=in_specs,
            out_specs=pl.BlockSpec((nb, Cout, H2 * W2), lambda n: (n, 0, 0)),
            scratch_shapes=scratch,
        ),
        compiler_params=pltpu.CompilerParams(
            dimension_semantics=("parallel",),
            vmem_limit_bytes=48 * 1024 * 1024),
        cost_estimate=pl.CostEstimate(
            flops=flops, transcendentals=0, bytes_accessed=bytes_accessed),
    )(*inputs)

    # (N, Cout, H2*W2) is already flat NCHW -> free reshape, no transpose pass.
    return out_flat.reshape(N, Cout, H2, W2)


def _spectral_normalize(w_oihw):
    """Divide a PyTorch-layout (O, I, kh, kw) conv weight by its spectral norm."""
    mat = w_oihw.reshape(w_oihw.shape[0], -1)
    sigma = jnp.linalg.norm(mat, ord=2)   # largest singular value (power-iter fixed point)
    return w_oihw / sigma


def make_params(key, in_channels, out_channels):
    """Returns (w1 HWIO, b1, w2 HWIO, b2, wid (Cin,Cout), bid), all float32."""
    k1, k2, k3, k4, k5, k6 = jax.random.split(key, 6)
    w1 = _spectral_normalize(
        0.1 * jax.random.normal(k1, (out_channels, in_channels, 3, 3), jnp.float32))
    b1 = 0.1 * jax.random.normal(k2, (out_channels,), jnp.float32)
    w2 = _spectral_normalize(
        0.1 * jax.random.normal(k3, (out_channels, out_channels, 3, 3), jnp.float32))
    b2 = 0.1 * jax.random.normal(k4, (out_channels,), jnp.float32)
    if in_channels != out_channels:
        wid = _spectral_normalize(
            0.1 * jax.random.normal(k5, (out_channels, in_channels, 1, 1), jnp.float32))
        bid = 0.1 * jax.random.normal(k6, (out_channels,), jnp.float32)
    else:
        # nn.Identity() expressed exactly as a 1x1 conv with W = I, b = 0.
        wid = jnp.eye(out_channels, dtype=jnp.float32).reshape(
            out_channels, in_channels, 1, 1)
        bid = jnp.zeros((out_channels,), jnp.float32)
    w1_hwio = jnp.transpose(w1, (2, 3, 1, 0))
    w2_hwio = jnp.transpose(w2, (2, 3, 1, 0))
    wid_ic = jnp.transpose(wid[:, :, 0, 0], (1, 0))      # (Cin, Cout)
    return w1_hwio, b1, w2_hwio, b2, wid_ic, bid


def reference(x_nchw, w1, b1, w2, b2, wid, bid, downsample=True):
    """Plain-JAX float32 reference of the same forward pass (for verification)."""
    dn = ('NHWC', 'HWIO', 'NHWC')
    x = jnp.transpose(x_nchw, (0, 2, 3, 1))
    h = jax.nn.relu(x)
    h = lax.conv_general_dilated(h, w1, (1, 1), 'SAME',
                                 dimension_numbers=dn) + b1.reshape(1, 1, 1, -1)
    h = jax.nn.relu(h)
    h = lax.conv_general_dilated(h, w2, (1, 1), 'SAME',
                                 dimension_numbers=dn) + b2.reshape(1, 1, 1, -1)
    cin, cout = wid.shape
    idn = lax.conv_general_dilated(x, wid.reshape(1, 1, cin, cout), (1, 1), 'SAME',
                                   dimension_numbers=dn) + bid.reshape(1, 1, 1, -1)
    out = idn + h
    if downsample:
        out = out[:, ::2, ::2, :]      # nearest-neighbor, scale_factor=0.5
    return jnp.transpose(out, (0, 3, 1, 2))


if __name__ == "__main__":
    key = jax.random.PRNGKey(0)
    kx, kp = jax.random.split(key)

    N, Cin, Cout, H, W = 2, 4, 8, 16, 16
    x = jax.random.normal(kx, (N, Cin, H, W), jnp.float32)
    params = make_params(kp, Cin, Cout)

    # downsample=True (the usual configuration)
    out = jax.block_until_ready(discriminator_block(x, *params, downsample=True))
    ref = jax.block_until_ready(reference(x, *params, downsample=True))
    assert out.shape == (N, Cout, H // 2, W // 2), out.shape
    # bf16 data path -> slightly looser tolerance than a pure-f32 pipeline.
    assert jnp.allclose(out, ref, atol=3e-2, rtol=3e-2), (
        "max abs diff %e" % float(jnp.max(jnp.abs(out - ref))))

    # downsample=False path
    out2 = jax.block_until_ready(discriminator_block(x, *params, downsample=False))
    ref2 = jax.block_until_ready(reference(x, *params, downsample=False))
    assert out2.shape == (N, Cout, H, W), out2.shape
    assert jnp.allclose(out2, ref2, atol=3e-2, rtol=3e-2), (
        "max abs diff %e" % float(jnp.max(jnp.abs(out2 - ref2))))

    print("KERNEL_OK")
</pallas_src>

<mosaic_0001>
module attributes {stable_mosaic.version = 11 : i64} {
  func.func @_disc_block_down_kernel(%arg0: i32, %arg1: memref<1x4x9x9x4xbf16, #tpu.memory_space<vmem>>, %arg2: memref<1x8x8x4xbf16, #tpu.memory_space<vmem>>, %arg3: memref<3x12x8xbf16, #tpu.memory_space<vmem>>, %arg4: memref<1x8xf32, #tpu.memory_space<vmem>>, %arg5: memref<8x76xbf16, #tpu.memory_space<vmem>>, %arg6: memref<8x1xf32, #tpu.memory_space<vmem>>, %arg7: memref<1x8x64xf32, #tpu.memory_space<vmem>>, %arg8: memref<1x4x9x9x8xbf16, #tpu.memory_space<vmem>>) attributes {dimension_semantics = [#tpu.dimension_semantics<parallel>], iteration_bounds = array<i64: 2>, scalar_prefetch = 0 : i64, scratch_operands = 1 : i64, tpu.core_type = #tpu.core_type<tc>, window_params = [{transform_indices = @transform_0, window_bounds = array<i64: 1, 4, 9, 9, 4>}, {transform_indices = @transform_1, window_bounds = array<i64: 1, 8, 8, 4>}, {pipeline_mode = #tpu.pipeline_mode<synchronous>, transform_indices = @transform_2, window_bounds = array<i64: 3, 12, 8>}, {pipeline_mode = #tpu.pipeline_mode<synchronous>, transform_indices = @transform_3, window_bounds = array<i64: 1, 8>}, {pipeline_mode = #tpu.pipeline_mode<synchronous>, transform_indices = @transform_4, window_bounds = array<i64: 8, 76>}, {pipeline_mode = #tpu.pipeline_mode<synchronous>, transform_indices = @transform_5, window_bounds = array<i64: 8, 1>}, {transform_indices = @transform_6, window_bounds = array<i64: 1, 8, 64>}]} {
    %c0 = arith.constant 0 : index
    %c0_0 = arith.constant 0 : index
    %c0_1 = arith.constant 0 : index
    %c0_2 = arith.constant 0 : index
    %c0_3 = arith.constant 0 : index
    %0 = vector.load %arg1[%c0, %c0_0, %c0_1, %c0_2, %c0_3] : memref<1x4x9x9x4xbf16, #tpu.memory_space<vmem>>, vector<1x1x8x8x4xbf16>
    %1 = vector.shape_cast %0 : vector<1x1x8x8x4xbf16> to vector<1x8x8x4xbf16>
    %c0_4 = arith.constant 0 : index
    %c1 = arith.constant 1 : index
    %c0_5 = arith.constant 0 : index
    %c0_6 = arith.constant 0 : index
    %c0_7 = arith.constant 0 : index
    %2 = vector.load %arg1[%c0_4, %c1, %c0_5, %c0_6, %c0_7] : memref<1x4x9x9x4xbf16, #tpu.memory_space<vmem>>, vector<1x1x8x8x4xbf16>
    %3 = vector.shape_cast %2 : vector<1x1x8x8x4xbf16> to vector<1x8x8x4xbf16>
    %c0_8 = arith.constant 0 : index
    %c0_9 = arith.constant 0 : index
    %c0_10 = arith.constant 0 : index
    %c1_11 = arith.constant 1 : index
    %c0_12 = arith.constant 0 : index
    %4 = vector.load %arg1[%c0_8, %c0_9, %c0_10, %c1_11, %c0_12] : memref<1x4x9x9x4xbf16, #tpu.memory_space<vmem>>, vector<1x1x8x8x4xbf16>
    %5 = vector.shape_cast %4 : vector<1x1x8x8x4xbf16> to vector<1x8x8x4xbf16>
    %c0_13 = arith.constant 0 : index
    %c1_14 = arith.constant 1 : index
    %c0_15 = arith.constant 0 : index
    %c1_16 = arith.constant 1 : index
    %c0_17 = arith.constant 0 : index
    %6 = vector.load %arg1[%c0_13, %c1_14, %c0_15, %c1_16, %c0_17] : memref<1x4x9x9x4xbf16, #tpu.memory_space<vmem>>, vector<1x1x8x8x4xbf16>
    %7 = vector.shape_cast %6 : vector<1x1x8x8x4xbf16> to vector<1x8x8x4xbf16>
    %c0_18 = arith.constant 0 : index
    %c2 = arith.constant 2 : index
    %c0_19 = arith.constant 0 : index
    %c0_20 = arith.constant 0 : index
    %c0_21 = arith.constant 0 : index
    %8 = vector.load %arg1[%c0_18, %c2, %c0_19, %c0_20, %c0_21] : memref<1x4x9x9x4xbf16, #tpu.memory_space<vmem>>, vector<1x1x8x8x4xbf16>
    %9 = vector.shape_cast %8 : vector<1x1x8x8x4xbf16> to vector<1x8x8x4xbf16>
    %c0_22 = arith.constant 0 : index
    %c3 = arith.constant 3 : index
    %c0_23 = arith.constant 0 : index
    %c0_24 = arith.constant 0 : index
    %c0_25 = arith.constant 0 : index
    %10 = vector.load %arg1[%c0_22, %c3, %c0_23, %c0_24, %c0_25] : memref<1x4x9x9x4xbf16, #tpu.memory_space<vmem>>, vector<1x1x8x8x4xbf16>
    %11 = vector.shape_cast %10 : vector<1x1x8x8x4xbf16> to vector<1x8x8x4xbf16>
    %c0_26 = arith.constant 0 : index
    %c2_27 = arith.constant 2 : index
    %c0_28 = arith.constant 0 : index
    %c1_29 = arith.constant 1 : index
    %c0_30 = arith.constant 0 : index
    %12 = vector.load %arg1[%c0_26, %c2_27, %c0_28, %c1_29, %c0_30] : memref<1x4x9x9x4xbf16, #tpu.memory_space<vmem>>, vector<1x1x8x8x4xbf16>
    %13 = vector.shape_cast %12 : vector<1x1x8x8x4xbf16> to vector<1x8x8x4xbf16>
    %c0_31 = arith.constant 0 : index
    %c3_32 = arith.constant 3 : index
    %c0_33 = arith.constant 0 : index
    %c1_34 = arith.constant 1 : index
    %c0_35 = arith.constant 0 : index
    %14 = vector.load %arg1[%c0_31, %c3_32, %c0_33, %c1_34, %c0_35] : memref<1x4x9x9x4xbf16, #tpu.memory_space<vmem>>, vector<1x1x8x8x4xbf16>
    %15 = vector.shape_cast %14 : vector<1x1x8x8x4xbf16> to vector<1x8x8x4xbf16>
    %c0_36 = arith.constant 0 : index
    %c0_37 = arith.constant 0 : index
    %c1_38 = arith.constant 1 : index
    %c0_39 = arith.constant 0 : index
    %c0_40 = arith.constant 0 : index
    %16 = vector.load %arg1[%c0_36, %c0_37, %c1_38, %c0_39, %c0_40] : memref<1x4x9x9x4xbf16, #tpu.memory_space<vmem>>, vector<1x1x8x8x4xbf16>
    %17 = vector.shape_cast %16 : vector<1x1x8x8x4xbf16> to vector<1x8x8x4xbf16>
    %c0_41 = arith.constant 0 : index
    %c1_42 = arith.constant 1 : index
    %c1_43 = arith.constant 1 : index
    %c0_44 = arith.constant 0 : index
    %c0_45 = arith.constant 0 : index
    %18 = vector.load %arg1[%c0_41, %c1_42, %c1_43, %c0_44, %c0_45] : memref<1x4x9x9x4xbf16, #tpu.memory_space<vmem>>, vector<1x1x8x8x4xbf16>
    %19 = vector.shape_cast %18 : vector<1x1x8x8x4xbf16> to vector<1x8x8x4xbf16>
    %c0_46 = arith.constant 0 : index
    %c0_47 = arith.constant 0 : index
    %c1_48 = arith.constant 1 : index
    %c1_49 = arith.constant 1 : index
    %c0_50 = arith.constant 0 : index
    %20 = vector.load %arg1[%c0_46, %c0_47, %c1_48, %c1_49, %c0_50] : memref<1x4x9x9x4xbf16, #tpu.memory_space<vmem>>, vector<1x1x8x8x4xbf16>
    %21 = vector.shape_cast %20 : vector<1x1x8x8x4xbf16> to vector<1x8x8x4xbf16>
    %c0_51 = arith.constant 0 : index
    %c1_52 = arith.constant 1 : index
    %c1_53 = arith.constant 1 : index
    %c1_54 = arith.constant 1 : index
    %c0_55 = arith.constant 0 : index
    %22 = vector.load %arg1[%c0_51, %c1_52, %c1_53, %c1_54, %c0_55] : memref<1x4x9x9x4xbf16, #tpu.memory_space<vmem>>, vector<1x1x8x8x4xbf16>
    %23 = vector.shape_cast %22 : vector<1x1x8x8x4xbf16> to vector<1x8x8x4xbf16>
    %c0_56 = arith.constant 0 : index
    %c2_57 = arith.constant 2 : index
    %c1_58 = arith.constant 1 : index
    %c0_59 = arith.constant 0 : index
    %c0_60 = arith.constant 0 : index
    %24 = vector.load %arg1[%c0_56, %c2_57, %c1_58, %c0_59, %c0_60] : memref<1x4x9x9x4xbf16, #tpu.memory_space<vmem>>, vector<1x1x8x8x4xbf16>
    %25 = vector.shape_cast %24 : vector<1x1x8x8x4xbf16> to vector<1x8x8x4xbf16>
    %c0_61 = arith.constant 0 : index
    %c3_62 = arith.constant 3 : index
    %c1_63 = arith.constant 1 : index
    %c0_64 = arith.constant 0 : index
    %c0_65 = arith.constant 0 : index
    %26 = vector.load %arg1[%c0_61, %c3_62, %c1_63, %c0_64, %c0_65] : memref<1x4x9x9x4xbf16, #tpu.memory_space<vmem>>, vector<1x1x8x8x4xbf16>
    %27 = vector.shape_cast %26 : vector<1x1x8x8x4xbf16> to vector<1x8x8x4xbf16>
    %c0_66 = arith.constant 0 : index
    %c2_67 = arith.constant 2 : index
    %c1_68 = arith.constant 1 : index
    %c1_69 = arith.constant 1 : index
    %c0_70 = arith.constant 0 : index
    %28 = vector.load %arg1[%c0_66, %c2_67, %c1_68, %c1_69, %c0_70] : memref<1x4x9x9x4xbf16, #tpu.memory_space<vmem>>, vector<1x1x8x8x4xbf16>
    %29 = vector.shape_cast %28 : vector<1x1x8x8x4xbf16> to vector<1x8x8x4xbf16>
    %c0_71 = arith.constant 0 : index
    %c3_72 = arith.constant 3 : index
    %c1_73 = arith.constant 1 : index
    %c1_74 = arith.constant 1 : index
    %c0_75 = arith.constant 0 : index
    %30 = vector.load %arg1[%c0_71, %c3_72, %c1_73, %c1_74, %c0_75] : memref<1x4x9x9x4xbf16, #tpu.memory_space<vmem>>, vector<1x1x8x8x4xbf16>
    %31 = vector.shape_cast %30 : vector<1x1x8x8x4xbf16> to vector<1x8x8x4xbf16>
    %cst = arith.constant 0.000000e+00 : bf16
    %32 = vector.broadcast %cst : bf16 to vector<1x8x8x4xbf16>
    %33 = arith.maximumf %1, %32 : vector<1x8x8x4xbf16>
    %cst_76 = arith.constant 0.000000e+00 : bf16
    %34 = vector.broadcast %cst_76 : bf16 to vector<1x8x8x4xbf16>
    %35 = arith.maximumf %9, %34 : vector<1x8x8x4xbf16>
    %cst_77 = arith.constant 0.000000e+00 : bf16
    %36 = vector.broadcast %cst_77 : bf16 to vector<1x8x8x4xbf16>
    %37 = arith.maximumf %17, %36 : vector<1x8x8x4xbf16>
    %38 = tpu.concatenate %33, %35, %37 in 3 : vector<1x8x8x4xbf16>, vector<1x8x8x4xbf16>, vector<1x8x8x4xbf16> -> vector<1x8x8x12xbf16>
    %cst_78 = arith.constant 0.000000e+00 : bf16
    %39 = vector.broadcast %cst_78 : bf16 to vector<1x8x8x4xbf16>
    %40 = arith.maximumf %3, %39 : vector<1x8x8x4xbf16>
    %cst_79 = arith.constant 0.000000e+00 : bf16
    %41 = vector.broadcast %cst_79 : bf16 to vector<1x8x8x4xbf16>
    %42 = arith.maximumf %11, %41 : vector<1x8x8x4xbf16>
    %cst_80 = arith.constant 0.000000e+00 : bf16
    %43 = vector.broadcast %cst_80 : bf16 to vector<1x8x8x4xbf16>
    %44 = arith.maximumf %19, %43 : vector<1x8x8x4xbf16>
    %45 = tpu.concatenate %40, %42, %44 in 3 : vector<1x8x8x4xbf16>, vector<1x8x8x4xbf16>, vector<1x8x8x4xbf16> -> vector<1x8x8x12xbf16>
    %cst_81 = arith.constant 0.000000e+00 : bf16
    %46 = vector.broadcast %cst_81 : bf16 to vector<1x8x8x4xbf16>
    %47 = arith.maximumf %9, %46 : vector<1x8x8x4xbf16>
    %cst_82 = arith.constant 0.000000e+00 : bf16
    %48 = vector.broadcast %cst_82 : bf16 to vector<1x8x8x4xbf16>
    %49 = arith.maximumf %17, %48 : vector<1x8x8x4xbf16>
    %cst_83 = arith.constant 0.000000e+00 : bf16
    %50 = vector.broadcast %cst_83 : bf16 to vector<1x8x8x4xbf16>
    %51 = arith.maximumf %25, %50 : vector<1x8x8x4xbf16>
    %52 = tpu.concatenate %47, %49, %51 in 3 : vector<1x8x8x4xbf16>, vector<1x8x8x4xbf16>, vector<1x8x8x4xbf16> -> vector<1x8x8x12xbf16>
    %cst_84 = arith.constant 0.000000e+00 : bf16
    %53 = vector.broadcast %cst_84 : bf16 to vector<1x8x8x4xbf16>
    %54 = arith.maximumf %11, %53 : vector<1x8x8x4xbf16>
    %cst_85 = arith.constant 0.000000e+00 : bf16
    %55 = vector.broadcast %cst_85 : bf16 to vector<1x8x8x4xbf16>
    %56 = arith.maximumf %19, %55 : vector<1x8x8x4xbf16>
    %cst_86 = arith.constant 0.000000e+00 : bf16
    %57 = vector.broadcast %cst_86 : bf16 to vector<1x8x8x4xbf16>
    %58 = arith.maximumf %27, %57 : vector<1x8x8x4xbf16>
    %59 = tpu.concatenate %54, %56, %58 in 3 : vector<1x8x8x4xbf16>, vector<1x8x8x4xbf16>, vector<1x8x8x4xbf16> -> vector<1x8x8x12xbf16>
    %60 = vector.shape_cast %38 : vector<1x8x8x12xbf16> to vector<1x1x8x8x12xbf16>
    %61 = vector.shape_cast %45 : vector<1x8x8x12xbf16> to vector<1x1x8x8x12xbf16>
    %62 = vector.shape_cast %52 : vector<1x8x8x12xbf16> to vector<1x1x8x8x12xbf16>
    %63 = vector.shape_cast %59 : vector<1x8x8x12xbf16> to vector<1x1x8x8x12xbf16>
    %64 = tpu.concatenate %60, %61, %62, %63 in 1 : vector<1x1x8x8x12xbf16>, vector<1x1x8x8x12xbf16>, vector<1x1x8x8x12xbf16>, vector<1x1x8x8x12xbf16> -> vector<1x4x8x8x12xbf16>
    %65 = vector.shape_cast %64 : vector<1x4x8x8x12xbf16> to vector<256x12xbf16>
    %c0_87 = arith.constant 0 : index
    %c0_88 = arith.constant 0 : index
    %c0_89 = arith.constant 0 : index
    %66 = vector.load %arg3[%c0_87, %c0_88, %c0_89] : memref<3x12x8xbf16, #tpu.memory_space<vmem>>, vector<1x12x8xbf16>
    %67 = vector.shape_cast %66 : vector<1x12x8xbf16> to vector<12x8xbf16>
    %cst_90 = arith.constant dense<0.000000e+00> : vector<256x8xf32>
    %68 = tpu.matmul %65, %67, %cst_90 {dimension_numbers = #tpu.dot_dimension_numbers<[1], [0], [0], [1], [0, 0, 1, 1], [], []>} : vector<256x12xbf16>, vector<12x8xbf16>, vector<256x8xf32> -> vector<256x8xf32>
    %cst_91 = arith.constant 0.000000e+00 : bf16
    %69 = vector.broadcast %cst_91 : bf16 to vector<1x8x8x4xbf16>
    %70 = arith.maximumf %3, %69 : vector<1x8x8x4xbf16>
    %cst_92 = arith.constant 0.000000e+00 : bf16
    %71 = vector.broadcast %cst_92 : bf16 to vector<1x8x8x4xbf16>
    %72 = arith.maximumf %11, %71 : vector<1x8x8x4xbf16>
    %cst_93 = arith.constant 0.000000e+00 : bf16
    %73 = vector.broadcast %cst_93 : bf16 to vector<1x8x8x4xbf16>
    %74 = arith.maximumf %19, %73 : vector<1x8x8x4xbf16>
    %75 = tpu.concatenate %70, %72, %74 in 3 : vector<1x8x8x4xbf16>, vector<1x8x8x4xbf16>, vector<1x8x8x4xbf16> -> vector<1x8x8x12xbf16>
    %cst_94 = arith.constant 0.000000e+00 : bf16
    %76 = vector.broadcast %cst_94 : bf16 to vector<1x8x8x4xbf16>
    %77 = arith.maximumf %5, %76 : vector<1x8x8x4xbf16>
    %cst_95 = arith.constant 0.000000e+00 : bf16
    %78 = vector.broadcast %cst_95 : bf16 to vector<1x8x8x4xbf16>
    %79 = arith.maximumf %13, %78 : vector<1x8x8x4xbf16>
    %cst_96 = arith.constant 0.000000e+00 : bf16
    %80 = vector.broadcast %cst_96 : bf16 to vector<1x8x8x4xbf16>
    %81 = arith.maximumf %21, %80 : vector<1x8x8x4xbf16>
    %82 = tpu.concatenate %77, %79, %81 in 3 : vector<1x8x8x4xbf16>, vector<1x8x8x4xbf16>, vector<1x8x8x4xbf16> -> vector<1x8x8x12xbf16>
    %cst_97 = arith.constant 0.000000e+00 : bf16
    %83 = vector.broadcast %cst_97 : bf16 to vector<1x8x8x4xbf16>
    %84 = arith.maximumf %11, %83 : vector<1x8x8x4xbf16>
    %cst_98 = arith.constant 0.000000e+00 : bf16
    %85 = vector.broadcast %cst_98 : bf16 to vector<1x8x8x4xbf16>
    %86 = arith.maximumf %19, %85 : vector<1x8x8x4xbf16>
    %cst_99 = arith.constant 0.000000e+00 : bf16
    %87 = vector.broadcast %cst_99 : bf16 to vector<1x8x8x4xbf16>
    %88 = arith.maximumf %27, %87 : vector<1x8x8x4xbf16>
    %89 = tpu.concatenate %84, %86, %88 in 3 : vector<1x8x8x4xbf16>, vector<1x8x8x4xbf16>, vector<1x8x8x4xbf16> -> vector<1x8x8x12xbf16>
    %cst_100 = arith.constant 0.000000e+00 : bf16
    %90 = vector.broadcast %cst_100 : bf16 to vector<1x8x8x4xbf16>
    %91 = arith.maximumf %13, %90 : vector<1x8x8x4xbf16>
    %cst_101 = arith.constant 0.000000e+00 : bf16
    %92 = vector.broadcast %cst_101 : bf16 to vector<1x8x8x4xbf16>
    %93 = arith.maximumf %21, %92 : vector<1x8x8x4xbf16>
    %cst_102 = arith.constant 0.000000e+00 : bf16
    %94 = vector.broadcast %cst_102 : bf16 to vector<1x8x8x4xbf16>
    %95 = arith.maximumf %29, %94 : vector<1x8x8x4xbf16>
    %96 = tpu.concatenate %91, %93, %95 in 3 : vector<1x8x8x4xbf16>, vector<1x8x8x4xbf16>, vector<1x8x8x4xbf16> -> vector<1x8x8x12xbf16>
    %97 = vector.shape_cast %75 : vector<1x8x8x12xbf16> to vector<1x1x8x8x12xbf16>
    %98 = vector.shape_cast %82 : vector<1x8x8x12xbf16> to vector<1x1x8x8x12xbf16>
    %99 = vector.shape_cast %89 : vector<1x8x8x12xbf16> to vector<1x1x8x8x12xbf16>
    %100 = vector.shape_cast %96 : vector<1x8x8x12xbf16> to vector<1x1x8x8x12xbf16>
    %101 = tpu.concatenate %97, %98, %99, %100 in 1 : vector<1x1x8x8x12xbf16>, vector<1x1x8x8x12xbf16>, vector<1x1x8x8x12xbf16>, vector<1x1x8x8x12xbf16> -> vector<1x4x8x8x12xbf16>
    %102 = vector.shape_cast %101 : vector<1x4x8x8x12xbf16> to vector<256x12xbf16>
    %c1_103 = arith.constant 1 : index
    %c0_104 = arith.constant 0 : index
    %c0_105 = arith.constant 0 : index
    %103 = vector.load %arg3[%c1_103, %c0_104, %c0_105] : memref<3x12x8xbf16, #tpu.memory_space<vmem>>, vector<1x12x8xbf16>
    %104 = vector.shape_cast %103 : vector<1x12x8xbf16> to vector<12x8xbf16>
    %cst_106 = arith.constant dense<0.000000e+00> : vector<256x8xf32>
    %105 = tpu.matmul %102, %104, %cst_106 {dimension_numbers = #tpu.dot_dimension_numbers<[1], [0], [0], [1], [0, 0, 1, 1], [], []>} : vector<256x12xbf16>, vector<12x8xbf16>, vector<256x8xf32> -> vector<256x8xf32>
    %106 = arith.addf %68, %105 : vector<256x8xf32>
    %cst_107 = arith.constant 0.000000e+00 : bf16
    %107 = vector.broadcast %cst_107 : bf16 to vector<1x8x8x4xbf16>
    %108 = arith.maximumf %5, %107 : vector<1x8x8x4xbf16>
    %cst_108 = arith.constant 0.000000e+00 : bf16
    %109 = vector.broadcast %cst_108 : bf16 to vector<1x8x8x4xbf16>
    %110 = arith.maximumf %13, %109 : vector<1x8x8x4xbf16>
    %cst_109 = arith.constant 0.000000e+00 : bf16
    %111 = vector.broadcast %cst_109 : bf16 to vector<1x8x8x4xbf16>
    %112 = arith.maximumf %21, %111 : vector<1x8x8x4xbf16>
    %113 = tpu.concatenate %108, %110, %112 in 3 : vector<1x8x8x4xbf16>, vector<1x8x8x4xbf16>, vector<1x8x8x4xbf16> -> vector<1x8x8x12xbf16>
    %cst_110 = arith.constant 0.000000e+00 : bf16
    %114 = vector.broadcast %cst_110 : bf16 to vector<1x8x8x4xbf16>
    %115 = arith.maximumf %7, %114 : vector<1x8x8x4xbf16>
    %cst_111 = arith.constant 0.000000e+00 : bf16
    %116 = vector.broadcast %cst_111 : bf16 to vector<1x8x8x4xbf16>
    %117 = arith.maximumf %15, %116 : vector<1x8x8x4xbf16>
    %cst_112 = arith.constant 0.000000e+00 : bf16
    %118 = vector.broadcast %cst_112 : bf16 to vector<1x8x8x4xbf16>
    %119 = arith.maximumf %23, %118 : vector<1x8x8x4xbf16>
    %120 = tpu.concatenate %115, %117, %119 in 3 : vector<1x8x8x4xbf16>, vector<1x8x8x4xbf16>, vector<1x8x8x4xbf16> -> vector<1x8x8x12xbf16>
    %cst_113 = arith.constant 0.000000e+00 : bf16
    %121 = vector.broadcast %cst_113 : bf16 to vector<1x8x8x4xbf16>
    %122 = arith.maximumf %13, %121 : vector<1x8x8x4xbf16>
    %cst_114 = arith.constant 0.000000e+00 : bf16
    %123 = vector.broadcast %cst_114 : bf16 to vector<1x8x8x4xbf16>
    %124 = arith.maximumf %21, %123 : vector<1x8x8x4xbf16>
    %cst_115 = arith.constant 0.000000e+00 : bf16
    %125 = vector.broadcast %cst_115 : bf16 to vector<1x8x8x4xbf16>
    %126 = arith.maximumf %29, %125 : vector<1x8x8x4xbf16>
    %127 = tpu.concatenate %122, %124, %126 in 3 : vector<1x8x8x4xbf16>, vector<1x8x8x4xbf16>, vector<1x8x8x4xbf16> -> vector<1x8x8x12xbf16>
    %cst_116 = arith.constant 0.000000e+00 : bf16
    %128 = vector.broadcast %cst_116 : bf16 to vector<1x8x8x4xbf16>
    %129 = arith.maximumf %15, %128 : vector<1x8x8x4xbf16>
    %cst_117 = arith.constant 0.000000e+00 : bf16
    %130 = vector.broadcast %cst_117 : bf16 to vector<1x8x8x4xbf16>
    %131 = arith.maximumf %23, %130 : vector<1x8x8x4xbf16>
    %cst_118 = arith.constant 0.000000e+00 : bf16
    %132 = vector.broadcast %cst_118 : bf16 to vector<1x8x8x4xbf16>
    %133 = arith.maximumf %31, %132 : vector<1x8x8x4xbf16>
    %134 = tpu.concatenate %129, %131, %133 in 3 : vector<1x8x8x4xbf16>, vector<1x8x8x4xbf16>, vector<1x8x8x4xbf16> -> vector<1x8x8x12xbf16>
    %135 = vector.shape_cast %113 : vector<1x8x8x12xbf16> to vector<1x1x8x8x12xbf16>
    %136 = vector.shape_cast %120 : vector<1x8x8x12xbf16> to vector<1x1x8x8x12xbf16>
    %137 = vector.shape_cast %127 : vector<1x8x8x12xbf16> to vector<1x1x8x8x12xbf16>
    %138 = vector.shape_cast %134 : vector<1x8x8x12xbf16> to vector<1x1x8x8x12xbf16>
    %139 = tpu.concatenate %135, %136, %137, %138 in 1 : vector<1x1x8x8x12xbf16>, vector<1x1x8x8x12xbf16>, vector<1x1x8x8x12xbf16>, vector<1x1x8x8x12xbf16> -> vector<1x4x8x8x12xbf16>
    %140 = vector.shape_cast %139 : vector<1x4x8x8x12xbf16> to vector<256x12xbf16>
    %c2_119 = arith.constant 2 : index
    %c0_120 = arith.constant 0 : index
    %c0_121 = arith.constant 0 : index
    %141 = vector.load %arg3[%c2_119, %c0_120, %c0_121] : memref<3x12x8xbf16, #tpu.memory_space<vmem>>, vector<1x12x8xbf16>
    %142 = vector.shape_cast %141 : vector<1x12x8xbf16> to vector<12x8xbf16>
    %cst_122 = arith.constant dense<0.000000e+00> : vector<256x8xf32>
    %143 = tpu.matmul %140, %142, %cst_122 {dimension_numbers = #tpu.dot_dimension_numbers<[1], [0], [0], [1], [0, 0, 1, 1], [], []>} : vector<256x12xbf16>, vector<12x8xbf16>, vector<256x8xf32> -> vector<256x8xf32>
    %144 = arith.addf %106, %143 : vector<256x8xf32>
    %c0_123 = arith.constant 0 : index
    %c0_124 = arith.constant 0 : index
    %145 = vector.load %arg4[%c0_123, %c0_124] : memref<1x8xf32, #tpu.memory_space<vmem>>, vector<1x8xf32>
    %146 = vector.broadcast %145 : vector<1x8xf32> to vector<256x8xf32>
    %147 = arith.addf %144, %146 : vector<256x8xf32>
    %cst_125 = arith.constant 0.000000e+00 : f32
    %148 = vector.broadcast %cst_125 : f32 to vector<256x8xf32>
    %149 = arith.maximumf %147, %148 : vector<256x8xf32>
    %150 = arith.truncf %149 : vector<256x8xf32> to vector<256x8xbf16>
    %151 = vector.shape_cast %150 : vector<256x8xbf16> to vector<1x2x2x8x8x8xbf16>
    %cst_126 = arith.constant 0.000000e+00 : bf16
    %152 = vector.broadcast %cst_126 : bf16 to vector<1x2x9x8xbf16>
    %c0_127 = arith.constant 0 : index
    %c0_128 = arith.constant 0 : index
    %c0_129 = arith.constant 0 : index
    %c0_130 = arith.constant 0 : index
    %c0_131 = arith.constant 0 : index
    %153 = vector.load %arg8[%c0_127, %c0_128, %c0_129, %c0_130, %c0_131] : memref<1x4x9x9x8xbf16, #tpu.memory_space<vmem>>, vector<1x2x1x9x8xbf16>
    %154 = vector.shape_cast %153 : vector<1x2x1x9x8xbf16> to vector<1x2x9x8xbf16>
    %155 = vector.shape_cast %152 : vector<1x2x9x8xbf16> to vector<1x2x1x9x8xbf16>
    tpu.vector_store %arg8[%c0_127, %c0_128, %c0_129, %c0_130, %c0_131], %155 {strides = array<i32>} : memref<1x4x9x9x8xbf16, #tpu.memory_space<vmem>>, vector<1x2x1x9x8xbf16>,
    %cst_132 = arith.constant 0.000000e+00 : bf16
    %156 = vector.broadcast %cst_132 : bf16 to vector<1x9x8xbf16>
    %c0_133 = arith.constant 0 : index
    %c0_134 = arith.constant 0 : index
    %c0_135 = arith.constant 0 : index
    %c0_136 = arith.constant 0 : index
    %c0_137 = arith.constant 0 : index
    %157 = vector.load %arg8[%c0_133, %c0_134, %c0_135, %c0_136, %c0_137] : memref<1x4x9x9x8xbf16, #tpu.memory_space<vmem>>, vector<1x1x9x1x8xbf16>
    %158 = vector.shape_cast %157 : vector<1x1x9x1x8xbf16> to vector<1x9x8xbf16>
    %159 = vector.shape_cast %156 : vector<1x9x8xbf16> to vector<1x1x9x1x8xbf16>
    tpu.vector_store %arg8[%c0_133, %c0_134, %c0_135, %c0_136, %c0_137], %159 {strides = array<i32>} : memref<1x4x9x9x8xbf16, #tpu.memory_space<vmem>>, vector<1x1x9x1x8xbf16>,
    %c0_138 = arith.constant 0 : index
    %c2_139 = arith.constant 2 : index
    %c0_140 = arith.constant 0 : index
    %c0_141 = arith.constant 0 : index
    %c0_142 = arith.constant 0 : index
    %160 = vector.load %arg8[%c0_138, %c2_139, %c0_140, %c0_141, %c0_142] : memref<1x4x9x9x8xbf16, #tpu.memory_space<vmem>>, vector<1x1x9x1x8xbf16>
    %161 = vector.shape_cast %160 : vector<1x1x9x1x8xbf16> to vector<1x9x8xbf16>
    %162 = vector.shape_cast %156 : vector<1x9x8xbf16> to vector<1x1x9x1x8xbf16>
    tpu.vector_store %arg8[%c0_138, %c2_139, %c0_140, %c0_141, %c0_142], %162 {strides = array<i32>} : memref<1x4x9x9x8xbf16, #tpu.memory_space<vmem>>, vector<1x1x9x1x8xbf16>,
    %163 = vector.extract_strided_slice %151 {offsets = [0, 0, 0, 0, 0, 0], sizes = [1, 1, 1, 8, 8, 8], strides = [1, 1, 1, 1, 1, 1]} : vector<1x2x2x8x8x8xbf16> to vector<1x1x1x8x8x8xbf16>
    %164 = vector.shape_cast %163 : vector<1x1x1x8x8x8xbf16> to vector<1x8x8x8xbf16>
    %c0_143 = arith.constant 0 : index
    %c3_144 = arith.constant 3 : index
    %c0_145 = arith.constant 0 : index
    %c0_146 = arith.constant 0 : index
    %c0_147 = arith.constant 0 : index
    %165 = vector.load %arg8[%c0_143, %c3_144, %c0_145, %c0_146, %c0_147] : memref<1x4x9x9x8xbf16, #tpu.memory_space<vmem>>, vector<1x1x8x8x8xbf16>
    %166 = vector.shape_cast %165 : vector<1x1x8x8x8xbf16> to vector<1x8x8x8xbf16>
    %167 = vector.shape_cast %164 : vector<1x8x8x8xbf16> to vector<1x1x8x8x8xbf16>
    tpu.vector_store %arg8[%c0_143, %c3_144, %c0_145, %c0_146, %c0_147], %167 {strides = array<i32>} : memref<1x4x9x9x8xbf16, #tpu.memory_space<vmem>>, vector<1x1x8x8x8xbf16>,
    %168 = vector.extract_strided_slice %151 {offsets = [0, 0, 1, 0, 0, 0], sizes = [1, 1, 1, 8, 8, 8], strides = [1, 1, 1, 1, 1, 1]} : vector<1x2x2x8x8x8xbf16> to vector<1x1x1x8x8x8xbf16>
    %169 = vector.shape_cast %168 : vector<1x1x1x8x8x8xbf16> to vector<1x8x8x8xbf16>
    %c0_148 = arith.constant 0 : index
    %c2_149 = arith.constant 2 : index
    %c0_150 = arith.constant 0 : index
    %c1_151 = arith.constant 1 : index
    %c0_152 = arith.constant 0 : index
    %170 = vector.load %arg8[%c0_148, %c2_149, %c0_150, %c1_151, %c0_152] : memref<1x4x9x9x8xbf16, #tpu.memory_space<vmem>>, vector<1x1x8x8x8xbf16>
    %171 = vector.shape_cast %170 : vector<1x1x8x8x8xbf16> to vector<1x8x8x8xbf16>
    %172 = vector.shape_cast %169 : vector<1x8x8x8xbf16> to vector<1x1x8x8x8xbf16>
    tpu.vector_store %arg8[%c0_148, %c2_149, %c0_150, %c1_151, %c0_152], %172 {strides = array<i32>} : memref<1x4x9x9x8xbf16, #tpu.memory_space<vmem>>, vector<1x1x8x8x8xbf16>,
    %173 = vector.extract_strided_slice %151 {offsets = [0, 1, 0, 0, 0, 0], sizes = [1, 1, 1, 8, 8, 8], strides = [1, 1, 1, 1, 1, 1]} : vector<1x2x2x8x8x8xbf16> to vector<1x1x1x8x8x8xbf16>
    %174 = vector.shape_cast %173 : vector<1x1x1x8x8x8xbf16> to vector<1x8x8x8xbf16>
    %c0_153 = arith.constant 0 : index
    %c1_154 = arith.constant 1 : index
    %c1_155 = arith.constant 1 : index
    %c0_156 = arith.constant 0 : index
    %c0_157 = arith.constant 0 : index
    %175 = vector.load %arg8[%c0_153, %c1_154, %c1_155, %c0_156, %c0_157] : memref<1x4x9x9x8xbf16, #tpu.memory_space<vmem>>, vector<1x1x8x8x8xbf16>
    %176 = vector.shape_cast %175 : vector<1x1x8x8x8xbf16> to vector<1x8x8x8xbf16>
    %177 = vector.shape_cast %174 : vector<1x8x8x8xbf16> to vector<1x1x8x8x8xbf16>
    tpu.vector_store %arg8[%c0_153, %c1_154, %c1_155, %c0_156, %c0_157], %177 {strides = array<i32>} : memref<1x4x9x9x8xbf16, #tpu.memory_space<vmem>>, vector<1x1x8x8x8xbf16>,
    %178 = vector.extract_strided_slice %151 {offsets = [0, 1, 1, 0, 0, 0], sizes = [1, 1, 1, 8, 8, 8], strides = [1, 1, 1, 1, 1, 1]} : vector<1x2x2x8x8x8xbf16> to vector<1x1x1x8x8x8xbf16>
    %179 = vector.shape_cast %178 : vector<1x1x1x8x8x8xbf16> to vector<1x8x8x8xbf16>
    %c0_158 = arith.constant 0 : index
    %c0_159 = arith.constant 0 : index
    %c1_160 = arith.constant 1 : index
    %c1_161 = arith.constant 1 : index
    %c0_162 = arith.constant 0 : index
    %180 = vector.load %arg8[%c0_158, %c0_159, %c1_160, %c1_161, %c0_162] : memref<1x4x9x9x8xbf16, #tpu.memory_space<vmem>>, vector<1x1x8x8x8xbf16>
    %181 = vector.shape_cast %180 : vector<1x1x8x8x8xbf16> to vector<1x8x8x8xbf16>
    %182 = vector.shape_cast %179 : vector<1x8x8x8xbf16> to vector<1x1x8x8x8xbf16>
    tpu.vector_store %arg8[%c0_158, %c0_159, %c1_160, %c1_161, %c0_162], %182 {strides = array<i32>} : memref<1x4x9x9x8xbf16, #tpu.memory_space<vmem>>, vector<1x1x8x8x8xbf16>,
    %c0_163 = arith.constant 0 : index
    %c0_164 = arith.constant 0 : index
    %c0_165 = arith.constant 0 : index
    %c0_166 = arith.constant 0 : index
    %c0_167 = arith.constant 0 : index
    %183 = vector.load %arg8[%c0_163, %c0_164, %c0_165, %c0_166, %c0_167] : memref<1x4x9x9x8xbf16, #tpu.memory_space<vmem>>, vector<1x1x8x8x8xbf16>
    %184 = vector.shape_cast %183 : vector<1x1x8x8x8xbf16> to vector<1x8x8x8xbf16>
    %185 = vector.shape_cast %184 : vector<1x8x8x8xbf16> to vector<64x8xbf16>
    %c0_168 = arith.constant 0 : index
    %c1_169 = arith.constant 1 : index
    %c0_170 = arith.constant 0 : index
    %c0_171 = arith.constant 0 : index
    %c0_172 = arith.constant 0 : index
    %186 = vector.load %arg8[%c0_168, %c1_169, %c0_170, %c0_171, %c0_172] : memref<1x4x9x9x8xbf16, #tpu.memory_space<vmem>>, vector<1x1x8x8x8xbf16>
    %187 = vector.shape_cast %186 : vector<1x1x8x8x8xbf16> to vector<1x8x8x8xbf16>
    %188 = vector.shape_cast %187 : vector<1x8x8x8xbf16> to vector<64x8xbf16>
    %c0_173 = arith.constant 0 : index
    %c0_174 = arith.constant 0 : index
    %c0_175 = arith.constant 0 : index
    %c1_176 = arith.constant 1 : index
    %c0_177 = arith.constant 0 : index
    %189 = vector.load %arg8[%c0_173, %c0_174, %c0_175, %c1_176, %c0_177] : memref<1x4x9x9x8xbf16, #tpu.memory_space<vmem>>, vector<1x1x8x8x8xbf16>
    %190 = vector.shape_cast %189 : vector<1x1x8x8x8xbf16> to vector<1x8x8x8xbf16>
    %191 = vector.shape_cast %190 : vector<1x8x8x8xbf16> to vector<64x8xbf16>
    %c0_178 = arith.constant 0 : index
    %c2_179 = arith.constant 2 : index
    %c0_180 = arith.constant 0 : index
    %c0_181 = arith.constant 0 : index
    %c0_182 = arith.constant 0 : index
    %192 = vector.load %arg8[%c0_178, %c2_179, %c0_180, %c0_181, %c0_182] : memref<1x4x9x9x8xbf16, #tpu.memory_space<vmem>>, vector<1x1x8x8x8xbf16>
    %193 = vector.shape_cast %192 : vector<1x1x8x8x8xbf16> to vector<1x8x8x8xbf16>
    %194 = vector.shape_cast %193 : vector<1x8x8x8xbf16> to vector<64x8xbf16>
    %c0_183 = arith.constant 0 : index
    %c3_184 = arith.constant 3 : index
    %c0_185 = arith.constant 0 : index
    %c0_186 = arith.constant 0 : index
    %c0_187 = arith.constant 0 : index
    %195 = vector.load %arg8[%c0_183, %c3_184, %c0_185, %c0_186, %c0_187] : memref<1x4x9x9x8xbf16, #tpu.memory_space<vmem>>, vector<1x1x8x8x8xbf16>
    %196 = vector.shape_cast %195 : vector<1x1x8x8x8xbf16> to vector<1x8x8x8xbf16>
    %197 = vector.shape_cast %196 : vector<1x8x8x8xbf16> to vector<64x8xbf16>
    %c0_188 = arith.constant 0 : index
    %c2_189 = arith.constant 2 : index
    %c0_190 = arith.constant 0 : index
    %c1_191 = arith.constant 1 : index
    %c0_192 = arith.constant 0 : index
    %198 = vector.load %arg8[%c0_188, %c2_189, %c0_190, %c1_191, %c0_192] : memref<1x4x9x9x8xbf16, #tpu.memory_space<vmem>>, vector<1x1x8x8x8xbf16>
    %199 = vector.shape_cast %198 : vector<1x1x8x8x8xbf16> to vector<1x8x8x8xbf16>
    %200 = vector.shape_cast %199 : vector<1x8x8x8xbf16> to vector<64x8xbf16>
    %c0_193 = arith.constant 0 : index
    %c0_194 = arith.constant 0 : index
    %c1_195 = arith.constant 1 : index
    %c0_196 = arith.constant 0 : index
    %c0_197 = arith.constant 0 : index
    %201 = vector.load %arg8[%c0_193, %c0_194, %c1_195, %c0_196, %c0_197] : memref<1x4x9x9x8xbf16, #tpu.memory_space<vmem>>, vector<1x1x8x8x8xbf16>
    %202 = vector.shape_cast %201 : vector<1x1x8x8x8xbf16> to vector<1x8x8x8xbf16>
    %203 = vector.shape_cast %202 : vector<1x8x8x8xbf16> to vector<64x8xbf16>
    %c0_198 = arith.constant 0 : index
    %c1_199 = arith.constant 1 : index
    %c1_200 = arith.constant 1 : index
    %c0_201 = arith.constant 0 : index
    %c0_202 = arith.constant 0 : index
    %204 = vector.load %arg8[%c0_198, %c1_199, %c1_200, %c0_201, %c0_202] : memref<1x4x9x9x8xbf16, #tpu.memory_space<vmem>>, vector<1x1x8x8x8xbf16>
    %205 = vector.shape_cast %204 : vector<1x1x8x8x8xbf16> to vector<1x8x8x8xbf16>
    %206 = vector.shape_cast %205 : vector<1x8x8x8xbf16> to vector<64x8xbf16>
    %c0_203 = arith.constant 0 : index
    %c0_204 = arith.constant 0 : index
    %c1_205 = arith.constant 1 : index
    %c1_206 = arith.constant 1 : index
    %c0_207 = arith.constant 0 : index
    %207 = vector.load %arg8[%c0_203, %c0_204, %c1_205, %c1_206, %c0_207] : memref<1x4x9x9x8xbf16, #tpu.memory_space<vmem>>, vector<1x1x8x8x8xbf16>
    %208 = vector.shape_cast %207 : vector<1x1x8x8x8xbf16> to vector<1x8x8x8xbf16>
    %209 = vector.shape_cast %208 : vector<1x8x8x8xbf16> to vector<64x8xbf16>
    %c0_208 = arith.constant 0 : index
    %c0_209 = arith.constant 0 : index
    %c0_210 = arith.constant 0 : index
    %c0_211 = arith.constant 0 : index
    %210 = vector.load %arg2[%c0_208, %c0_209, %c0_210, %c0_211] : memref<1x8x8x4xbf16, #tpu.memory_space<vmem>>, vector<1x8x8x4xbf16>
    %211 = vector.shape_cast %210 : vector<1x8x8x4xbf16> to vector<64x4xbf16>
    %212 = tpu.concatenate %185, %188, %191, %194, %197, %200, %203, %206, %209, %211 in 1 : vector<64x8xbf16>, vector<64x8xbf16>, vector<64x8xbf16>, vector<64x8xbf16>, vector<64x8xbf16>, vector<64x8xbf16>, vector<64x8xbf16>, vector<64x8xbf16>, vector<64x8xbf16>, vector<64x4xbf16> -> vector<64x76xbf16>
    %c0_212 = arith.constant 0 : index
    %c0_213 = arith.constant 0 : index
    %213 = vector.load %arg5[%c0_212, %c0_213] : memref<8x76xbf16, #tpu.memory_space<vmem>>, vector<8x76xbf16>
    %cst_214 = arith.constant dense<0.000000e+00> : vector<8x64xf32>
    %214 = tpu.matmul %213, %212, %cst_214 {dimension_numbers = #tpu.dot_dimension_numbers<[1], [1], [0], [0], [0, 0, 1, 0], [], []>} : vector<8x76xbf16>, vector<64x76xbf16>, vector<8x64xf32> -> vector<8x64xf32>
    %c0_215 = arith.constant 0 : index
    %c0_216 = arith.constant 0 : index
    %215 = vector.load %arg6[%c0_215, %c0_216] : memref<8x1xf32, #tpu.memory_space<vmem>>, vector<8x1xf32>
    %216 = vector.broadcast %215 : vector<8x1xf32> to vector<8x64xf32>
    %217 = arith.addf %214, %216 : vector<8x64xf32>
    %c0_217 = arith.constant 0 : index
    %c0_218 = arith.constant 0 : index
    %c0_219 = arith.constant 0 : index
    %218 = vector.load %arg7[%c0_217, %c0_218, %c0_219] : memref<1x8x64xf32, #tpu.memory_space<vmem>>, vector<1x8x64xf32>
    %219 = vector.shape_cast %218 : vector<1x8x64xf32> to vector<8x64xf32>
    %220 = vector.shape_cast %217 : vector<8x64xf32> to vector<1x8x64xf32>
    tpu.vector_store %arg7[%c0_217, %c0_218, %c0_219], %220 {strides = array<i32>} : memref<1x8x64xf32, #tpu.memory_space<vmem>>, vector<1x8x64xf32>,
    return
  }
  func.func @transform_0(%arg0: i32) -> (i32, i32, i32, i32, i32) {
    %c0_i32 = arith.constant 0 : i32
    %c0_i32_0 = arith.constant 0 : i32
    %c0_i32_1 = arith.constant 0 : i32
    %c0_i32_2 = arith.constant 0 : i32
    %c0_i32_3 = arith.constant 0 : i32
    return %arg0, %c0_i32, %c0_i32_0, %c0_i32_1, %c0_i32_2 : i32, i32, i32, i32, i32
  }
  func.func @transform_1(%arg0: i32) -> (i32, i32, i32, i32) {
    %c0_i32 = arith.constant 0 : i32
    %c0_i32_0 = arith.constant 0 : i32
    %c0_i32_1 = arith.constant 0 : i32
    %c0_i32_2 = arith.constant 0 : i32
    return %arg0, %c0_i32, %c0_i32_0, %c0_i32_1 : i32, i32, i32, i32
  }
  func.func @transform_2(%arg0: i32) -> (i32, i32, i32) {
    %c0_i32 = arith.constant 0 : i32
    %c0_i32_0 = arith.constant 0 : i32
    %c0_i32_1 = arith.constant 0 : i32
    %c0_i32_2 = arith.constant 0 : i32
    return %c0_i32, %c0_i32_0, %c0_i32_1 : i32, i32, i32
  }
  func.func @transform_3(%arg0: i32) -> (i32, i32) {
    %c0_i32 = arith.constant 0 : i32
    %c0_i32_0 = arith.constant 0 : i32
    %c0_i32_1 = arith.constant 0 : i32
    return %c0_i32, %c0_i32_0 : i32, i32
  }
  func.func @transform_4(%arg0: i32) -> (i32, i32) {
    %c0_i32 = arith.constant 0 : i32
    %c0_i32_0 = arith.constant 0 : i32
    %c0_i32_1 = arith.constant 0 : i32
    return %c0_i32, %c0_i32_0 : i32, i32
  }
  func.func @transform_5(%arg0: i32) -> (i32, i32) {
    %c0_i32 = arith.constant 0 : i32
    %c0_i32_0 = arith.constant 0 : i32
    %c0_i32_1 = arith.constant 0 : i32
    return %c0_i32, %c0_i32_0 : i32, i32
  }
  func.func @transform_6(%arg0: i32) -> (i32, i32, i32) {
    %c0_i32 = arith.constant 0 : i32
    %c0_i32_0 = arith.constant 0 : i32
    %c0_i32_1 = arith.constant 0 : i32
    return %arg0, %c0_i32, %c0_i32_0 : i32, i32, i32
  }
}

</mosaic_0001>

<llo_original>
// kernel: tpu_custom_call.1
$region0: #{tpu_custom_call.1}
  #allocation0 [shape = 'u32[]', space=smem, size = 0x4, offset = 0x4, fixed_abs, tag = 'smem constant byte address 0x4 - core index']
  #allocation1 [shape = 'u32[144,128]{1,0:T(1,128)}', space=vmem, size = 0x12000, scoped, tag = 'internal scratch']
  #allocation2 [shape = 'bf16[1,4,9,9,8]{4,3,2,1,0:T(8,128)(2,1)}', space=vmem, size = 0x24000, scoped, tag = 'scratch operand']
  %s0 = inlined_call_operand.vmem [shape: bf16[2,4,9,9,4], index: 0, kind: input, shape index: {}]
  %s1 = inlined_call_operand.vmem [shape: bf16[2,8,8,4], index: 1, kind: input, shape index: {}]
  %s2 = inlined_call_operand.vmem [shape: bf16[3,12,8], index: 2, kind: input, shape index: {}]
  %s3 = inlined_call_operand.vmem [shape: f32[1,8], index: 3, kind: input, shape index: {}]
  %s4 = inlined_call_operand.vmem [shape: bf16[8,76], index: 4, kind: input, shape index: {}]
  %s5 = inlined_call_operand.vmem [shape: f32[8,1], index: 5, kind: input, shape index: {}]
  %s6 = inlined_call_operand.hbm [shape: f32[2,8,64], index: 6, kind: output, shape index: {}]
  %s7 = sld [smem:[#allocation0]]
  $region57: #{tpu_custom_call.1} parent=0
    _
  %s9 = ssub.s32 1, %s7
  %s10 = scalar_select 0, %s9, %s7
  $region1: #{tpu_custom_call.1} parent=0
    #allocation3 [shape = 'u8[8192]{0}', space=vmem, size = 0x2000, scoped, tag = 'output window, operand 0']
    #allocation4 [shape = 's32[2]{0}', space=sflag, size = 0x8, scoped, tag = 'scoped memory for tpu_custom_call.1']
    %11 = vsyncpa [#allocation4], 0
    %s12 = scalar_lea.sflag [#allocation4], 1
    %13 = vsyncpa %s12, 0
    loop: start=0, step=1, limit=4
    $region2: #{tpu_custom_call.1} parent=1 // loop_pre_header
      _
    $region3: #{tpu_custom_call.1} parent=1 // loop_header
      %s15 = sphi 0, %s19
      %p16 = scmp.ge.s32.totalorder %s15, 4
      %s25 = sphi 0, %s27
      %s28 = sphi 0, %s25
      %s29 = sphi 0, %s28
      %s45 = sphi 0, %s29
      %s51 = sphi 0, %s53
      %s54 = sphi 0, %s51
      %s55 = sphi 0, %s54
      %s71 = sphi 0, %s55
      %s75 = sphi 0, %s75
      %s77 = sphi 0, %s75
      %s78 = sphi 0, %s77
      %s92 = sphi 0, %s78
      %s96 = sphi 0, %s96
      %s98 = sphi 0, %s96
      %s99 = sphi 0, %s98
      %s113 = sphi 0, %s99
      %s117 = sphi 0, %s117
      %s119 = sphi 0, %s117
      %s120 = sphi 0, %s119
      %s134 = sphi 0, %s120
      %s138 = sphi 0, %s138
      %s140 = sphi 0, %s138
      %s141 = sphi 0, %s140
      %s155 = sphi 0, %s141
      %s161 = sphi 0, %s163
      %s164 = sphi 0, %s161
      %s165 = sphi 0, %s164
      %s181 = sphi 0, %s165
    $region4: #{tpu_custom_call.1} parent=1 // loop_header_branch
      %18 = sbr.rel (%p16) target = $region8
    $region5: #{tpu_custom_call.1} parent=1 // loop_body
      %s20 = ssub.s32 %s15, 1
      %s21 = ssub.s32 %s15, 2
      %s22 = sadd.s32 %s15, 1
      %s23 = ssub.s32 %s15, %s22
      %p24 = scmp.eq.s32.totalorder %s23, 0
      %s26 = sadd.s32 %s25, 1
      %s27 = scalar_select %p24, %s25, %s26
      %p30 = pneg %p24
      %p31 = scmp.eq.s32.totalorder %s15, 1
      %p32 = por %p30, %p31
      %p33 = scmp.ne.s32.totalorder %s25, %s28
      %p34 = scmp.eq.s32.totalorder %s15, 0
      %p35 = por %p33, %p34
      %p36 = scmp.ne.s32.totalorder %s25, %s28
      %p37 = scmp.eq.s32.totalorder %s20, 1
      %p38 = por %p36, %p37
      %p39 = scmp.ne.s32.totalorder %s28, %s29
      %p40 = scmp.eq.s32.totalorder %s20, 0
      %p41 = por %p39, %p40
      %p42 = scmp.ne.s32.totalorder %s28, %s29
      %p43 = scmp.eq.s32.totalorder %s21, 1
      %p44 = por %p42, %p43
      %p46 = scmp.ne.s32.totalorder %s29, %s45
      %p47 = scmp.eq.s32.totalorder %s21, 0
      %p48 = por %p46, %p47
      %s49 = ssub.s32 %s15, %s22
      %p50 = scmp.eq.s32.totalorder %s49, 0
      %s52 = sadd.s32 %s51, 1
      %s53 = scalar_select %p50, %s51, %s52
      %p56 = pneg %p50
      %p57 = scmp.eq.s32.totalorder %s15, 1
      %p58 = por %p56, %p57
      %p59 = scmp.ne.s32.totalorder %s51, %s54
      %p60 = scmp.eq.s32.totalorder %s15, 0
      %p61 = por %p59, %p60
      %p62 = scmp.ne.s32.totalorder %s51, %s54
      %p63 = scmp.eq.s32.totalorder %s20, 1
      %p64 = por %p62, %p63
      %p65 = scmp.ne.s32.totalorder %s54, %s55
      %p66 = scmp.eq.s32.totalorder %s20, 0
      %p67 = por %p65, %p66
      %p68 = scmp.ne.s32.totalorder %s54, %s55
      %p69 = scmp.eq.s32.totalorder %s21, 1
      %p70 = por %p68, %p69
      %p72 = scmp.ne.s32.totalorder %s55, %s71
      %p73 = scmp.eq.s32.totalorder %s21, 0
      %p74 = por %p72, %p73
      %s76 = sadd.s32 %s75, 1
      %p79 = scmp.eq.s32.totalorder %s15, 1
      %p80 = scmp.ne.s32.totalorder %s75, %s77
      %p81 = scmp.eq.s32.totalorder %s15, 0
      %p82 = por %p80, %p81
      %p83 = scmp.ne.s32.totalorder %s75, %s77
      %p84 = scmp.eq.s32.totalorder %s20, 1
      %p85 = por %p83, %p84
      %p86 = scmp.ne.s32.totalorder %s77, %s78
      %p87 = scmp.eq.s32.totalorder %s20, 0
      %p88 = por %p86, %p87
      %p89 = scmp.ne.s32.totalorder %s77, %s78
      %p90 = scmp.eq.s32.totalorder %s21, 1
      %p91 = por %p89, %p90
      %p93 = scmp.ne.s32.totalorder %s78, %s92
      %p94 = scmp.eq.s32.totalorder %s21, 0
      %p95 = por %p93, %p94
      %s97 = sadd.s32 %s96, 1
      %p100 = scmp.eq.s32.totalorder %s15, 1
      %p101 = scmp.ne.s32.totalorder %s96, %s98
      %p102 = scmp.eq.s32.totalorder %s15, 0
      %p103 = por %p101, %p102
      %p104 = scmp.ne.s32.totalorder %s96, %s98
      %p105 = scmp.eq.s32.totalorder %s20, 1
      %p106 = por %p104, %p105
      %p107 = scmp.ne.s32.totalorder %s98, %s99
      %p108 = scmp.eq.s32.totalorder %s20, 0
      %p109 = por %p107, %p108
      %p110 = scmp.ne.s32.totalorder %s98, %s99
      %p111 = scmp.eq.s32.totalorder %s21, 1
      %p112 = por %p110, %p111
      %p114 = scmp.ne.s32.totalorder %s99, %s113
      %p115 = scmp.eq.s32.totalorder %s21, 0
      %p116 = por %p114, %p115
      %s118 = sadd.s32 %s117, 1
      %p121 = scmp.eq.s32.totalorder %s15, 1
      %p122 = scmp.ne.s32.totalorder %s117, %s119
      %p123 = scmp.eq.s32.totalorder %s15, 0
      %p124 = por %p122, %p123
      %p125 = scmp.ne.s32.totalorder %s117, %s119
      %p126 = scmp.eq.s32.totalorder %s20, 1
      %p127 = por %p125, %p126
      %p128 = scmp.ne.s32.totalorder %s119, %s120
      %p129 = scmp.eq.s32.totalorder %s20, 0
      %p130 = por %p128, %p129
      %p131 = scmp.ne.s32.totalorder %s119, %s120
      %p132 = scmp.eq.s32.totalorder %s21, 1
      %p133 = por %p131, %p132
      %p135 = scmp.ne.s32.totalorder %s120, %s134
      %p136 = scmp.eq.s32.totalorder %s21, 0
      %p137 = por %p135, %p136
      %s139 = sadd.s32 %s138, 1
      %p142 = scmp.eq.s32.totalorder %s15, 1
      %p143 = scmp.ne.s32.totalorder %s138, %s140
      %p144 = scmp.eq.s32.totalorder %s15, 0
      %p145 = por %p143, %p144
      %p146 = scmp.ne.s32.totalorder %s138, %s140
      %p147 = scmp.eq.s32.totalorder %s20, 1
      %p148 = por %p146, %p147
      %p149 = scmp.ne.s32.totalorder %s140, %s141
      %p150 = scmp.eq.s32.totalorder %s20, 0
      %p151 = por %p149, %p150
      %p152 = scmp.ne.s32.totalorder %s140, %s141
      %p153 = scmp.eq.s32.totalorder %s21, 1
      %p154 = por %p152, %p153
      %p156 = scmp.ne.s32.totalorder %s141, %s155
      %p157 = scmp.eq.s32.totalorder %s21, 0
      %p158 = por %p156, %p157
      %s159 = ssub.s32 %s15, %s22
      %p160 = scmp.eq.s32.totalorder %s159, 0
      %s162 = sadd.s32 %s161, 1
      %s163 = scalar_select %p160, %s161, %s162
      %p166 = pneg %p160
      %p167 = scmp.eq.s32.totalorder %s15, 1
      %p168 = por %p166, %p167
      %p169 = scmp.ne.s32.totalorder %s161, %s164
      %p170 = scmp.eq.s32.totalorder %s15, 0
      %p171 = por %p169, %p170
      %p172 = scmp.ne.s32.totalorder %s161, %s164
      %p173 = scmp.eq.s32.totalorder %s20, 1
      %p174 = por %p172, %p173
      %p175 = scmp.ne.s32.totalorder %s164, %s165
      %p176 = scmp.eq.s32.totalorder %s20, 0
      %p177 = por %p175, %p176
      %p178 = scmp.ne.s32.totalorder %s164, %s165
      %p179 = scmp.eq.s32.totalorder %s21, 1
      %p180 = por %p178, %p179
      %p182 = scmp.ne.s32.totalorder %s165, %s181
      %p183 = scmp.eq.s32.totalorder %s21, 0
      %p184 = por %p182, %p183
      %p185 = scmp.le.s32.totalorder 1, %s15
      %p186 = scmp.lt.s32.totalorder %s15, 3
      %p187 = pnand %p185, %p186
      %p188 = pneg %p187
      // Predicated region
      $region9: #{tpu_custom_call.1} parent=5 // pred_check
        _
      $region10: #{tpu_custom_call.1} parent=5 // pred_check_branch
        %190 = sbr.rel (%p187) target = $region12
      $region11: #{tpu_custom_call.1} parent=5 // pred_region
        %s191 = ssub.s32 %s15, 1
        // Predicated region
        $region13: #{tpu_custom_call.1} parent=11 // pred_check
          %p192 = pneg %p88
        $region14: #{tpu_custom_call.1} parent=11 // pred_check_branch
          %194 = sbr.rel (%p192) target = $region16
        $region15: #{tpu_custom_call.1} parent=11 // pred_region
          _
        $region16: #{tpu_custom_call.1} parent=11 // pred_fallthru
          _
        // Predicated region
        $region17: #{tpu_custom_call.1} parent=11 // pred_check
          %p195 = pneg %p109
        $region18: #{tpu_custom_call.1} parent=11 // pred_check_branch
          %197 = sbr.rel (%p195) target = $region20
        $region19: #{tpu_custom_call.1} parent=11 // pred_region
          _
        $region20: #{tpu_custom_call.1} parent=11 // pred_fallthru
          _
        // Predicated region
        $region21: #{tpu_custom_call.1} parent=11 // pred_check
          %p198 = pneg %p130
        $region22: #{tpu_custom_call.1} parent=11 // pred_check_branch
          %200 = sbr.rel (%p198) target = $region24
        $region23: #{tpu_custom_call.1} parent=11 // pred_region
          _
        $region24: #{tpu_custom_call.1} parent=11 // pred_fallthru
          _
        // Predicated region
        $region25: #{tpu_custom_call.1} parent=11 // pred_check
          %p201 = pneg %p151
        $region26: #{tpu_custom_call.1} parent=11 // pred_check_branch
          %203 = sbr.rel (%p201) target = $region28
        $region27: #{tpu_custom_call.1} parent=11 // pred_region
          _
        $region28: #{tpu_custom_call.1} parent=11 // pred_fallthru
          _
      $region12: #{tpu_custom_call.1} parent=5 // pred_fallthru
        _
      %p204 = scmp.lt.s32.totalorder %s15, 2
      // Predicated region
      $region29: #{tpu_custom_call.1} parent=5 // pred_check
        %p205 = pneg %p204
      $region30: #{tpu_custom_call.1} parent=5 // pred_check_branch
        %207 = sbr.rel (%p205) target = $region32
      $region31: #{tpu_custom_call.1} parent=5 // pred_region
        // Predicated region
        $region33: #{tpu_custom_call.1} parent=31 // pred_check
          %p208 = pneg %p35
        $region34: #{tpu_custom_call.1} parent=31 // pred_check_branch
          %210 = sbr.rel (%p208) target = $region36
        $region35: #{tpu_custom_call.1} parent=31 // pred_region
          %p211 = scmp.lt.s32.totalorder %s15, 1
          %s212 = scalar_select %p211, %s15, 1
          %s213 = smul.addr %s212, 72
          %s214 = smul.addr %s213, 4
          %s215 = scalar_lea.vmem %s0, %s214
        $region36: #{tpu_custom_call.1} parent=31 // pred_fallthru
          _
        // Predicated region
        $region37: #{tpu_custom_call.1} parent=31 // pred_check
          %p216 = pneg %p61
        $region38: #{tpu_custom_call.1} parent=31 // pred_check_branch
          %218 = sbr.rel (%p216) target = $region40
        $region39: #{tpu_custom_call.1} parent=31 // pred_region
          %p219 = scmp.lt.s32.totalorder %s15, 1
          %s220 = scalar_select %p219, %s15, 1
          %s221 = smul.addr %s220, 8
          %s222 = smul.addr %s221, 4
          %s223 = scalar_lea.vmem %s1, %s222
        $region40: #{tpu_custom_call.1} parent=31 // pred_fallthru
          _
      $region32: #{tpu_custom_call.1} parent=5 // pred_fallthru
        _
      %p224 = scmp.le.s32.totalorder 1, %s15
      %p225 = scmp.lt.s32.totalorder %s15, 3
      %p226 = pnand %p224, %p225
      %p227 = pneg %p226
      // Predicated region
      $region41: #{tpu_custom_call.1} parent=5 // pred_check
        _
      $region42: #{tpu_custom_call.1} parent=5 // pred_check_branch
        %229 = sbr.rel (%p226) target = $region44
      $region43: #{tpu_custom_call.1} parent=5 // pred_region
        %s230 = ssub.s32 %s15, 1
        %p231 = scmp.lt.s32.totalorder %s20, 1
        %s232 = scalar_select %p231, %s20, 1
        %s233 = smul.addr %s232, 72
        %s234 = smul.addr %s233, 4
        %s235 = scalar_lea.vmem %s0, %s234
        %p236 = pneg %p41
        %p237 = pneg %p38
        %p238 = scmp.lt.s32.totalorder %s20, 1
        %s239 = scalar_select %p238, %s20, 1
        %s240 = smul.addr %s239, 8
        %s241 = smul.addr %s240, 4
        %s242 = scalar_lea.vmem %s1, %s241
        %p243 = pneg %p67
        %p244 = pneg %p64
        %p245 = pneg %p88
        %p246 = pneg %p85
        %p247 = pneg %p109
        %p248 = pneg %p106
        %p249 = pneg %p130
        %p250 = pneg %p127
        %p251 = pneg %p151
        %p252 = pneg %p148
        %p253 = pneg %p177
        %p254 = pneg %p174
        %s255 = sand.u32 %s164, 1
        %s256 = scalar_lea.sflag [#allocation4], %s255
        %s257 = sand.u32 %s164, 1
        %s258 = smul.addr %s257, 8
        %s259 = scalar_lea.vmem [#allocation3], %s258
        %p260 = scmp.lt.s32.totalorder %s20, 1
        %s261 = scalar_select %p260, %s20, 1
        %s262 = smul.addr %s261, 72
        %s263 = smul.addr %s262, 4
        %s264 = scalar_lea.vmem %s0, %s263
        %p265 = scmp.lt.s32.totalorder %s20, 1
        %s266 = scalar_select %p265, %s20, 1
        %s267 = smul.addr %s266, 8
        %s268 = smul.addr %s267, 4
        %s269 = scalar_lea.vmem %s1, %s268
        %v271 = vld [vmem:[%s264] sm:$0xf]
        %v272 = vld [vmem:[%s264 + $0x8] sm:$0xf]
        %v273 = vld [vmem:[%s264 + $0x10] sm:$0xf]
        %v274 = vld [vmem:[%s264 + $0x18] sm:$0xf]
        %v275 = vld [vmem:[%s264 + $0x20] sm:$0xf]
        %v276 = vld [vmem:[%s264 + $0x28] sm:$0xf]
        %v277 = vld [vmem:[%s264 + $0x30] sm:$0xf]
        %v278 = vld [vmem:[%s264 + $0x38] sm:$0xf]
        %s279 = scalar_lea.vmem %s264, 72
        %v280 = vld [vmem:[%s279] sm:$0xf]
        %v281 = vld [vmem:[%s279 + $0x8] sm:$0xf]
        %v282 = vld [vmem:[%s279 + $0x10] sm:$0xf]
        %v283 = vld [vmem:[%s279 + $0x18] sm:$0xf]
        %v284 = vld [vmem:[%s279 + $0x20] sm:$0xf]
        %v285 = vld [vmem:[%s279 + $0x28] sm:$0xf]
        %v286 = vld [vmem:[%s279 + $0x30] sm:$0xf]
        %v287 = vld [vmem:[%s279 + $0x38] sm:$0xf]
        %v288 = vld [vmem:[%s264 + $0x4] sm:$0x1]
        %v289 = vld [vmem:[%s264 + $0xc] sm:$0x1]
        %v290 = vld [vmem:[%s264 + $0x14] sm:$0x1]
        %v291 = vld [vmem:[%s264 + $0x1c] sm:$0x1]
        %v292 = vld [vmem:[%s264 + $0x24] sm:$0x1]
        %v293 = vld [vmem:[%s264 + $0x2c] sm:$0x1]
        %v294 = vld [vmem:[%s264 + $0x34] sm:$0x1]
        %v295 = vld [vmem:[%s264 + $0x3c] sm:$0x1]
        %v296 = vld [vmem:[%s279 + $0x4] sm:$0x1]
        %v297 = vld [vmem:[%s279 + $0xc] sm:$0x1]
        %v298 = vld [vmem:[%s279 + $0x14] sm:$0x1]
        %v299 = vld [vmem:[%s279 + $0x1c] sm:$0x1]
        %v300 = vld [vmem:[%s279 + $0x24] sm:$0x1]
        %v301 = vld [vmem:[%s279 + $0x2c] sm:$0x1]
        %v302 = vld [vmem:[%s279 + $0x34] sm:$0x1]
        %v303 = vld [vmem:[%s279 + $0x3c] sm:$0x1]
        %s304 = scalar_lea.vmem %s264, 144
        %v305 = vld [vmem:[%s304] sm:$0xf]
        %v306 = vld [vmem:[%s304 + $0x8] sm:$0xf]
        %v307 = vld [vmem:[%s304 + $0x10] sm:$0xf]
        %v308 = vld [vmem:[%s304 + $0x18] sm:$0xf]
        %v309 = vld [vmem:[%s304 + $0x20] sm:$0xf]
        %v310 = vld [vmem:[%s304 + $0x28] sm:$0xf]
        %v311 = vld [vmem:[%s304 + $0x30] sm:$0xf]
        %v312 = vld [vmem:[%s304 + $0x38] sm:$0xf]
        %s313 = scalar_lea.vmem %s264, 216
        %v314 = vld [vmem:[%s313] sm:$0xf]
        %v315 = vld [vmem:[%s313 + $0x8] sm:$0xf]
        %v316 = vld [vmem:[%s313 + $0x10] sm:$0xf]
        %v317 = vld [vmem:[%s313 + $0x18] sm:$0xf]
        %v318 = vld [vmem:[%s313 + $0x20] sm:$0xf]
        %v319 = vld [vmem:[%s313 + $0x28] sm:$0xf]
        %v320 = vld [vmem:[%s313 + $0x30] sm:$0xf]
        %v321 = vld [vmem:[%s313 + $0x38] sm:$0xf]
        %v322 = vld [vmem:[%s304 + $0x4] sm:$0x1]
        %v323 = vld [vmem:[%s304 + $0xc] sm:$0x1]
        %v324 = vld [vmem:[%s304 + $0x14] sm:$0x1]
        %v325 = vld [vmem:[%s304 + $0x1c] sm:$0x1]
        %v326 = vld [vmem:[%s304 + $0x24] sm:$0x1]
        %v327 = vld [vmem:[%s304 + $0x2c] sm:$0x1]
        %v328 = vld [vmem:[%s304 + $0x34] sm:$0x1]
        %v329 = vld [vmem:[%s304 + $0x3c] sm:$0x1]
        %v330 = vld [vmem:[%s313 + $0x4] sm:$0x1]
        %v331 = vld [vmem:[%s313 + $0xc] sm:$0x1]
        %v332 = vld [vmem:[%s313 + $0x14] sm:$0x1]
        %v333 = vld [vmem:[%s313 + $0x1c] sm:$0x1]
        %v334 = vld [vmem:[%s313 + $0x24] sm:$0x1]
        %v335 = vld [vmem:[%s313 + $0x2c] sm:$0x1]
        %v336 = vld [vmem:[%s313 + $0x34] sm:$0x1]
        %v337 = vld [vmem:[%s313 + $0x3c] sm:$0x1]
        %s338 = scalar_lea.vmem %s264, 8
        %v339 = vld [vmem:[%s338] sm:$0xf]
        %v340 = vld [vmem:[%s338 + $0x8] sm:$0xf]
        %v341 = vld [vmem:[%s338 + $0x10] sm:$0xf]
        %v342 = vld [vmem:[%s338 + $0x18] sm:$0xf]
        %v343 = vld [vmem:[%s338 + $0x20] sm:$0xf]
        %v344 = vld [vmem:[%s338 + $0x28] sm:$0xf]
        %v345 = vld [vmem:[%s338 + $0x30] sm:$0xf]
        %v346 = vld [vmem:[%s338 + $0x38] sm:$0xf]
        %s347 = scalar_lea.vmem %s264, 80
        %v348 = vld [vmem:[%s347] sm:$0xf]
        %v349 = vld [vmem:[%s347 + $0x8] sm:$0xf]
        %v350 = vld [vmem:[%s347 + $0x10] sm:$0xf]
        %v351 = vld [vmem:[%s347 + $0x18] sm:$0xf]
        %v352 = vld [vmem:[%s347 + $0x20] sm:$0xf]
        %v353 = vld [vmem:[%s347 + $0x28] sm:$0xf]
        %v354 = vld [vmem:[%s347 + $0x30] sm:$0xf]
        %v355 = vld [vmem:[%s347 + $0x38] sm:$0xf]
        %v356 = vld [vmem:[%s338 + $0x4] sm:$0x1]
        %v357 = vld [vmem:[%s338 + $0xc] sm:$0x1]
        %v358 = vld [vmem:[%s338 + $0x14] sm:$0x1]
        %v359 = vld [vmem:[%s338 + $0x1c] sm:$0x1]
        %v360 = vld [vmem:[%s338 + $0x24] sm:$0x1]
        %v361 = vld [vmem:[%s338 + $0x2c] sm:$0x1]
        %v362 = vld [vmem:[%s338 + $0x34] sm:$0x1]
        %v363 = vld [vmem:[%s338 + $0x3c] sm:$0x1]
        %v364 = vld [vmem:[%s347 + $0x4] sm:$0x1]
        %v365 = vld [vmem:[%s347 + $0xc] sm:$0x1]
        %v366 = vld [vmem:[%s347 + $0x14] sm:$0x1]
        %v367 = vld [vmem:[%s347 + $0x1c] sm:$0x1]
        %v368 = vld [vmem:[%s347 + $0x24] sm:$0x1]
        %v369 = vld [vmem:[%s347 + $0x2c] sm:$0x1]
        %v370 = vld [vmem:[%s347 + $0x34] sm:$0x1]
        %v371 = vld [vmem:[%s347 + $0x3c] sm:$0x1]
        %s372 = scalar_lea.vmem %s264, 152
        %v373 = vld [vmem:[%s372] sm:$0xf]
        %v374 = vld [vmem:[%s372 + $0x8] sm:$0xf]
        %v375 = vld [vmem:[%s372 + $0x10] sm:$0xf]
        %v376 = vld [vmem:[%s372 + $0x18] sm:$0xf]
        %v377 = vld [vmem:[%s372 + $0x20] sm:$0xf]
        %v378 = vld [vmem:[%s372 + $0x28] sm:$0xf]
        %v379 = vld [vmem:[%s372 + $0x30] sm:$0xf]
        %v380 = vld [vmem:[%s372 + $0x38] sm:$0xf]
        %s381 = scalar_lea.vmem %s264, 224
        %v382 = vld [vmem:[%s381] sm:$0xf]
        %v383 = vld [vmem:[%s381 + $0x8] sm:$0xf]
        %v384 = vld [vmem:[%s381 + $0x10] sm:$0xf]
        %v385 = vld [vmem:[%s381 + $0x18] sm:$0xf]
        %v386 = vld [vmem:[%s381 + $0x20] sm:$0xf]
        %v387 = vld [vmem:[%s381 + $0x28] sm:$0xf]
        %v388 = vld [vmem:[%s381 + $0x30] sm:$0xf]
        %v389 = vld [vmem:[%s381 + $0x38] sm:$0xf]
        %v390 = vld [vmem:[%s372 + $0x4] sm:$0x1]
        %v391 = vld [vmem:[%s372 + $0xc] sm:$0x1]
        %v392 = vld [vmem:[%s372 + $0x14] sm:$0x1]
        %v393 = vld [vmem:[%s372 + $0x1c] sm:$0x1]
        %v394 = vld [vmem:[%s372 + $0x24] sm:$0x1]
        %v395 = vld [vmem:[%s372 + $0x2c] sm:$0x1]
        %v396 = vld [vmem:[%s372 + $0x34] sm:$0x1]
        %v397 = vld [vmem:[%s372 + $0x3c] sm:$0x1]
        %v398 = vld [vmem:[%s381 + $0x4] sm:$0x1]
        %v399 = vld [vmem:[%s381 + $0xc] sm:$0x1]
        %v400 = vld [vmem:[%s381 + $0x14] sm:$0x1]
        %v401 = vld [vmem:[%s381 + $0x1c] sm:$0x1]
        %v402 = vld [vmem:[%s381 + $0x24] sm:$0x1]
        %v403 = vld [vmem:[%s381 + $0x2c] sm:$0x1]
        %v404 = vld [vmem:[%s381 + $0x34] sm:$0x1]
        %v405 = vld [vmem:[%s381 + $0x3c] sm:$0x1]
        %v406 = vmax.bf16 %v271, 0
        %v407 = vmax.bf16 %v272, 0
        %v408 = vmax.bf16 %v273, 0
        %v409 = vmax.bf16 %v274, 0
        %v410 = vmax.bf16 %v275, 0
        %v411 = vmax.bf16 %v276, 0
        %v412 = vmax.bf16 %v277, 0
        %v413 = vmax.bf16 %v278, 0
        %v414 = vmax.bf16 %v305, 0
        %v415 = vmax.bf16 %v306, 0
        %v416 = vmax.bf16 %v307, 0
        %v417 = vmax.bf16 %v308, 0
        %v418 = vmax.bf16 %v309, 0
        %v419 = vmax.bf16 %v310, 0
        %v420 = vmax.bf16 %v311, 0
        %v421 = vmax.bf16 %v312, 0
        %v422 = vmax.bf16 %v339, 0
        %v423 = vmax.bf16 %v340, 0
        %v424 = vmax.bf16 %v341, 0
        %v425 = vmax.bf16 %v342, 0
        %v426 = vmax.bf16 %v343, 0
        %v427 = vmax.bf16 %v344, 0
        %v428 = vmax.bf16 %v345, 0
        %v429 = vmax.bf16 %v346, 0
        %v438 = vunpack.c.l.b16 %v414
        %v439 = vunpack.c.l.b16 %v415
        %v440 = vunpack.c.l.b16 %v416
        %v441 = vunpack.c.l.b16 %v417
        %v442 = vunpack.c.l.b16 %v418
        %v443 = vunpack.c.l.b16 %v419
        %v444 = vunpack.c.l.b16 %v420
        %v445 = vunpack.c.l.b16 %v421
        %v446 = vpack.c.b16 %v438, %v438
        %v447 = vpack.c.b16 %v439, %v439
        %v448 = vpack.c.b16 %v440, %v440
        %v449 = vpack.c.b16 %v441, %v441
        %v450 = vpack.c.b16 %v442, %v442
        %v451 = vpack.c.b16 %v443, %v443
        %v452 = vpack.c.b16 %v444, %v444
        %v453 = vpack.c.b16 %v445, %v445
        %454 = vrot.lane.b32.xlu0 %v446, 4
        %v455 = vpop.permute.xlu0 %454
        %456 = vrot.lane.b32.xlu0 %v447, 4
        %v457 = vpop.permute.xlu0 %456
        %458 = vrot.lane.b32.xlu0 %v448, 4
        %v459 = vpop.permute.xlu0 %458
        %460 = vrot.lane.b32.xlu0 %v449, 4
        %v461 = vpop.permute.xlu0 %460
        %462 = vrot.lane.b32.xlu0 %v450, 4
        %v463 = vpop.permute.xlu0 %462
        %464 = vrot.lane.b32.xlu0 %v451, 4
        %v465 = vpop.permute.xlu0 %464
        %466 = vrot.lane.b32.xlu0 %v452, 4
        %v467 = vpop.permute.xlu0 %466
        %468 = vrot.lane.b32.xlu0 %v453, 4
        %v469 = vpop.permute.xlu0 %468
        %v478 = vunpack.c.l.b16 %v422
        %v479 = vunpack.c.l.b16 %v423
        %v480 = vunpack.c.l.b16 %v424
        %v481 = vunpack.c.l.b16 %v425
        %v482 = vunpack.c.l.b16 %v426
        %v483 = vunpack.c.l.b16 %v427
        %v484 = vunpack.c.l.b16 %v428
        %v485 = vunpack.c.l.b16 %v429
        %v486 = vpack.c.b16 %v478, %v478
        %v487 = vpack.c.b16 %v479, %v479
        %v488 = vpack.c.b16 %v480, %v480
        %v489 = vpack.c.b16 %v481, %v481
        %v490 = vpack.c.b16 %v482, %v482
        %v491 = vpack.c.b16 %v483, %v483
        %v492 = vpack.c.b16 %v484, %v484
        %v493 = vpack.c.b16 %v485, %v485
        %494 = vrot.lane.b32.xlu0 %v486, 8
        %v495 = vpop.permute.xlu0 %494
        %496 = vrot.lane.b32.xlu0 %v487, 8
        %v497 = vpop.permute.xlu0 %496
        %498 = vrot.lane.b32.xlu0 %v488, 8
        %v499 = vpop.permute.xlu0 %498
        %500 = vrot.lane.b32.xlu0 %v489, 8
        %v501 = vpop.permute.xlu0 %500
        %502 = vrot.lane.b32.xlu0 %v490, 8
        %v503 = vpop.permute.xlu0 %502
        %504 = vrot.lane.b32.xlu0 %v491, 8
        %v505 = vpop.permute.xlu0 %504
        %506 = vrot.lane.b32.xlu0 %v492, 8
        %v507 = vpop.permute.xlu0 %506
        %508 = vrot.lane.b32.xlu0 %v493, 8
        %v509 = vpop.permute.xlu0 %508
        %vm510 = vcmask 31744
        %v513 = vsel %vm510, %v406, %v455
        %v516 = vsel %vm510, %v407, %v457
        %v519 = vsel %vm510, %v408, %v459
        %v522 = vsel %vm510, %v409, %v461
        %v525 = vsel %vm510, %v410, %v463
        %v528 = vsel %vm510, %v411, %v465
        %v531 = vsel %vm510, %v412, %v467
        %v534 = vsel %vm510, %v413, %v469
        %vm535 = vcmask 64512
        %v537 = vsel %vm535, %v513, %v495
        %v539 = vsel %vm535, %v516, %v497
        %v541 = vsel %vm535, %v519, %v499
        %v543 = vsel %vm535, %v522, %v501
        %v545 = vsel %vm535, %v525, %v503
        %v547 = vsel %vm535, %v528, %v505
        %v549 = vsel %vm535, %v531, %v507
        %v551 = vsel %vm535, %v534, %v509
        %v552 = vmax.bf16 %v280, 0
        %v553 = vmax.bf16 %v281, 0
        %v554 = vmax.bf16 %v282, 0
        %v555 = vmax.bf16 %v283, 0
        %v556 = vmax.bf16 %v284, 0
        %v557 = vmax.bf16 %v285, 0
        %v558 = vmax.bf16 %v286, 0
        %v559 = vmax.bf16 %v287, 0
        %v560 = vmax.bf16 %v314, 0
        %v561 = vmax.bf16 %v315, 0
        %v562 = vmax.bf16 %v316, 0
        %v563 = vmax.bf16 %v317, 0
        %v564 = vmax.bf16 %v318, 0
        %v565 = vmax.bf16 %v319, 0
        %v566 = vmax.bf16 %v320, 0
        %v567 = vmax.bf16 %v321, 0
        %v568 = vmax.bf16 %v348, 0
        %v569 = vmax.bf16 %v349, 0
        %v570 = vmax.bf16 %v350, 0
        %v571 = vmax.bf16 %v351, 0
        %v572 = vmax.bf16 %v352, 0
        %v573 = vmax.bf16 %v353, 0
        %v574 = vmax.bf16 %v354, 0
        %v575 = vmax.bf16 %v355, 0
        %v584 = vunpack.c.l.b16 %v560
        %v585 = vunpack.c.l.b16 %v561
        %v586 = vunpack.c.l.b16 %v562
        %v587 = vunpack.c.l.b16 %v563
        %v588 = vunpack.c.l.b16 %v564
        %v589 = vunpack.c.l.b16 %v565
        %v590 = vunpack.c.l.b16 %v566
        %v591 = vunpack.c.l.b16 %v567
        %v592 = vpack.c.b16 %v584, %v584
        %v593 = vpack.c.b16 %v585, %v585
        %v594 = vpack.c.b16 %v586, %v586
        %v595 = vpack.c.b16 %v587, %v587
        %v596 = vpack.c.b16 %v588, %v588
        %v597 = vpack.c.b16 %v589, %v589
        %v598 = vpack.c.b16 %v590, %v590
        %v599 = vpack.c.b16 %v591, %v591
        %600 = vrot.lane.b32.xlu0 %v592, 4
        %v601 = vpop.permute.xlu0 %600
        %602 = vrot.lane.b32.xlu0 %v593, 4
        %v603 = vpop.permute.xlu0 %602
        %604 = vrot.lane.b32.xlu0 %v594, 4
        %v605 = vpop.permute.xlu0 %604
        %606 = vrot.lane.b32.xlu0 %v595, 4
        %v607 = vpop.permute.xlu0 %606
        %608 = vrot.lane.b32.xlu0 %v596, 4
        %v609 = vpop.permute.xlu0 %608
        %610 = vrot.lane.b32.xlu0 %v597, 4
        %v611 = vpop.permute.xlu0 %610
        %612 = vrot.lane.b32.xlu0 %v598, 4
        %v613 = vpop.permute.xlu0 %612
        %614 = vrot.lane.b32.xlu0 %v599, 4
        %v615 = vpop.permute.xlu0 %614
        %v624 = vunpack.c.l.b16 %v568
        %v625 = vunpack.c.l.b16 %v569
        %v626 = vunpack.c.l.b16 %v570
        %v627 = vunpack.c.l.b16 %v571
        %v628 = vunpack.c.l.b16 %v572
        %v629 = vunpack.c.l.b16 %v573
        %v630 = vunpack.c.l.b16 %v574
        %v631 = vunpack.c.l.b16 %v575
        %v632 = vpack.c.b16 %v624, %v624
        %v633 = vpack.c.b16 %v625, %v625
        %v634 = vpack.c.b16 %v626, %v626
        %v635 = vpack.c.b16 %v627, %v627
        %v636 = vpack.c.b16 %v628, %v628
        %v637 = vpack.c.b16 %v629, %v629
        %v638 = vpack.c.b16 %v630, %v630
        %v639 = vpack.c.b16 %v631, %v631
        %640 = vrot.lane.b32.xlu0 %v632, 8
        %v641 = vpop.permute.xlu0 %640
        %642 = vrot.lane.b32.xlu0 %v633, 8
        %v643 = vpop.permute.xlu0 %642
        %644 = vrot.lane.b32.xlu0 %v634, 8
        %v645 = vpop.permute.xlu0 %644
        %646 = vrot.lane.b32.xlu0 %v635, 8
        %v647 = vpop.permute.xlu0 %646
        %648 = vrot.lane.b32.xlu0 %v636, 8
        %v649 = vpop.permute.xlu0 %648
        %650 = vrot.lane.b32.xlu0 %v637, 8
        %v651 = vpop.permute.xlu0 %650
        %652 = vrot.lane.b32.xlu0 %v638, 8
        %v653 = vpop.permute.xlu0 %652
        %654 = vrot.lane.b32.xlu0 %v639, 8
        %v655 = vpop.permute.xlu0 %654
        %v658 = vsel %vm510, %v552, %v601
        %v661 = vsel %vm510, %v553, %v603
        %v664 = vsel %vm510, %v554, %v605
        %v667 = vsel %vm510, %v555, %v607
        %v670 = vsel %vm510, %v556, %v609
        %v673 = vsel %vm510, %v557, %v611
        %v676 = vsel %vm510, %v558, %v613
        %v679 = vsel %vm510, %v559, %v615
        %v681 = vsel %vm535, %v658, %v641
        %v683 = vsel %vm535, %v661, %v643
        %v685 = vsel %vm535, %v664, %v645
        %v687 = vsel %vm535, %v667, %v647
        %v689 = vsel %vm535, %v670, %v649
        %v691 = vsel %vm535, %v673, %v651
        %v693 = vsel %vm535, %v676, %v653
        %v695 = vsel %vm535, %v679, %v655
        %v696 = vmax.bf16 %v373, 0
        %v697 = vmax.bf16 %v374, 0
        %v698 = vmax.bf16 %v375, 0
        %v699 = vmax.bf16 %v376, 0
        %v700 = vmax.bf16 %v377, 0
        %v701 = vmax.bf16 %v378, 0
        %v702 = vmax.bf16 %v379, 0
        %v703 = vmax.bf16 %v380, 0
        %704 = vrot.lane.b32.xlu0 %v486, 4
        %v705 = vpop.permute.xlu0 %704
        %706 = vrot.lane.b32.xlu0 %v487, 4
        %v707 = vpop.permute.xlu0 %706
        %708 = vrot.lane.b32.xlu0 %v488, 4
        %v709 = vpop.permute.xlu0 %708
        %710 = vrot.lane.b32.xlu0 %v489, 4
        %v711 = vpop.permute.xlu0 %710
        %712 = vrot.lane.b32.xlu0 %v490, 4
        %v713 = vpop.permute.xlu0 %712
        %714 = vrot.lane.b32.xlu0 %v491, 4
        %v715 = vpop.permute.xlu0 %714
        %716 = vrot.lane.b32.xlu0 %v492, 4
        %v717 = vpop.permute.xlu0 %716
        %718 = vrot.lane.b32.xlu0 %v493, 4
        %v719 = vpop.permute.xlu0 %718
        %v728 = vunpack.c.l.b16 %v696
        %v729 = vunpack.c.l.b16 %v697
        %v730 = vunpack.c.l.b16 %v698
        %v731 = vunpack.c.l.b16 %v699
        %v732 = vunpack.c.l.b16 %v700
        %v733 = vunpack.c.l.b16 %v701
        %v734 = vunpack.c.l.b16 %v702
        %v735 = vunpack.c.l.b16 %v703
        %v736 = vpack.c.b16 %v728, %v728
        %v737 = vpack.c.b16 %v729, %v729
        %v738 = vpack.c.b16 %v730, %v730
        %v739 = vpack.c.b16 %v731, %v731
        %v740 = vpack.c.b16 %v732, %v732
        %v741 = vpack.c.b16 %v733, %v733
        %v742 = vpack.c.b16 %v734, %v734
        %v743 = vpack.c.b16 %v735, %v735
        %744 = vrot.lane.b32.xlu0 %v736, 8
        %v745 = vpop.permute.xlu0 %744
        %746 = vrot.lane.b32.xlu0 %v737, 8
        %v747 = vpop.permute.xlu0 %746
        %748 = vrot.lane.b32.xlu0 %v738, 8
        %v749 = vpop.permute.xlu0 %748
        %750 = vrot.lane.b32.xlu0 %v739, 8
        %v751 = vpop.permute.xlu0 %750
        %752 = vrot.lane.b32.xlu0 %v740, 8
        %v753 = vpop.permute.xlu0 %752
        %754 = vrot.lane.b32.xlu0 %v741, 8
        %v755 = vpop.permute.xlu0 %754
        %756 = vrot.lane.b32.xlu0 %v742, 8
        %v757 = vpop.permute.xlu0 %756
        %758 = vrot.lane.b32.xlu0 %v743, 8
        %v759 = vpop.permute.xlu0 %758
        %v762 = vsel %vm510, %v414, %v705
        %v765 = vsel %vm510, %v415, %v707
        %v768 = vsel %vm510, %v416, %v709
        %v771 = vsel %vm510, %v417, %v711
        %v774 = vsel %vm510, %v418, %v713
        %v777 = vsel %vm510, %v419, %v715
        %v780 = vsel %vm510, %v420, %v717
        %v783 = vsel %vm510, %v421, %v719
        %v785 = vsel %vm535, %v762, %v745
        %v787 = vsel %vm535, %v765, %v747
        %v789 = vsel %vm535, %v768, %v749
        %v791 = vsel %vm535, %v771, %v751
        %v793 = vsel %vm535, %v774, %v753
        %v795 = vsel %vm535, %v777, %v755
        %v797 = vsel %vm535, %v780, %v757
        %v799 = vsel %vm535, %v783, %v759
        %v800 = vmax.bf16 %v382, 0
        %v801 = vmax.bf16 %v383, 0
        %v802 = vmax.bf16 %v384, 0
        %v803 = vmax.bf16 %v385, 0
        %v804 = vmax.bf16 %v386, 0
        %v805 = vmax.bf16 %v387, 0
        %v806 = vmax.bf16 %v388, 0
        %v807 = vmax.bf16 %v389, 0
        %808 = vrot.lane.b32.xlu0 %v632, 4
        %v809 = vpop.permute.xlu0 %808
        %810 = vrot.lane.b32.xlu0 %v633, 4
        %v811 = vpop.permute.xlu0 %810
        %812 = vrot.lane.b32.xlu0 %v634, 4
        %v813 = vpop.permute.xlu0 %812
        %814 = vrot.lane.b32.xlu0 %v635, 4
        %v815 = vpop.permute.xlu0 %814
        %816 = vrot.lane.b32.xlu0 %v636, 4
        %v817 = vpop.permute.xlu0 %816
        %818 = vrot.lane.b32.xlu0 %v637, 4
        %v819 = vpop.permute.xlu0 %818
        %820 = vrot.lane.b32.xlu0 %v638, 4
        %v821 = vpop.permute.xlu0 %820
        %822 = vrot.lane.b32.xlu0 %v639, 4
        %v823 = vpop.permute.xlu0 %822
        %v832 = vunpack.c.l.b16 %v800
        %v833 = vunpack.c.l.b16 %v801
        %v834 = vunpack.c.l.b16 %v802
        %v835 = vunpack.c.l.b16 %v803
        %v836 = vunpack.c.l.b16 %v804
        %v837 = vunpack.c.l.b16 %v805
        %v838 = vunpack.c.l.b16 %v806
        %v839 = vunpack.c.l.b16 %v807
        %v840 = vpack.c.b16 %v832, %v832
        %v841 = vpack.c.b16 %v833, %v833
        %v842 = vpack.c.b16 %v834, %v834
        %v843 = vpack.c.b16 %v835, %v835
        %v844 = vpack.c.b16 %v836, %v836
        %v845 = vpack.c.b16 %v837, %v837
        %v846 = vpack.c.b16 %v838, %v838
        %v847 = vpack.c.b16 %v839, %v839
        %848 = vrot.lane.b32.xlu0 %v840, 8
        %v849 = vpop.permute.xlu0 %848
        %850 = vrot.lane.b32.xlu0 %v841, 8
        %v851 = vpop.permute.xlu0 %850
        %852 = vrot.lane.b32.xlu0 %v842, 8
        %v853 = vpop.permute.xlu0 %852
        %854 = vrot.lane.b32.xlu0 %v843, 8
        %v855 = vpop.permute.xlu0 %854
        %856 = vrot.lane.b32.xlu0 %v844, 8
        %v857 = vpop.permute.xlu0 %856
        %858 = vrot.lane.b32.xlu0 %v845, 8
        %v859 = vpop.permute.xlu0 %858
        %860 = vrot.lane.b32.xlu0 %v846, 8
        %v861 = vpop.permute.xlu0 %860
        %862 = vrot.lane.b32.xlu0 %v847, 8
        %v863 = vpop.permute.xlu0 %862
        %v866 = vsel %vm510, %v560, %v809
        %v869 = vsel %vm510, %v561, %v811
        %v872 = vsel %vm510, %v562, %v813
        %v875 = vsel %vm510, %v563, %v815
        %v878 = vsel %vm510, %v564, %v817
        %v881 = vsel %vm510, %v565, %v819
        %v884 = vsel %vm510, %v566, %v821
        %v887 = vsel %vm510, %v567, %v823
        %v889 = vsel %vm535, %v866, %v849
        %v891 = vsel %vm535, %v869, %v851
        %v893 = vsel %vm535, %v872, %v853
        %v895 = vsel %vm535, %v875, %v855
        %v897 = vsel %vm535, %v878, %v857
        %v899 = vsel %vm535, %v881, %v859
        %v901 = vsel %vm535, %v884, %v861
        %v903 = vsel %vm535, %v887, %v863
        %v904 = vld [vmem:[%s2] sm:$0xf]
        %v905 = vld [vmem:[%s2 + $0x4] sm:$0x3]
        %v906 = vmax.bf16 %v288, 0
        %v907 = vmax.bf16 %v289, 0
        %v908 = vmax.bf16 %v290, 0
        %v909 = vmax.bf16 %v291, 0
        %v910 = vmax.bf16 %v292, 0
        %v911 = vmax.bf16 %v293, 0
        %v912 = vmax.bf16 %v294, 0
        %v913 = vmax.bf16 %v295, 0
        %v914 = vmax.bf16 %v322, 0
        %v915 = vmax.bf16 %v323, 0
        %v916 = vmax.bf16 %v324, 0
        %v917 = vmax.bf16 %v325, 0
        %v918 = vmax.bf16 %v326, 0
        %v919 = vmax.bf16 %v327, 0
        %v920 = vmax.bf16 %v328, 0
        %v921 = vmax.bf16 %v329, 0
        %v922 = vmax.bf16 %v356, 0
        %v923 = vmax.bf16 %v357, 0
        %v924 = vmax.bf16 %v358, 0
        %v925 = vmax.bf16 %v359, 0
        %v926 = vmax.bf16 %v360, 0
        %v927 = vmax.bf16 %v361, 0
        %v928 = vmax.bf16 %v362, 0
        %v929 = vmax.bf16 %v363, 0
        %v946 = vunpack.c.l.b16 %v406
        %v947 = vunpack.c.l.b16 %v906
        %v948 = vunpack.c.l.b16 %v407
        %v949 = vunpack.c.l.b16 %v907
        %v950 = vunpack.c.l.b16 %v408
        %v951 = vunpack.c.l.b16 %v908
        %v952 = vunpack.c.l.b16 %v409
        %v953 = vunpack.c.l.b16 %v909
        %v954 = vunpack.c.l.b16 %v410
        %v955 = vunpack.c.l.b16 %v910
        %v956 = vunpack.c.l.b16 %v411
        %v957 = vunpack.c.l.b16 %v911
        %v958 = vunpack.c.l.b16 %v412
        %v959 = vunpack.c.l.b16 %v912
        %v960 = vunpack.c.l.b16 %v413
        %v961 = vunpack.c.l.b16 %v913
        %v962 = vpack.c.b16 %v947, %v946
        %v963 = vpack.c.b16 %v949, %v948
        %v964 = vpack.c.b16 %v951, %v950
        %v965 = vpack.c.b16 %v953, %v952
        %v966 = vpack.c.b16 %v955, %v954
        %v967 = vpack.c.b16 %v957, %v956
        %v968 = vpack.c.b16 %v959, %v958
        %v969 = vpack.c.b16 %v961, %v960
        %v978 = vunpack.c.l.b16 %v914
        %v979 = vunpack.c.l.b16 %v915
        %v980 = vunpack.c.l.b16 %v916
        %v981 = vunpack.c.l.b16 %v917
        %v982 = vunpack.c.l.b16 %v918
        %v983 = vunpack.c.l.b16 %v919
        %v984 = vunpack.c.l.b16 %v920
        %v985 = vunpack.c.l.b16 %v921
        %v986 = vpack.c.b16 %v978, %v438
        %v987 = vpack.c.b16 %v979, %v439
        %v988 = vpack.c.b16 %v980, %v440
        %v989 = vpack.c.b16 %v981, %v441
        %v990 = vpack.c.b16 %v982, %v442
        %v991 = vpack.c.b16 %v983, %v443
        %v992 = vpack.c.b16 %v984, %v444
        %v993 = vpack.c.b16 %v985, %v445
        %994 = vrot.lane.b32.xlu0 %v986, 4
        %v995 = vpop.permute.xlu0 %994
        %996 = vrot.lane.b32.xlu0 %v987, 4
        %v997 = vpop.permute.xlu0 %996
        %998 = vrot.lane.b32.xlu0 %v988, 4
        %v999 = vpop.permute.xlu0 %998
        %1000 = vrot.lane.b32.xlu0 %v989, 4
        %v1001 = vpop.permute.xlu0 %1000
        %1002 = vrot.lane.b32.xlu0 %v990, 4
        %v1003 = vpop.permute.xlu0 %1002
        %1004 = vrot.lane.b32.xlu0 %v991, 4
        %v1005 = vpop.permute.xlu0 %1004
        %1006 = vrot.lane.b32.xlu0 %v992, 4
        %v1007 = vpop.permute.xlu0 %1006
        %1008 = vrot.lane.b32.xlu0 %v993, 4
        %v1009 = vpop.permute.xlu0 %1008
        %v1018 = vunpack.c.l.b16 %v922
        %v1019 = vunpack.c.l.b16 %v923
        %v1020 = vunpack.c.l.b16 %v924
        %v1021 = vunpack.c.l.b16 %v925
        %v1022 = vunpack.c.l.b16 %v926
        %v1023 = vunpack.c.l.b16 %v927
        %v1024 = vunpack.c.l.b16 %v928
        %v1025 = vunpack.c.l.b16 %v929
        %v1026 = vpack.c.b16 %v1018, %v478
        %v1027 = vpack.c.b16 %v1019, %v479
        %v1028 = vpack.c.b16 %v1020, %v480
        %v1029 = vpack.c.b16 %v1021, %v481
        %v1030 = vpack.c.b16 %v1022, %v482
        %v1031 = vpack.c.b16 %v1023, %v483
        %v1032 = vpack.c.b16 %v1024, %v484
        %v1033 = vpack.c.b16 %v1025, %v485
        %1034 = vrot.lane.b32.xlu0 %v1026, 8
        %v1035 = vpop.permute.xlu0 %1034
        %1036 = vrot.lane.b32.xlu0 %v1027, 8
        %v1037 = vpop.permute.xlu0 %1036
        %1038 = vrot.lane.b32.xlu0 %v1028, 8
        %v1039 = vpop.permute.xlu0 %1038
        %1040 = vrot.lane.b32.xlu0 %v1029, 8
        %v1041 = vpop.permute.xlu0 %1040
        %1042 = vrot.lane.b32.xlu0 %v1030, 8
        %v1043 = vpop.permute.xlu0 %1042
        %1044 = vrot.lane.b32.xlu0 %v1031, 8
        %v1045 = vpop.permute.xlu0 %1044
        %1046 = vrot.lane.b32.xlu0 %v1032, 8
        %v1047 = vpop.permute.xlu0 %1046
        %1048 = vrot.lane.b32.xlu0 %v1033, 8
        %v1049 = vpop.permute.xlu0 %1048
        %v1052 = vsel %vm510, %v962, %v995
        %v1055 = vsel %vm510, %v963, %v997
        %v1058 = vsel %vm510, %v964, %v999
        %v1061 = vsel %vm510, %v965, %v1001
        %v1064 = vsel %vm510, %v966, %v1003
        %v1067 = vsel %vm510, %v967, %v1005
        %v1070 = vsel %vm510, %v968, %v1007
        %v1073 = vsel %vm510, %v969, %v1009
        %v1075 = vsel %vm535, %v1052, %v1035
        %v1077 = vsel %vm535, %v1055, %v1037
        %v1079 = vsel %vm535, %v1058, %v1039
        %v1081 = vsel %vm535, %v1061, %v1041
        %v1083 = vsel %vm535, %v1064, %v1043
        %v1085 = vsel %vm535, %v1067, %v1045
        %v1087 = vsel %vm535, %v1070, %v1047
        %v1089 = vsel %vm535, %v1073, %v1049
        %v1090 = vmax.bf16 %v390, 0
        %v1091 = vmax.bf16 %v391, 0
        %v1092 = vmax.bf16 %v392, 0
        %v1093 = vmax.bf16 %v393, 0
        %v1094 = vmax.bf16 %v394, 0
        %v1095 = vmax.bf16 %v395, 0
        %v1096 = vmax.bf16 %v396, 0
        %v1097 = vmax.bf16 %v397, 0
        %1098 = vrot.lane.b32.xlu0 %v1026, 4
        %v1099 = vpop.permute.xlu0 %1098
        %1100 = vrot.lane.b32.xlu0 %v1027, 4
        %v1101 = vpop.permute.xlu0 %1100
        %1102 = vrot.lane.b32.xlu0 %v1028, 4
        %v1103 = vpop.permute.xlu0 %1102
        %1104 = vrot.lane.b32.xlu0 %v1029, 4
        %v1105 = vpop.permute.xlu0 %1104
        %1106 = vrot.lane.b32.xlu0 %v1030, 4
        %v1107 = vpop.permute.xlu0 %1106
        %1108 = vrot.lane.b32.xlu0 %v1031, 4
        %v1109 = vpop.permute.xlu0 %1108
        %1110 = vrot.lane.b32.xlu0 %v1032, 4
        %v1111 = vpop.permute.xlu0 %1110
        %1112 = vrot.lane.b32.xlu0 %v1033, 4
        %v1113 = vpop.permute.xlu0 %1112
        %v1122 = vunpack.c.l.b16 %v1090
        %v1123 = vunpack.c.l.b16 %v1091
        %v1124 = vunpack.c.l.b16 %v1092
        %v1125 = vunpack.c.l.b16 %v1093
        %v1126 = vunpack.c.l.b16 %v1094
        %v1127 = vunpack.c.l.b16 %v1095
        %v1128 = vunpack.c.l.b16 %v1096
        %v1129 = vunpack.c.l.b16 %v1097
        %v1130 = vpack.c.b16 %v1122, %v728
        %v1131 = vpack.c.b16 %v1123, %v729
        %v1132 = vpack.c.b16 %v1124, %v730
        %v1133 = vpack.c.b16 %v1125, %v731
        %v1134 = vpack.c.b16 %v1126, %v732
        %v1135 = vpack.c.b16 %v1127, %v733
        %v1136 = vpack.c.b16 %v1128, %v734
        %v1137 = vpack.c.b16 %v1129, %v735
        %1138 = vrot.lane.b32.xlu0 %v1130, 8
        %v1139 = vpop.permute.xlu0 %1138
        %1140 = vrot.lane.b32.xlu0 %v1131, 8
        %v1141 = vpop.permute.xlu0 %1140
        %1142 = vrot.lane.b32.xlu0 %v1132, 8
        %v1143 = vpop.permute.xlu0 %1142
        %1144 = vrot.lane.b32.xlu0 %v1133, 8
        %v1145 = vpop.permute.xlu0 %1144
        %1146 = vrot.lane.b32.xlu0 %v1134, 8
        %v1147 = vpop.permute.xlu0 %1146
        %1148 = vrot.lane.b32.xlu0 %v1135, 8
        %v1149 = vpop.permute.xlu0 %1148
        %1150 = vrot.lane.b32.xlu0 %v1136, 8
        %v1151 = vpop.permute.xlu0 %1150
        %1152 = vrot.lane.b32.xlu0 %v1137, 8
        %v1153 = vpop.permute.xlu0 %1152
        %v1156 = vsel %vm510, %v986, %v1099
        %v1159 = vsel %vm510, %v987, %v1101
        %v1162 = vsel %vm510, %v988, %v1103
        %v1165 = vsel %vm510, %v989, %v1105
        %v1168 = vsel %vm510, %v990, %v1107
        %v1171 = vsel %vm510, %v991, %v1109
        %v1174 = vsel %vm510, %v992, %v1111
        %v1177 = vsel %vm510, %v993, %v1113
        %v1179 = vsel %vm535, %v1156, %v1139
        %v1181 = vsel %vm535, %v1159, %v1141
        %v1183 = vsel %vm535, %v1162, %v1143
        %v1185 = vsel %vm535, %v1165, %v1145
        %v1187 = vsel %vm535, %v1168, %v1147
        %v1189 = vsel %vm535, %v1171, %v1149
        %v1191 = vsel %vm535, %v1174, %v1151
        %v1193 = vsel %vm535, %v1177, %v1153
        %v1194 = vshrl.u32 %v1075, 16
        %v1196 = vshll.u32 %v1075, 16
        %v1198 = vrot.slane %v1196, 1
        %v1199 = vor.u32 %v1194, %v1198
        %v1200 = vshrl.u32 %v1077, 16
        %v1202 = vshll.u32 %v1077, 16
        %v1204 = vrot.slane %v1202, 1
        %v1205 = vor.u32 %v1200, %v1204
        %v1206 = vshrl.u32 %v1079, 16
        %v1208 = vshll.u32 %v1079, 16
        %v1210 = vrot.slane %v1208, 1
        %v1211 = vor.u32 %v1206, %v1210
        %v1212 = vshrl.u32 %v1081, 16
        %v1214 = vshll.u32 %v1081, 16
        %v1216 = vrot.slane %v1214, 1
        %v1217 = vor.u32 %v1212, %v1216
        %v1218 = vshrl.u32 %v1083, 16
        %v1220 = vshll.u32 %v1083, 16
        %v1222 = vrot.slane %v1220, 1
        %v1223 = vor.u32 %v1218, %v1222
        %v1224 = vshrl.u32 %v1085, 16
        %v1226 = vshll.u32 %v1085, 16
        %v1228 = vrot.slane %v1226, 1
        %v1229 = vor.u32 %v1224, %v1228
        %v1230 = vshrl.u32 %v1087, 16
        %v1232 = vshll.u32 %v1087, 16
        %v1234 = vrot.slane %v1232, 1
        %v1235 = vor.u32 %v1230, %v1234
        %v1236 = vshrl.u32 %v1089, 16
        %v1238 = vshll.u32 %v1089, 16
        %v1240 = vrot.slane %v1238, 1
        %v1241 = vor.u32 %v1236, %v1240
        %v1242 = vshrl.u32 %v1179, 16
        %v1244 = vshll.u32 %v1179, 16
        %v1246 = vrot.slane %v1244, 1
        %v1247 = vor.u32 %v1242, %v1246
        %v1248 = vshrl.u32 %v1181, 16
        %v1250 = vshll.u32 %v1181, 16
        %v1252 = vrot.slane %v1250, 1
        %v1253 = vor.u32 %v1248, %v1252
        %v1254 = vshrl.u32 %v1183, 16
        %v1256 = vshll.u32 %v1183, 16
        %v1258 = vrot.slane %v1256, 1
        %v1259 = vor.u32 %v1254, %v1258
        %v1260 = vshrl.u32 %v1185, 16
        %v1262 = vshll.u32 %v1185, 16
        %v1264 = vrot.slane %v1262, 1
        %v1265 = vor.u32 %v1260, %v1264
        %v1266 = vshrl.u32 %v1187, 16
        %v1268 = vshll.u32 %v1187, 16
        %v1270 = vrot.slane %v1268, 1
        %v1271 = vor.u32 %v1266, %v1270
        %v1272 = vshrl.u32 %v1189, 16
        %v1274 = vshll.u32 %v1189, 16
        %v1276 = vrot.slane %v1274, 1
        %v1277 = vor.u32 %v1272, %v1276
        %v1278 = vshrl.u32 %v1191, 16
        %v1280 = vshll.u32 %v1191, 16
        %v1282 = vrot.slane %v1280, 1
        %v1283 = vor.u32 %v1278, %v1282
        %v1284 = vshrl.u32 %v1193, 16
        %v1286 = vshll.u32 %v1193, 16
        %v1288 = vrot.slane %v1286, 1
        %v1289 = vor.u32 %v1284, %v1288
        %s1290 = scalar_lea.vmem %s2, 8
        %v1291 = vld [vmem:[%s1290] sm:$0xf]
        %v1292 = vld [vmem:[%s1290 + $0x4] sm:$0x3]
        %v1309 = vunpack.c.l.b16 %v681
        %v1310 = vunpack.c.l.b16 %v683
        %v1311 = vunpack.c.l.b16 %v685
        %v1312 = vunpack.c.l.b16 %v687
        %v1313 = vunpack.c.l.b16 %v689
        %v1314 = vunpack.c.l.b16 %v691
        %v1315 = vunpack.c.l.b16 %v693
        %v1316 = vunpack.c.l.b16 %v695
        %v1317 = vunpack.c.l.b16 %v1199
        %v1318 = vunpack.c.l.b16 %v1205
        %v1319 = vunpack.c.l.b16 %v1211
        %v1320 = vunpack.c.l.b16 %v1217
        %v1321 = vunpack.c.l.b16 %v1223
        %v1322 = vunpack.c.l.b16 %v1229
        %v1323 = vunpack.c.l.b16 %v1235
        %v1324 = vunpack.c.l.b16 %v1241
        %v1325 = vunpack.c.l.b16 %v889
        %v1326 = vunpack.c.l.b16 %v891
        %v1327 = vunpack.c.l.b16 %v893
        %v1328 = vunpack.c.l.b16 %v895
        %v1329 = vunpack.c.l.b16 %v897
        %v1330 = vunpack.c.l.b16 %v899
        %v1331 = vunpack.c.l.b16 %v901
        %v1332 = vunpack.c.l.b16 %v903
        %v1333 = vunpack.c.l.b16 %v1247
        %v1334 = vunpack.c.l.b16 %v1253
        %v1335 = vunpack.c.l.b16 %v1259
        %v1336 = vunpack.c.l.b16 %v1265
        %v1337 = vunpack.c.l.b16 %v1271
        %v1338 = vunpack.c.l.b16 %v1277
        %v1339 = vunpack.c.l.b16 %v1283
        %v1340 = vunpack.c.l.b16 %v1289
        %v1341 = vpack.c.b16 %v1310, %v1309
        %v1342 = vpack.c.b16 %v1312, %v1311
        %v1343 = vpack.c.b16 %v1314, %v1313
        %v1344 = vpack.c.b16 %v1316, %v1315
        %v1345 = vpack.c.b16 %v1318, %v1317
        %v1346 = vpack.c.b16 %v1320, %v1319
        %v1347 = vpack.c.b16 %v1322, %v1321
        %v1348 = vpack.c.b16 %v1324, %v1323
        %v1349 = vpack.c.b16 %v1326, %v1325
        %v1350 = vpack.c.b16 %v1328, %v1327
        %v1351 = vpack.c.b16 %v1330, %v1329
        %v1352 = vpack.c.b16 %v1332, %v1331
        %v1353 = vpack.c.b16 %v1334, %v1333
        %v1354 = vpack.c.b16 %v1336, %v1335
        %v1355 = vpack.c.b16 %v1338, %v1337
        %v1356 = vpack.c.b16 %v1340, %v1339
        %v1359 = vunpack.c.l.b16 %v1291
        %v1360 = vunpack.c.l.b16 %v1292
        %v1361 = vpack.c.b16 %v1360, %v1359
        %vm1362 = vcmask 97280
        %v1364 = vsel %vm1362, %v1341, 0
        %v1367 = vsel %vm1362, %v1342, 0
        %v1370 = vsel %vm1362, %v1343, 0
        %v1373 = vsel %vm1362, %v1344, 0
        %v1376 = vsel %vm1362, %v1345, 0
        %v1379 = vsel %vm1362, %v1346, 0
        %v1382 = vsel %vm1362, %v1347, 0
        %v1385 = vsel %vm1362, %v1348, 0
        %v1388 = vsel %vm1362, %v1349, 0
        %v1391 = vsel %vm1362, %v1350, 0
        %v1394 = vsel %vm1362, %v1351, 0
        %v1397 = vsel %vm1362, %v1352, 0
        %v1400 = vsel %vm1362, %v1353, 0
        %v1403 = vsel %vm1362, %v1354, 0
        %v1406 = vsel %vm1362, %v1355, 0
        %v1409 = vsel %vm1362, %v1356, 0
        %vm1411 = vcmask 1045504
        %v1413 = vsel %vm1411, %v1361, 0
        %1415 = vmatprep.subr.bf16.mxu0 0
        %1416 = vmatpush1.bf16.msra.mxu0 0
        %1417 = vmatprep.subr.bf16.mxu0 0
        %1418 = vmatpush1.bf16.msra.mxu0 0
        %1419 = vmatprep.subr.bf16.mxu0 0
        %1420 = vmatpush1.bf16.msra.mxu0 0
        %1421 = vmatprep.subr.bf16.mxu0 0
        %1422 = vmatpush1.bf16.msra.mxu0 0
        %1423 = vmatprep.subr.bf16.mxu0 0
        %1424 = vmatpush1.bf16.msra.mxu0 0
        %1425 = vmatprep.subr.bf16.mxu0 0
        %1426 = vmatpush1.bf16.msra.mxu0 0
        %1427 = vmatprep.subr.bf16.mxu0 0
        %1428 = vmatpush1.bf16.msra.mxu0 0
        %1429 = vmatprep.subr.bf16.mxu0 0
        %1430 = vmatpush1.bf16.msra.mxu0 %v1413
        %1431 = vmatprep.subr.bf16.mxu0 0
        %1432 = vmatpush2.bf16.msra.mxu0 0
        %1433 = vmatprep.subr.bf16.mxu0 0
        %1434 = vmatpush2.bf16.msra.mxu0 0
        %1435 = vmatprep.subr.bf16.mxu0 0
        %1436 = vmatpush2.bf16.msra.mxu0 0
        %1437 = vmatprep.subr.bf16.mxu0 0
        %1438 = vmatpush2.bf16.msra.mxu0 0
        %1439 = vmatprep.subr.bf16.mxu0 0
        %1440 = vmatpush2.bf16.msra.mxu0 0
        %1441 = vmatprep.subr.bf16.mxu0 0
        %1442 = vmatpush2.bf16.msra.mxu0 0
        %1443 = vmatprep.subr.bf16.mxu0 0
        %1444 = vmatpush2.bf16.msra.mxu0 0
        %1445 = vmatprep.subr.bf16.mxu0 0
        %1446 = vmatpush2.bf16.msra.mxu0 0
        %1447 = vmatprep.mubr.bf16.mxu0 0
        %1448 = vmatmul.mubr.bf16.gmra.mxu0 %v1364
        %v1449 = vpop.f32.mrf.mxu0
        %v1450 = vadd.f32 0.0, %v1449
        %v1451 = vpop.f32.mrf.mxu0
        %v1452 = vpop.f32.mrf.mxu0
        %v1453 = vadd.f32 0.0, %v1452
        %v1454 = vpop.f32.mrf.mxu0
        %1455 = vmatprep.mubr.bf16.mxu0 0
        %1456 = vmatmul.mubr.bf16.gmra.mxu0 %v1367
        %v1457 = vpop.f32.mrf.mxu0
        %v1458 = vadd.f32 0.0, %v1457
        %v1459 = vpop.f32.mrf.mxu0
        %v1460 = vpop.f32.mrf.mxu0
        %v1461 = vadd.f32 0.0, %v1460
        %v1462 = vpop.f32.mrf.mxu0
        %1463 = vmatprep.mubr.bf16.mxu0 0
        %1464 = vmatmul.mubr.bf16.gmra.mxu0 %v1370
        %v1465 = vpop.f32.mrf.mxu0
        %v1466 = vadd.f32 0.0, %v1465
        %v1467 = vpop.f32.mrf.mxu0
        %v1468 = vpop.f32.mrf.mxu0
        %v1469 = vadd.f32 0.0, %v1468
        %v1470 = vpop.f32.mrf.mxu0
        %1471 = vmatprep.mubr.bf16.mxu0 0
        %1472 = vmatmul.mubr.bf16.gmra.mxu0 %v1373
        %v1473 = vpop.f32.mrf.mxu0
        %v1474 = vadd.f32 0.0, %v1473
        %v1475 = vpop.f32.mrf.mxu0
        %v1476 = vpop.f32.mrf.mxu0
        %v1477 = vadd.f32 0.0, %v1476
        %v1478 = vpop.f32.mrf.mxu0
        %1479 = vmatprep.mubr.bf16.mxu0 0
        %1480 = vmatmul.mubr.bf16.gmra.mxu0 %v1376
        %v1481 = vpop.f32.mrf.mxu0
        %v1482 = vadd.f32 0.0, %v1481
        %v1483 = vpop.f32.mrf.mxu0
        %v1484 = vpop.f32.mrf.mxu0
        %v1485 = vadd.f32 0.0, %v1484
        %v1486 = vpop.f32.mrf.mxu0
        %1487 = vmatprep.mubr.bf16.mxu0 0
        %1488 = vmatmul.mubr.bf16.gmra.mxu0 %v1379
        %v1489 = vpop.f32.mrf.mxu0
        %v1490 = vadd.f32 0.0, %v1489
        %v1491 = vpop.f32.mrf.mxu0
        %v1492 = vpop.f32.mrf.mxu0
        %v1493 = vadd.f32 0.0, %v1492
        %v1494 = vpop.f32.mrf.mxu0
        %1495 = vmatprep.mubr.bf16.mxu0 0
        %1496 = vmatmul.mubr.bf16.gmra.mxu0 %v1382
        %v1497 = vpop.f32.mrf.mxu0
        %v1498 = vadd.f32 0.0, %v1497
        %v1499 = vpop.f32.mrf.mxu0
        %v1500 = vpop.f32.mrf.mxu0
        %v1501 = vadd.f32 0.0, %v1500
        %v1502 = vpop.f32.mrf.mxu0
        %1503 = vmatprep.mubr.bf16.mxu0 0
        %1504 = vmatmul.mubr.bf16.gmra.mxu0 %v1385
        %v1505 = vpop.f32.mrf.mxu0
        %v1506 = vadd.f32 0.0, %v1505
        %v1507 = vpop.f32.mrf.mxu0
        %v1508 = vpop.f32.mrf.mxu0
        %v1509 = vadd.f32 0.0, %v1508
        %v1510 = vpop.f32.mrf.mxu0
        %1511 = vmatprep.mubr.bf16.mxu0 0
        %1512 = vmatmul.mubr.bf16.gmra.mxu0 %v1388
        %v1513 = vpop.f32.mrf.mxu0
        %v1514 = vadd.f32 0.0, %v1513
        %v1515 = vpop.f32.mrf.mxu0
        %v1516 = vpop.f32.mrf.mxu0
        %v1517 = vadd.f32 0.0, %v1516
        %v1518 = vpop.f32.mrf.mxu0
        %1519 = vmatprep.mubr.bf16.mxu0 0
        %1520 = vmatmul.mubr.bf16.gmra.mxu0 %v1391
        %v1521 = vpop.f32.mrf.mxu0
        %v1522 = vadd.f32 0.0, %v1521
        %v1523 = vpop.f32.mrf.mxu0
        %v1524 = vpop.f32.mrf.mxu0
        %v1525 = vadd.f32 0.0, %v1524
        %v1526 = vpop.f32.mrf.mxu0
        %1527 = vmatprep.mubr.bf16.mxu0 0
        %1528 = vmatmul.mubr.bf16.gmra.mxu0 %v1394
        %v1529 = vpop.f32.mrf.mxu0
        %v1530 = vadd.f32 0.0, %v1529
        %v1531 = vpop.f32.mrf.mxu0
        %v1532 = vpop.f32.mrf.mxu0
        %v1533 = vadd.f32 0.0, %v1532
        %v1534 = vpop.f32.mrf.mxu0
        %1535 = vmatprep.mubr.bf16.mxu0 0
        %1536 = vmatmul.mubr.bf16.gmra.mxu0 %v1397
        %v1537 = vpop.f32.mrf.mxu0
        %v1538 = vadd.f32 0.0, %v1537
        %v1539 = vpop.f32.mrf.mxu0
        %v1540 = vpop.f32.mrf.mxu0
        %v1541 = vadd.f32 0.0, %v1540
        %v1542 = vpop.f32.mrf.mxu0
        %1543 = vmatprep.mubr.bf16.mxu0 0
        %1544 = vmatmul.mubr.bf16.gmra.mxu0 %v1400
        %v1545 = vpop.f32.mrf.mxu0
        %v1546 = vadd.f32 0.0, %v1545
        %v1547 = vpop.f32.mrf.mxu0
        %v1548 = vpop.f32.mrf.mxu0
        %v1549 = vadd.f32 0.0, %v1548
        %v1550 = vpop.f32.mrf.mxu0
        %1551 = vmatprep.mubr.bf16.mxu0 0
        %1552 = vmatmul.mubr.bf16.gmra.mxu0 %v1403
        %v1553 = vpop.f32.mrf.mxu0
        %v1554 = vadd.f32 0.0, %v1553
        %v1555 = vpop.f32.mrf.mxu0
        %v1556 = vpop.f32.mrf.mxu0
        %v1557 = vadd.f32 0.0, %v1556
        %v1558 = vpop.f32.mrf.mxu0
        %1559 = vmatprep.mubr.bf16.mxu0 0
        %1560 = vmatmul.mubr.bf16.gmra.mxu0 %v1406
        %v1561 = vpop.f32.mrf.mxu0
        %v1562 = vadd.f32 0.0, %v1561
        %v1563 = vpop.f32.mrf.mxu0
        %v1564 = vpop.f32.mrf.mxu0
        %v1565 = vadd.f32 0.0, %v1564
        %v1566 = vpop.f32.mrf.mxu0
        %1567 = vmatprep.mubr.bf16.mxu0 0
        %1568 = vmatmul.mubr.bf16.gmra.mxu0 %v1409
        %v1569 = vpop.f32.mrf.mxu0
        %v1570 = vadd.f32 0.0, %v1569
        %v1571 = vpop.f32.mrf.mxu0
        %v1572 = vpop.f32.mrf.mxu0
        %v1573 = vadd.f32 0.0, %v1572
        %v1574 = vpop.f32.mrf.mxu0
        %1575 = vdwg.mxu0
        %v1592 = vunpack.c.l.b16 %v537
        %v1593 = vunpack.c.l.b16 %v539
        %v1594 = vunpack.c.l.b16 %v541
        %v1595 = vunpack.c.l.b16 %v543
        %v1596 = vunpack.c.l.b16 %v545
        %v1597 = vunpack.c.l.b16 %v547
        %v1598 = vunpack.c.l.b16 %v549
        %v1599 = vunpack.c.l.b16 %v551
        %v1600 = vunpack.c.l.b16 %v785
        %v1601 = vunpack.c.l.b16 %v787
        %v1602 = vunpack.c.l.b16 %v789
        %v1603 = vunpack.c.l.b16 %v791
        %v1604 = vunpack.c.l.b16 %v793
        %v1605 = vunpack.c.l.b16 %v795
        %v1606 = vunpack.c.l.b16 %v797
        %v1607 = vunpack.c.l.b16 %v799
        %v1608 = vpack.c.b16 %v1593, %v1592
        %v1609 = vpack.c.b16 %v1595, %v1594
        %v1610 = vpack.c.b16 %v1597, %v1596
        %v1611 = vpack.c.b16 %v1599, %v1598
        %v1612 = vpack.c.b16 %v1601, %v1600
        %v1613 = vpack.c.b16 %v1603, %v1602
        %v1614 = vpack.c.b16 %v1605, %v1604
        %v1615 = vpack.c.b16 %v1607, %v1606
        %v1618 = vunpack.c.l.b16 %v904
        %v1619 = vunpack.c.l.b16 %v905
        %v1620 = vpack.c.b16 %v1619, %v1618
        %v1622 = vsel %vm1362, %v1608, 0
        %v1625 = vsel %vm1362, %v1609, 0
        %v1628 = vsel %vm1362, %v1610, 0
        %v1631 = vsel %vm1362, %v1611, 0
        %v1634 = vsel %vm1362, %v1612, 0
        %v1637 = vsel %vm1362, %v1613, 0
        %v1640 = vsel %vm1362, %v1614, 0
        %v1643 = vsel %vm1362, %v1615, 0
        %v1646 = vsel %vm1411, %v1620, 0
        %1648 = vmatprep.subr.bf16.mxu0 0
        %1649 = vmatpush1.bf16.msra.mxu0 0
        %1650 = vmatprep.subr.bf16.mxu0 0
        %1651 = vmatpush1.bf16.msra.mxu0 0
        %1652 = vmatprep.subr.bf16.mxu0 0
        %1653 = vmatpush1.bf16.msra.mxu0 0
        %1654 = vmatprep.subr.bf16.mxu0 0
        %1655 = vmatpush1.bf16.msra.mxu0 0
        %1656 = vmatprep.subr.bf16.mxu0 0
        %1657 = vmatpush1.bf16.msra.mxu0 0
        %1658 = vmatprep.subr.bf16.mxu0 0
        %1659 = vmatpush1.bf16.msra.mxu0 0
        %1660 = vmatprep.subr.bf16.mxu0 0
        %1661 = vmatpush1.bf16.msra.mxu0 0
        %1662 = vmatprep.subr.bf16.mxu0 0
        %1663 = vmatpush1.bf16.msra.mxu0 %v1646
        %1664 = vmatprep.subr.bf16.mxu0 0
        %1665 = vmatpush2.bf16.msra.mxu0 0
        %1666 = vmatprep.subr.bf16.mxu0 0
        %1667 = vmatpush2.bf16.msra.mxu0 0
        %1668 = vmatprep.subr.bf16.mxu0 0
        %1669 = vmatpush2.bf16.msra.mxu0 0
        %1670 = vmatprep.subr.bf16.mxu0 0
        %1671 = vmatpush2.bf16.msra.mxu0 0
        %1672 = vmatprep.subr.bf16.mxu0 0
        %1673 = vmatpush2.bf16.msra.mxu0 0
        %1674 = vmatprep.subr.bf16.mxu0 0
        %1675 = vmatpush2.bf16.msra.mxu0 0
        %1676 = vmatprep.subr.bf16.mxu0 0
        %1677 = vmatpush2.bf16.msra.mxu0 0
        %1678 = vmatprep.subr.bf16.mxu0 0
        %1679 = vmatpush2.bf16.msra.mxu0 0
        %1680 = vmatprep.mubr.bf16.mxu0 0
        %1681 = vmatmul.mubr.bf16.gmra.mxu0 %v1622
        %v1682 = vpop.f32.mrf.mxu0
        %v1683 = vadd.f32 %v1450, %v1682
        %v1684 = vpop.f32.mrf.mxu0
        %v1685 = vpop.f32.mrf.mxu0
        %v1686 = vadd.f32 %v1453, %v1685
        %v1687 = vpop.f32.mrf.mxu0
        %1688 = vmatprep.mubr.bf16.mxu0 0
        %1689 = vmatmul.mubr.bf16.gmra.mxu0 %v1625
        %v1690 = vpop.f32.mrf.mxu0
        %v1691 = vadd.f32 %v1458, %v1690
        %v1692 = vpop.f32.mrf.mxu0
        %v1693 = vpop.f32.mrf.mxu0
        %v1694 = vadd.f32 %v1461, %v1693
        %v1695 = vpop.f32.mrf.mxu0
        %1696 = vmatprep.mubr.bf16.mxu0 0
        %1697 = vmatmul.mubr.bf16.gmra.mxu0 %v1628
        %v1698 = vpop.f32.mrf.mxu0
        %v1699 = vadd.f32 %v1466, %v1698
        %v1700 = vpop.f32.mrf.mxu0
        %v1701 = vpop.f32.mrf.mxu0
        %v1702 = vadd.f32 %v1469, %v1701
        %v1703 = vpop.f32.mrf.mxu0
        %1704 = vmatprep.mubr.bf16.mxu0 0
        %1705 = vmatmul.mubr.bf16.gmra.mxu0 %v1631
        %v1706 = vpop.f32.mrf.mxu0
        %v1707 = vadd.f32 %v1474, %v1706
        %v1708 = vpop.f32.mrf.mxu0
        %v1709 = vpop.f32.mrf.mxu0
        %v1710 = vadd.f32 %v1477, %v1709
        %v1711 = vpop.f32.mrf.mxu0
        %1712 = vmatprep.mubr.bf16.mxu0 0
        %1713 = vmatmul.mubr.bf16.gmra.mxu0 %v1364
        %v1714 = vpop.f32.mrf.mxu0
        %v1715 = vadd.f32 %v1482, %v1714
        %v1716 = vpop.f32.mrf.mxu0
        %v1717 = vpop.f32.mrf.mxu0
        %v1718 = vadd.f32 %v1485, %v1717
        %v1719 = vpop.f32.mrf.mxu0
        %1720 = vmatprep.mubr.bf16.mxu0 0
        %1721 = vmatmul.mubr.bf16.gmra.mxu0 %v1367
        %v1722 = vpop.f32.mrf.mxu0
        %v1723 = vadd.f32 %v1490, %v1722
        %v1724 = vpop.f32.mrf.mxu0
        %v1725 = vpop.f32.mrf.mxu0
        %v1726 = vadd.f32 %v1493, %v1725
        %v1727 = vpop.f32.mrf.mxu0
        %1728 = vmatprep.mubr.bf16.mxu0 0
        %1729 = vmatmul.mubr.bf16.gmra.mxu0 %v1370
        %v1730 = vpop.f32.mrf.mxu0
        %v1731 = vadd.f32 %v1498, %v1730
        %v1732 = vpop.f32.mrf.mxu0
        %v1733 = vpop.f32.mrf.mxu0
        %v1734 = vadd.f32 %v1501, %v1733
        %v1735 = vpop.f32.mrf.mxu0
        %1736 = vmatprep.mubr.bf16.mxu0 0
        %1737 = vmatmul.mubr.bf16.gmra.mxu0 %v1373
        %v1738 = vpop.f32.mrf.mxu0
        %v1739 = vadd.f32 %v1506, %v1738
        %v1740 = vpop.f32.mrf.mxu0
        %v1741 = vpop.f32.mrf.mxu0
        %v1742 = vadd.f32 %v1509, %v1741
        %v1743 = vpop.f32.mrf.mxu0
        %1744 = vmatprep.mubr.bf16.mxu0 0
        %1745 = vmatmul.mubr.bf16.gmra.mxu0 %v1634
        %v1746 = vpop.f32.mrf.mxu0
        %v1747 = vadd.f32 %v1514, %v1746
        %v1748 = vpop.f32.mrf.mxu0
        %v1749 = vpop.f32.mrf.mxu0
        %v1750 = vadd.f32 %v1517, %v1749
        %v1751 = vpop.f32.mrf.mxu0
        %1752 = vmatprep.mubr.bf16.mxu0 0
        %1753 = vmatmul.mubr.bf16.gmra.mxu0 %v1637
        %v1754 = vpop.f32.mrf.mxu0
        %v1755 = vadd.f32 %v1522, %v1754
        %v1756 = vpop.f32.mrf.mxu0
        %v1757 = vpop.f32.mrf.mxu0
        %v1758 = vadd.f32 %v1525, %v1757
        %v1759 = vpop.f32.mrf.mxu0
        %1760 = vmatprep.mubr.bf16.mxu0 0
        %1761 = vmatmul.mubr.bf16.gmra.mxu0 %v1640
        %v1762 = vpop.f32.mrf.mxu0
        %v1763 = vadd.f32 %v1530, %v1762
        %v1764 = vpop.f32.mrf.mxu0
        %v1765 = vpop.f32.mrf.mxu0
        %v1766 = vadd.f32 %v1533, %v1765
        %v1767 = vpop.f32.mrf.mxu0
        %1768 = vmatprep.mubr.bf16.mxu0 0
        %1769 = vmatmul.mubr.bf16.gmra.mxu0 %v1643
        %v1770 = vpop.f32.mrf.mxu0
        %v1771 = vadd.f32 %v1538, %v1770
        %v1772 = vpop.f32.mrf.mxu0
        %v1773 = vpop.f32.mrf.mxu0
        %v1774 = vadd.f32 %v1541, %v1773
        %v1775 = vpop.f32.mrf.mxu0
        %1776 = vmatprep.mubr.bf16.mxu0 0
        %1777 = vmatmul.mubr.bf16.gmra.mxu0 %v1388
        %v1778 = vpop.f32.mrf.mxu0
        %v1779 = vadd.f32 %v1546, %v1778
        %v1780 = vpop.f32.mrf.mxu0
        %v1781 = vpop.f32.mrf.mxu0
        %v1782 = vadd.f32 %v1549, %v1781
        %v1783 = vpop.f32.mrf.mxu0
        %1784 = vmatprep.mubr.bf16.mxu0 0
        %1785 = vmatmul.mubr.bf16.gmra.mxu0 %v1391
        %v1786 = vpop.f32.mrf.mxu0
        %v1787 = vadd.f32 %v1554, %v1786
        %v1788 = vpop.f32.mrf.mxu0
        %v1789 = vpop.f32.mrf.mxu0
        %v1790 = vadd.f32 %v1557, %v1789
        %v1791 = vpop.f32.mrf.mxu0
        %1792 = vmatprep.mubr.bf16.mxu0 0
        %1793 = vmatmul.mubr.bf16.gmra.mxu0 %v1394
        %v1794 = vpop.f32.mrf.mxu0
        %v1795 = vadd.f32 %v1562, %v1794
        %v1796 = vpop.f32.mrf.mxu0
        %v1797 = vpop.f32.mrf.mxu0
        %v1798 = vadd.f32 %v1565, %v1797
        %v1799 = vpop.f32.mrf.mxu0
        %1800 = vmatprep.mubr.bf16.mxu0 0
        %1801 = vmatmul.mubr.bf16.gmra.mxu0 %v1397
        %v1802 = vpop.f32.mrf.mxu0
        %v1803 = vadd.f32 %v1570, %v1802
        %v1804 = vpop.f32.mrf.mxu0
        %v1805 = vpop.f32.mrf.mxu0
        %v1806 = vadd.f32 %v1573, %v1805
        %v1807 = vpop.f32.mrf.mxu0
        %1808 = vdwg.mxu0
        %v1809 = vmax.bf16 %v296, 0
        %v1810 = vmax.bf16 %v297, 0
        %v1811 = vmax.bf16 %v298, 0
        %v1812 = vmax.bf16 %v299, 0
        %v1813 = vmax.bf16 %v300, 0
        %v1814 = vmax.bf16 %v301, 0
        %v1815 = vmax.bf16 %v302, 0
        %v1816 = vmax.bf16 %v303, 0
        %v1817 = vmax.bf16 %v330, 0
        %v1818 = vmax.bf16 %v331, 0
        %v1819 = vmax.bf16 %v332, 0
        %v1820 = vmax.bf16 %v333, 0
        %v1821 = vmax.bf16 %v334, 0
        %v1822 = vmax.bf16 %v335, 0
        %v1823 = vmax.bf16 %v336, 0
        %v1824 = vmax.bf16 %v337, 0
        %v1825 = vmax.bf16 %v364, 0
        %v1826 = vmax.bf16 %v365, 0
        %v1827 = vmax.bf16 %v366, 0
        %v1828 = vmax.bf16 %v367, 0
        %v1829 = vmax.bf16 %v368, 0
        %v1830 = vmax.bf16 %v369, 0
        %v1831 = vmax.bf16 %v370, 0
        %v1832 = vmax.bf16 %v371, 0
        %v1849 = vunpack.c.l.b16 %v552
        %v1850 = vunpack.c.l.b16 %v1809
        %v1851 = vunpack.c.l.b16 %v553
        %v1852 = vunpack.c.l.b16 %v1810
        %v1853 = vunpack.c.l.b16 %v554
        %v1854 = vunpack.c.l.b16 %v1811
        %v1855 = vunpack.c.l.b16 %v555
        %v1856 = vunpack.c.l.b16 %v1812
        %v1857 = vunpack.c.l.b16 %v556
        %v1858 = vunpack.c.l.b16 %v1813
        %v1859 = vunpack.c.l.b16 %v557
        %v1860 = vunpack.c.l.b16 %v1814
        %v1861 = vunpack.c.l.b16 %v558
        %v1862 = vunpack.c.l.b16 %v1815
        %v1863 = vunpack.c.l.b16 %v559
        %v1864 = vunpack.c.l.b16 %v1816
        %v1865 = vpack.c.b16 %v1850, %v1849
        %v1866 = vpack.c.b16 %v1852, %v1851
        %v1867 = vpack.c.b16 %v1854, %v1853
        %v1868 = vpack.c.b16 %v1856, %v1855
        %v1869 = vpack.c.b16 %v1858, %v1857
        %v1870 = vpack.c.b16 %v1860, %v1859
        %v1871 = vpack.c.b16 %v1862, %v1861
        %v1872 = vpack.c.b16 %v1864, %v1863
        %v1881 = vunpack.c.l.b16 %v1817
        %v1882 = vunpack.c.l.b16 %v1818
        %v1883 = vunpack.c.l.b16 %v1819
        %v1884 = vunpack.c.l.b16 %v1820
        %v1885 = vunpack.c.l.b16 %v1821
        %v1886 = vunpack.c.l.b16 %v1822
        %v1887 = vunpack.c.l.b16 %v1823
        %v1888 = vunpack.c.l.b16 %v1824
        %v1889 = vpack.c.b16 %v1881, %v584
        %v1890 = vpack.c.b16 %v1882, %v585
        %v1891 = vpack.c.b16 %v1883, %v586
        %v1892 = vpack.c.b16 %v1884, %v587
        %v1893 = vpack.c.b16 %v1885, %v588
        %v1894 = vpack.c.b16 %v1886, %v589
        %v1895 = vpack.c.b16 %v1887, %v590
        %v1896 = vpack.c.b16 %v1888, %v591
        %1897 = vrot.lane.b32.xlu0 %v1889, 4
        %v1898 = vpop.permute.xlu0 %1897
        %1899 = vrot.lane.b32.xlu0 %v1890, 4
        %v1900 = vpop.permute.xlu0 %1899
        %1901 = vrot.lane.b32.xlu0 %v1891, 4
        %v1902 = vpop.permute.xlu0 %1901
        %1903 = vrot.lane.b32.xlu0 %v1892, 4
        %v1904 = vpop.permute.xlu0 %1903
        %1905 = vrot.lane.b32.xlu0 %v1893, 4
        %v1906 = vpop.permute.xlu0 %1905
        %1907 = vrot.lane.b32.xlu0 %v1894, 4
        %v1908 = vpop.permute.xlu0 %1907
        %1909 = vrot.lane.b32.xlu0 %v1895, 4
        %v1910 = vpop.permute.xlu0 %1909
        %1911 = vrot.lane.b32.xlu0 %v1896, 4
        %v1912 = vpop.permute.xlu0 %1911
        %v1921 = vunpack.c.l.b16 %v1825
        %v1922 = vunpack.c.l.b16 %v1826
        %v1923 = vunpack.c.l.b16 %v1827
        %v1924 = vunpack.c.l.b16 %v1828
        %v1925 = vunpack.c.l.b16 %v1829
        %v1926 = vunpack.c.l.b16 %v1830
        %v1927 = vunpack.c.l.b16 %v1831
        %v1928 = vunpack.c.l.b16 %v1832
        %v1929 = vpack.c.b16 %v1921, %v624
        %v1930 = vpack.c.b16 %v1922, %v625
        %v1931 = vpack.c.b16 %v1923, %v626
        %v1932 = vpack.c.b16 %v1924, %v627
        %v1933 = vpack.c.b16 %v1925, %v628
        %v1934 = vpack.c.b16 %v1926, %v629
        %v1935 = vpack.c.b16 %v1927, %v630
        %v1936 = vpack.c.b16 %v1928, %v631
        %1937 = vrot.lane.b32.xlu0 %v1929, 8
        %v1938 = vpop.permute.xlu0 %1937
        %1939 = vrot.lane.b32.xlu0 %v1930, 8
        %v1940 = vpop.permute.xlu0 %1939
        %1941 = vrot.lane.b32.xlu0 %v1931, 8
        %v1942 = vpop.permute.xlu0 %1941
        %1943 = vrot.lane.b32.xlu0 %v1932, 8
        %v1944 = vpop.permute.xlu0 %1943
        %1945 = vrot.lane.b32.xlu0 %v1933, 8
        %v1946 = vpop.permute.xlu0 %1945
        %1947 = vrot.lane.b32.xlu0 %v1934, 8
        %v1948 = vpop.permute.xlu0 %1947
        %1949 = vrot.lane.b32.xlu0 %v1935, 8
        %v1950 = vpop.permute.xlu0 %1949
        %1951 = vrot.lane.b32.xlu0 %v1936, 8
        %v1952 = vpop.permute.xlu0 %1951
        %v1955 = vsel %vm510, %v1865, %v1898
        %v1958 = vsel %vm510, %v1866, %v1900
        %v1961 = vsel %vm510, %v1867, %v1902
        %v1964 = vsel %vm510, %v1868, %v1904
        %v1967 = vsel %vm510, %v1869, %v1906
        %v1970 = vsel %vm510, %v1870, %v1908
        %v1973 = vsel %vm510, %v1871, %v1910
        %v1976 = vsel %vm510, %v1872, %v1912
        %v1978 = vsel %vm535, %v1955, %v1938
        %v1980 = vsel %vm535, %v1958, %v1940
        %v1982 = vsel %vm535, %v1961, %v1942
        %v1984 = vsel %vm535, %v1964, %v1944
        %v1986 = vsel %vm535, %v1967, %v1946
        %v1988 = vsel %vm535, %v1970, %v1948
        %v1990 = vsel %vm535, %v1973, %v1950
        %v1992 = vsel %vm535, %v1976, %v1952
        %v1993 = vmax.bf16 %v398, 0
        %v1994 = vmax.bf16 %v399, 0
        %v1995 = vmax.bf16 %v400, 0
        %v1996 = vmax.bf16 %v401, 0
        %v1997 = vmax.bf16 %v402, 0
        %v1998 = vmax.bf16 %v403, 0
        %v1999 = vmax.bf16 %v404, 0
        %v2000 = vmax.bf16 %v405, 0
        %2001 = vrot.lane.b32.xlu0 %v1929, 4
        %v2002 = vpop.permute.xlu0 %2001
        %2003 = vrot.lane.b32.xlu0 %v1930, 4
        %v2004 = vpop.permute.xlu0 %2003
        %2005 = vrot.lane.b32.xlu0 %v1931, 4
        %v2006 = vpop.permute.xlu0 %2005
        %2007 = vrot.lane.b32.xlu0 %v1932, 4
        %v2008 = vpop.permute.xlu0 %2007
        %2009 = vrot.lane.b32.xlu0 %v1933, 4
        %v2010 = vpop.permute.xlu0 %2009
        %2011 = vrot.lane.b32.xlu0 %v1934, 4
        %v2012 = vpop.permute.xlu0 %2011
        %2013 = vrot.lane.b32.xlu0 %v1935, 4
        %v2014 = vpop.permute.xlu0 %2013
        %2015 = vrot.lane.b32.xlu0 %v1936, 4
        %v2016 = vpop.permute.xlu0 %2015
        %v2025 = vunpack.c.l.b16 %v1993
        %v2026 = vunpack.c.l.b16 %v1994
        %v2027 = vunpack.c.l.b16 %v1995
        %v2028 = vunpack.c.l.b16 %v1996
        %v2029 = vunpack.c.l.b16 %v1997
        %v2030 = vunpack.c.l.b16 %v1998
        %v2031 = vunpack.c.l.b16 %v1999
        %v2032 = vunpack.c.l.b16 %v2000
        %v2033 = vpack.c.b16 %v2025, %v832
        %v2034 = vpack.c.b16 %v2026, %v833
        %v2035 = vpack.c.b16 %v2027, %v834
        %v2036 = vpack.c.b16 %v2028, %v835
        %v2037 = vpack.c.b16 %v2029, %v836
        %v2038 = vpack.c.b16 %v2030, %v837
        %v2039 = vpack.c.b16 %v2031, %v838
        %v2040 = vpack.c.b16 %v2032, %v839
        %2041 = vrot.lane.b32.xlu0 %v2033, 8
        %v2042 = vpop.permute.xlu0 %2041
        %2043 = vrot.lane.b32.xlu0 %v2034, 8
        %v2044 = vpop.permute.xlu0 %2043
        %2045 = vrot.lane.b32.xlu0 %v2035, 8
        %v2046 = vpop.permute.xlu0 %2045
        %2047 = vrot.lane.b32.xlu0 %v2036, 8
        %v2048 = vpop.permute.xlu0 %2047
        %2049 = vrot.lane.b32.xlu0 %v2037, 8
        %v2050 = vpop.permute.xlu0 %2049
        %2051 = vrot.lane.b32.xlu0 %v2038, 8
        %v2052 = vpop.permute.xlu0 %2051
        %2053 = vrot.lane.b32.xlu0 %v2039, 8
        %v2054 = vpop.permute.xlu0 %2053
        %2055 = vrot.lane.b32.xlu0 %v2040, 8
        %v2056 = vpop.permute.xlu0 %2055
        %v2059 = vsel %vm510, %v1889, %v2002
        %v2062 = vsel %vm510, %v1890, %v2004
        %v2065 = vsel %vm510, %v1891, %v2006
        %v2068 = vsel %vm510, %v1892, %v2008
        %v2071 = vsel %vm510, %v1893, %v2010
        %v2074 = vsel %vm510, %v1894, %v2012
        %v2077 = vsel %vm510, %v1895, %v2014
        %v2080 = vsel %vm510, %v1896, %v2016
        %v2082 = vsel %vm535, %v2059, %v2042
        %v2084 = vsel %vm535, %v2062, %v2044
        %v2086 = vsel %vm535, %v2065, %v2046
        %v2088 = vsel %vm535, %v2068, %v2048
        %v2090 = vsel %vm535, %v2071, %v2050
        %v2092 = vsel %vm535, %v2074, %v2052
        %v2094 = vsel %vm535, %v2077, %v2054
        %v2096 = vsel %vm535, %v2080, %v2056
        %v2129 = vunpack.c.l.b16 %v1075
        %v2130 = vunpack.c.h.b16 %v1075
        %v2131 = vunpack.c.l.b16 %v1077
        %v2132 = vunpack.c.h.b16 %v1077
        %v2133 = vunpack.c.l.b16 %v1079
        %v2134 = vunpack.c.h.b16 %v1079
        %v2135 = vunpack.c.l.b16 %v1081
        %v2136 = vunpack.c.h.b16 %v1081
        %v2137 = vunpack.c.l.b16 %v1083
        %v2138 = vunpack.c.h.b16 %v1083
        %v2139 = vunpack.c.l.b16 %v1085
        %v2140 = vunpack.c.h.b16 %v1085
        %v2141 = vunpack.c.l.b16 %v1087
        %v2142 = vunpack.c.h.b16 %v1087
        %v2143 = vunpack.c.l.b16 %v1089
        %v2144 = vunpack.c.h.b16 %v1089
        %v2145 = vunpack.c.l.b16 %v1978
        %v2146 = vunpack.c.h.b16 %v1978
        %v2147 = vunpack.c.l.b16 %v1980
        %v2148 = vunpack.c.h.b16 %v1980
        %v2149 = vunpack.c.l.b16 %v1982
        %v2150 = vunpack.c.h.b16 %v1982
        %v2151 = vunpack.c.l.b16 %v1984
        %v2152 = vunpack.c.h.b16 %v1984
        %v2153 = vunpack.c.l.b16 %v1986
        %v2154 = vunpack.c.h.b16 %v1986
        %v2155 = vunpack.c.l.b16 %v1988
        %v2156 = vunpack.c.h.b16 %v1988
        %v2157 = vunpack.c.l.b16 %v1990
        %v2158 = vunpack.c.h.b16 %v1990
        %v2159 = vunpack.c.l.b16 %v1992
        %v2160 = vunpack.c.h.b16 %v1992
        %v2161 = vunpack.c.l.b16 %v1179
        %v2162 = vunpack.c.h.b16 %v1179
        %v2163 = vunpack.c.l.b16 %v1181
        %v2164 = vunpack.c.h.b16 %v1181
        %v2165 = vunpack.c.l.b16 %v1183
        %v2166 = vunpack.c.h.b16 %v1183
        %v2167 = vunpack.c.l.b16 %v1185
        %v2168 = vunpack.c.h.b16 %v1185
        %v2169 = vunpack.c.l.b16 %v1187
        %v2170 = vunpack.c.h.b16 %v1187
        %v2171 = vunpack.c.l.b16 %v1189
        %v2172 = vunpack.c.h.b16 %v1189
        %v2173 = vunpack.c.l.b16 %v1191
        %v2174 = vunpack.c.h.b16 %v1191
        %v2175 = vunpack.c.l.b16 %v1193
        %v2176 = vunpack.c.h.b16 %v1193
        %v2177 = vunpack.c.l.b16 %v2082
        %v2178 = vunpack.c.h.b16 %v2082
        %v2179 = vunpack.c.l.b16 %v2084
        %v2180 = vunpack.c.h.b16 %v2084
        %v2181 = vunpack.c.l.b16 %v2086
        %v2182 = vunpack.c.h.b16 %v2086
        %v2183 = vunpack.c.l.b16 %v2088
        %v2184 = vunpack.c.h.b16 %v2088
        %v2185 = vunpack.c.l.b16 %v2090
        %v2186 = vunpack.c.h.b16 %v2090
        %v2187 = vunpack.c.l.b16 %v2092
        %v2188 = vunpack.c.h.b16 %v2092
        %v2189 = vunpack.c.l.b16 %v2094
        %v2190 = vunpack.c.h.b16 %v2094
        %v2191 = vunpack.c.l.b16 %v2096
        %v2192 = vunpack.c.h.b16 %v2096
        %v2193 = vpack.c.b16 %v2129, %v2129
        %v2194 = vpack.c.b16 %v2130, %v2130
        %v2195 = vpack.c.b16 %v2131, %v2131
        %v2196 = vpack.c.b16 %v2132, %v2132
        %v2197 = vpack.c.b16 %v2133, %v2133
        %v2198 = vpack.c.b16 %v2134, %v2134
        %v2199 = vpack.c.b16 %v2135, %v2135
        %v2200 = vpack.c.b16 %v2136, %v2136
        %v2201 = vpack.c.b16 %v2137, %v2137
        %v2202 = vpack.c.b16 %v2138, %v2138
        %v2203 = vpack.c.b16 %v2139, %v2139
        %v2204 = vpack.c.b16 %v2140, %v2140
        %v2205 = vpack.c.b16 %v2141, %v2141
        %v2206 = vpack.c.b16 %v2142, %v2142
        %v2207 = vpack.c.b16 %v2143, %v2143
        %v2208 = vpack.c.b16 %v2144, %v2144
        %v2209 = vpack.c.b16 %v2145, %v2145
        %v2210 = vpack.c.b16 %v2146, %v2146
        %v2211 = vpack.c.b16 %v2147, %v2147
        %v2212 = vpack.c.b16 %v2148, %v2148
        %v2213 = vpack.c.b16 %v2149, %v2149
        %v2214 = vpack.c.b16 %v2150, %v2150
        %v2215 = vpack.c.b16 %v2151, %v2151
        %v2216 = vpack.c.b16 %v2152, %v2152
        %v2217 = vpack.c.b16 %v2153, %v2153
        %v2218 = vpack.c.b16 %v2154, %v2154
        %v2219 = vpack.c.b16 %v2155, %v2155
        %v2220 = vpack.c.b16 %v2156, %v2156
        %v2221 = vpack.c.b16 %v2157, %v2157
        %v2222 = vpack.c.b16 %v2158, %v2158
        %v2223 = vpack.c.b16 %v2159, %v2159
        %v2224 = vpack.c.b16 %v2160, %v2160
        %v2225 = vpack.c.b16 %v2161, %v2161
        %v2226 = vpack.c.b16 %v2162, %v2162
        %v2227 = vpack.c.b16 %v2163, %v2163
        %v2228 = vpack.c.b16 %v2164, %v2164
        %v2229 = vpack.c.b16 %v2165, %v2165
        %v2230 = vpack.c.b16 %v2166, %v2166
        %v2231 = vpack.c.b16 %v2167, %v2167
        %v2232 = vpack.c.b16 %v2168, %v2168
        %v2233 = vpack.c.b16 %v2169, %v2169
        %v2234 = vpack.c.b16 %v2170, %v2170
        %v2235 = vpack.c.b16 %v2171, %v2171
        %v2236 = vpack.c.b16 %v2172, %v2172
        %v2237 = vpack.c.b16 %v2173, %v2173
        %v2238 = vpack.c.b16 %v2174, %v2174
        %v2239 = vpack.c.b16 %v2175, %v2175
        %v2240 = vpack.c.b16 %v2176, %v2176
        %v2241 = vpack.c.b16 %v2177, %v2177
        %v2242 = vpack.c.b16 %v2178, %v2178
        %v2243 = vpack.c.b16 %v2179, %v2179
        %v2244 = vpack.c.b16 %v2180, %v2180
        %v2245 = vpack.c.b16 %v2181, %v2181
        %v2246 = vpack.c.b16 %v2182, %v2182
        %v2247 = vpack.c.b16 %v2183, %v2183
        %v2248 = vpack.c.b16 %v2184, %v2184
        %v2249 = vpack.c.b16 %v2185, %v2185
        %v2250 = vpack.c.b16 %v2186, %v2186
        %v2251 = vpack.c.b16 %v2187, %v2187
        %v2252 = vpack.c.b16 %v2188, %v2188
        %v2253 = vpack.c.b16 %v2189, %v2189
        %v2254 = vpack.c.b16 %v2190, %v2190
        %v2255 = vpack.c.b16 %v2191, %v2191
        %v2256 = vpack.c.b16 %v2192, %v2192
        %vm2257 = vsmask.f32 3328
        %vm2258 = vsmask.f32 7440
        %vm2259 = vmor %vm2257, %vm2258
        %v2261 = vshrl.u32 %v2193, 16
        %v2263 = vrot.slane %v2261, 4
        %v2264 = vshll.u32 %v2193, 16
        %v2266 = vrot.slane %v2264, 5
        %v2267 = vor.u32 %v2263, %v2266
        %v2268 = vrot.slane %v2267, 4
        %v2270 = vshll.u32 %v2194, 16
        %v2272 = vrot.slane %v2270, 5
        %v2273 = vsel %vm2259, %v2268, %v2272
        %v2275 = vshrl.u32 %v2195, 16
        %v2277 = vrot.slane %v2275, 4
        %v2278 = vshll.u32 %v2195, 16
        %v2280 = vrot.slane %v2278, 5
        %v2281 = vor.u32 %v2277, %v2280
        %v2282 = vrot.slane %v2281, 4
        %v2284 = vshll.u32 %v2196, 16
        %v2286 = vrot.slane %v2284, 5
        %v2287 = vsel %vm2259, %v2282, %v2286
        %v2289 = vshrl.u32 %v2197, 16
        %v2291 = vrot.slane %v2289, 4
        %v2292 = vshll.u32 %v2197, 16
        %v2294 = vrot.slane %v2292, 5
        %v2295 = vor.u32 %v2291, %v2294
        %v2296 = vrot.slane %v2295, 4
        %v2298 = vshll.u32 %v2198, 16
        %v2300 = vrot.slane %v2298, 5
        %v2301 = vsel %vm2259, %v2296, %v2300
        %v2303 = vshrl.u32 %v2199, 16
        %v2305 = vrot.slane %v2303, 4
        %v2306 = vshll.u32 %v2199, 16
        %v2308 = vrot.slane %v2306, 5
        %v2309 = vor.u32 %v2305, %v2308
        %v2310 = vrot.slane %v2309, 4
        %v2312 = vshll.u32 %v2200, 16
        %v2314 = vrot.slane %v2312, 5
        %v2315 = vsel %vm2259, %v2310, %v2314
        %v2317 = vshrl.u32 %v2201, 16
        %v2319 = vrot.slane %v2317, 4
        %v2320 = vshll.u32 %v2201, 16
        %v2322 = vrot.slane %v2320, 5
        %v2323 = vor.u32 %v2319, %v2322
        %v2324 = vrot.slane %v2323, 4
        %v2326 = vshll.u32 %v2202, 16
        %v2328 = vrot.slane %v2326, 5
        %v2329 = vsel %vm2259, %v2324, %v2328
        %v2331 = vshrl.u32 %v2203, 16
        %v2333 = vrot.slane %v2331, 4
        %v2334 = vshll.u32 %v2203, 16
        %v2336 = vrot.slane %v2334, 5
        %v2337 = vor.u32 %v2333, %v2336
        %v2338 = vrot.slane %v2337, 4
        %v2340 = vshll.u32 %v2204, 16
        %v2342 = vrot.slane %v2340, 5
        %v2343 = vsel %vm2259, %v2338, %v2342
        %v2345 = vshrl.u32 %v2205, 16
        %v2347 = vrot.slane %v2345, 4
        %v2348 = vshll.u32 %v2205, 16
        %v2350 = vrot.slane %v2348, 5
        %v2351 = vor.u32 %v2347, %v2350
        %v2352 = vrot.slane %v2351, 4
        %v2354 = vshll.u32 %v2206, 16
        %v2356 = vrot.slane %v2354, 5
        %v2357 = vsel %vm2259, %v2352, %v2356
        %v2359 = vshrl.u32 %v2207, 16
        %v2361 = vrot.slane %v2359, 4
        %v2362 = vshll.u32 %v2207, 16
        %v2364 = vrot.slane %v2362, 5
        %v2365 = vor.u32 %v2361, %v2364
        %v2366 = vrot.slane %v2365, 4
        %v2368 = vshll.u32 %v2208, 16
        %v2370 = vrot.slane %v2368, 5
        %v2371 = vsel %vm2259, %v2366, %v2370
        %v2373 = vshrl.u32 %v2209, 16
        %v2375 = vrot.slane %v2373, 4
        %v2376 = vshll.u32 %v2209, 16
        %v2378 = vrot.slane %v2376, 5
        %v2379 = vor.u32 %v2375, %v2378
        %v2380 = vrot.slane %v2379, 4
        %v2382 = vshll.u32 %v2210, 16
        %v2384 = vrot.slane %v2382, 5
        %v2385 = vsel %vm2259, %v2380, %v2384
        %v2387 = vshrl.u32 %v2211, 16
        %v2389 = vrot.slane %v2387, 4
        %v2390 = vshll.u32 %v2211, 16
        %v2392 = vrot.slane %v2390, 5
        %v2393 = vor.u32 %v2389, %v2392
        %v2394 = vrot.slane %v2393, 4
        %v2396 = vshll.u32 %v2212, 16
        %v2398 = vrot.slane %v2396, 5
        %v2399 = vsel %vm2259, %v2394, %v2398
        %v2401 = vshrl.u32 %v2213, 16
        %v2403 = vrot.slane %v2401, 4
        %v2404 = vshll.u32 %v2213, 16
        %v2406 = vrot.slane %v2404, 5
        %v2407 = vor.u32 %v2403, %v2406
        %v2408 = vrot.slane %v2407, 4
        %v2410 = vshll.u32 %v2214, 16
        %v2412 = vrot.slane %v2410, 5
        %v2413 = vsel %vm2259, %v2408, %v2412
        %v2415 = vshrl.u32 %v2215, 16
        %v2417 = vrot.slane %v2415, 4
        %v2418 = vshll.u32 %v2215, 16
        %v2420 = vrot.slane %v2418, 5
        %v2421 = vor.u32 %v2417, %v2420
        %v2422 = vrot.slane %v2421, 4
        %v2424 = vshll.u32 %v2216, 16
        %v2426 = vrot.slane %v2424, 5
        %v2427 = vsel %vm2259, %v2422, %v2426
        %v2429 = vshrl.u32 %v2217, 16
        %v2431 = vrot.slane %v2429, 4
        %v2432 = vshll.u32 %v2217, 16
        %v2434 = vrot.slane %v2432, 5
        %v2435 = vor.u32 %v2431, %v2434
        %v2436 = vrot.slane %v2435, 4
        %v2438 = vshll.u32 %v2218, 16
        %v2440 = vrot.slane %v2438, 5
        %v2441 = vsel %vm2259, %v2436, %v2440
        %v2443 = vshrl.u32 %v2219, 16
        %v2445 = vrot.slane %v2443, 4
        %v2446 = vshll.u32 %v2219, 16
        %v2448 = vrot.slane %v2446, 5
        %v2449 = vor.u32 %v2445, %v2448
        %v2450 = vrot.slane %v2449, 4
        %v2452 = vshll.u32 %v2220, 16
        %v2454 = vrot.slane %v2452, 5
        %v2455 = vsel %vm2259, %v2450, %v2454
        %v2457 = vshrl.u32 %v2221, 16
        %v2459 = vrot.slane %v2457, 4
        %v2460 = vshll.u32 %v2221, 16
        %v2462 = vrot.slane %v2460, 5
        %v2463 = vor.u32 %v2459, %v2462
        %v2464 = vrot.slane %v2463, 4
        %v2466 = vshll.u32 %v2222, 16
        %v2468 = vrot.slane %v2466, 5
        %v2469 = vsel %vm2259, %v2464, %v2468
        %v2471 = vshrl.u32 %v2223, 16
        %v2473 = vrot.slane %v2471, 4
        %v2474 = vshll.u32 %v2223, 16
        %v2476 = vrot.slane %v2474, 5
        %v2477 = vor.u32 %v2473, %v2476
        %v2478 = vrot.slane %v2477, 4
        %v2480 = vshll.u32 %v2224, 16
        %v2482 = vrot.slane %v2480, 5
        %v2483 = vsel %vm2259, %v2478, %v2482
        %v2485 = vshrl.u32 %v2225, 16
        %v2487 = vrot.slane %v2485, 4
        %v2488 = vshll.u32 %v2225, 16
        %v2490 = vrot.slane %v2488, 5
        %v2491 = vor.u32 %v2487, %v2490
        %v2492 = vrot.slane %v2491, 4
        %v2494 = vshll.u32 %v2226, 16
        %v2496 = vrot.slane %v2494, 5
        %v2497 = vsel %vm2259, %v2492, %v2496
        %v2499 = vshrl.u32 %v2227, 16
        %v2501 = vrot.slane %v2499, 4
        %v2502 = vshll.u32 %v2227, 16
        %v2504 = vrot.slane %v2502, 5
        %v2505 = vor.u32 %v2501, %v2504
        %v2506 = vrot.slane %v2505, 4
        %v2508 = vshll.u32 %v2228, 16
        %v2510 = vrot.slane %v2508, 5
        %v2511 = vsel %vm2259, %v2506, %v2510
        %v2513 = vshrl.u32 %v2229, 16
        %v2515 = vrot.slane %v2513, 4
        %v2516 = vshll.u32 %v2229, 16
        %v2518 = vrot.slane %v2516, 5
        %v2519 = vor.u32 %v2515, %v2518
        %v2520 = vrot.slane %v2519, 4
        %v2522 = vshll.u32 %v2230, 16
        %v2524 = vrot.slane %v2522, 5
        %v2525 = vsel %vm2259, %v2520, %v2524
        %v2527 = vshrl.u32 %v2231, 16
        %v2529 = vrot.slane %v2527, 4
        %v2530 = vshll.u32 %v2231, 16
        %v2532 = vrot.slane %v2530, 5
        %v2533 = vor.u32 %v2529, %v2532
        %v2534 = vrot.slane %v2533, 4
        %v2536 = vshll.u32 %v2232, 16
        %v2538 = vrot.slane %v2536, 5
        %v2539 = vsel %vm2259, %v2534, %v2538
        %v2541 = vshrl.u32 %v2233, 16
        %v2543 = vrot.slane %v2541, 4
        %v2544 = vshll.u32 %v2233, 16
        %v2546 = vrot.slane %v2544, 5
        %v2547 = vor.u32 %v2543, %v2546
        %v2548 = vrot.slane %v2547, 4
        %v2550 = vshll.u32 %v2234, 16
        %v2552 = vrot.slane %v2550, 5
        %v2553 = vsel %vm2259, %v2548, %v2552
        %v2555 = vshrl.u32 %v2235, 16
        %v2557 = vrot.slane %v2555, 4
        %v2558 = vshll.u32 %v2235, 16
        %v2560 = vrot.slane %v2558, 5
        %v2561 = vor.u32 %v2557, %v2560
        %v2562 = vrot.slane %v2561, 4
        %v2564 = vshll.u32 %v2236, 16
        %v2566 = vrot.slane %v2564, 5
        %v2567 = vsel %vm2259, %v2562, %v2566
        %v2569 = vshrl.u32 %v2237, 16
        %v2571 = vrot.slane %v2569, 4
        %v2572 = vshll.u32 %v2237, 16
        %v2574 = vrot.slane %v2572, 5
        %v2575 = vor.u32 %v2571, %v2574
        %v2576 = vrot.slane %v2575, 4
        %v2578 = vshll.u32 %v2238, 16
        %v2580 = vrot.slane %v2578, 5
        %v2581 = vsel %vm2259, %v2576, %v2580
        %v2583 = vshrl.u32 %v2239, 16
        %v2585 = vrot.slane %v2583, 4
        %v2586 = vshll.u32 %v2239, 16
        %v2588 = vrot.slane %v2586, 5
        %v2589 = vor.u32 %v2585, %v2588
        %v2590 = vrot.slane %v2589, 4
        %v2592 = vshll.u32 %v2240, 16
        %v2594 = vrot.slane %v2592, 5
        %v2595 = vsel %vm2259, %v2590, %v2594
        %v2597 = vshrl.u32 %v2241, 16
        %v2599 = vrot.slane %v2597, 4
        %v2600 = vshll.u32 %v2241, 16
        %v2602 = vrot.slane %v2600, 5
        %v2603 = vor.u32 %v2599, %v2602
        %v2604 = vrot.slane %v2603, 4
        %v2606 = vshll.u32 %v2242, 16
        %v2608 = vrot.slane %v2606, 5
        %v2609 = vsel %vm2259, %v2604, %v2608
        %v2611 = vshrl.u32 %v2243, 16
        %v2613 = vrot.slane %v2611, 4
        %v2614 = vshll.u32 %v2243, 16
        %v2616 = vrot.slane %v2614, 5
        %v2617 = vor.u32 %v2613, %v2616
        %v2618 = vrot.slane %v2617, 4
        %v2620 = vshll.u32 %v2244, 16
        %v2622 = vrot.slane %v2620, 5
        %v2623 = vsel %vm2259, %v2618, %v2622
        %v2625 = vshrl.u32 %v2245, 16
        %v2627 = vrot.slane %v2625, 4
        %v2628 = vshll.u32 %v2245, 16
        %v2630 = vrot.slane %v2628, 5
        %v2631 = vor.u32 %v2627, %v2630
        %v2632 = vrot.slane %v2631, 4
        %v2634 = vshll.u32 %v2246, 16
        %v2636 = vrot.slane %v2634, 5
        %v2637 = vsel %vm2259, %v2632, %v2636
        %v2639 = vshrl.u32 %v2247, 16
        %v2641 = vrot.slane %v2639, 4
        %v2642 = vshll.u32 %v2247, 16
        %v2644 = vrot.slane %v2642, 5
        %v2645 = vor.u32 %v2641, %v2644
        %v2646 = vrot.slane %v2645, 4
        %v2648 = vshll.u32 %v2248, 16
        %v2650 = vrot.slane %v2648, 5
        %v2651 = vsel %vm2259, %v2646, %v2650
        %v2653 = vshrl.u32 %v2249, 16
        %v2655 = vrot.slane %v2653, 4
        %v2656 = vshll.u32 %v2249, 16
        %v2658 = vrot.slane %v2656, 5
        %v2659 = vor.u32 %v2655, %v2658
        %v2660 = vrot.slane %v2659, 4
        %v2662 = vshll.u32 %v2250, 16
        %v2664 = vrot.slane %v2662, 5
        %v2665 = vsel %vm2259, %v2660, %v2664
        %v2667 = vshrl.u32 %v2251, 16
        %v2669 = vrot.slane %v2667, 4
        %v2670 = vshll.u32 %v2251, 16
        %v2672 = vrot.slane %v2670, 5
        %v2673 = vor.u32 %v2669, %v2672
        %v2674 = vrot.slane %v2673, 4
        %v2676 = vshll.u32 %v2252, 16
        %v2678 = vrot.slane %v2676, 5
        %v2679 = vsel %vm2259, %v2674, %v2678
        %v2681 = vshrl.u32 %v2253, 16
        %v2683 = vrot.slane %v2681, 4
        %v2684 = vshll.u32 %v2253, 16
        %v2686 = vrot.slane %v2684, 5
        %v2687 = vor.u32 %v2683, %v2686
        %v2688 = vrot.slane %v2687, 4
        %v2690 = vshll.u32 %v2254, 16
        %v2692 = vrot.slane %v2690, 5
        %v2693 = vsel %vm2259, %v2688, %v2692
        %v2695 = vshrl.u32 %v2255, 16
        %v2697 = vrot.slane %v2695, 4
        %v2698 = vshll.u32 %v2255, 16
        %v2700 = vrot.slane %v2698, 5
        %v2701 = vor.u32 %v2697, %v2700
        %v2702 = vrot.slane %v2701, 4
        %v2704 = vshll.u32 %v2256, 16
        %v2706 = vrot.slane %v2704, 5
        %v2707 = vsel %vm2259, %v2702, %v2706
        %s2708 = scalar_lea.vmem %s2, 16
        %v2709 = vld [vmem:[%s2708] sm:$0xf]
        %v2710 = vld [vmem:[%s2708 + $0x4] sm:$0x3]
        %v2711 = vunpack.c.l.b16 %v2273
        %v2712 = vunpack.c.l.b16 %v2287
        %v2713 = vunpack.c.l.b16 %v2301
        %v2714 = vunpack.c.l.b16 %v2315
        %v2715 = vunpack.c.l.b16 %v2329
        %v2716 = vunpack.c.l.b16 %v2343
        %v2717 = vunpack.c.l.b16 %v2357
        %v2718 = vunpack.c.l.b16 %v2371
        %v2719 = vunpack.c.l.b16 %v2385
        %v2720 = vunpack.c.l.b16 %v2399
        %v2721 = vunpack.c.l.b16 %v2413
        %v2722 = vunpack.c.l.b16 %v2427
        %v2723 = vunpack.c.l.b16 %v2441
        %v2724 = vunpack.c.l.b16 %v2455
        %v2725 = vunpack.c.l.b16 %v2469
        %v2726 = vunpack.c.l.b16 %v2483
        %v2727 = vunpack.c.l.b16 %v2497
        %v2728 = vunpack.c.l.b16 %v2511
        %v2729 = vunpack.c.l.b16 %v2525
        %v2730 = vunpack.c.l.b16 %v2539
        %v2731 = vunpack.c.l.b16 %v2553
        %v2732 = vunpack.c.l.b16 %v2567
        %v2733 = vunpack.c.l.b16 %v2581
        %v2734 = vunpack.c.l.b16 %v2595
        %v2735 = vunpack.c.l.b16 %v2609
        %v2736 = vunpack.c.l.b16 %v2623
        %v2737 = vunpack.c.l.b16 %v2637
        %v2738 = vunpack.c.l.b16 %v2651
        %v2739 = vunpack.c.l.b16 %v2665
        %v2740 = vunpack.c.l.b16 %v2679
        %v2741 = vunpack.c.l.b16 %v2693
        %v2742 = vunpack.c.l.b16 %v2707
        %v2743 = vpack.c.b16 %v2712, %v2711
        %v2744 = vpack.c.b16 %v2714, %v2713
        %v2745 = vpack.c.b16 %v2716, %v2715
        %v2746 = vpack.c.b16 %v2718, %v2717
        %v2747 = vpack.c.b16 %v2720, %v2719
        %v2748 = vpack.c.b16 %v2722, %v2721
        %v2749 = vpack.c.b16 %v2724, %v2723
        %v2750 = vpack.c.b16 %v2726, %v2725
        %v2751 = vpack.c.b16 %v2728, %v2727
        %v2752 = vpack.c.b16 %v2730, %v2729
        %v2753 = vpack.c.b16 %v2732, %v2731
        %v2754 = vpack.c.b16 %v2734, %v2733
        %v2755 = vpack.c.b16 %v2736, %v2735
        %v2756 = vpack.c.b16 %v2738, %v2737
        %v2757 = vpack.c.b16 %v2740, %v2739
        %v2758 = vpack.c.b16 %v2742, %v2741
        %v2761 = vunpack.c.l.b16 %v2709
        %v2762 = vunpack.c.l.b16 %v2710
        %v2763 = vpack.c.b16 %v2762, %v2761
        %v2765 = vsel %vm1362, %v2743, 0
        %v2768 = vsel %vm1362, %v2744, 0
        %v2771 = vsel %vm1362, %v2745, 0
        %v2774 = vsel %vm1362, %v2746, 0
        %v2777 = vsel %vm1362, %v2747, 0
        %v2780 = vsel %vm1362, %v2748, 0
        %v2783 = vsel %vm1362, %v2749, 0
        %v2786 = vsel %vm1362, %v2750, 0
        %v2789 = vsel %vm1362, %v2751, 0
        %v2792 = vsel %vm1362, %v2752, 0
        %v2795 = vsel %vm1362, %v2753, 0
        %v2798 = vsel %vm1362, %v2754, 0
        %v2801 = vsel %vm1362, %v2755, 0
        %v2804 = vsel %vm1362, %v2756, 0
        %v2807 = vsel %vm1362, %v2757, 0
        %v2810 = vsel %vm1362, %v2758, 0
        %v2813 = vsel %vm1411, %v2763, 0
        %2815 = vmatprep.subr.bf16.mxu0 0
        %2816 = vmatpush1.bf16.msra.mxu0 0
        %2817 = vmatprep.subr.bf16.mxu0 0
        %2818 = vmatpush1.bf16.msra.mxu0 0
        %2819 = vmatprep.subr.bf16.mxu0 0
        %2820 = vmatpush1.bf16.msra.mxu0 0
        %2821 = vmatprep.subr.bf16.mxu0 0
        %2822 = vmatpush1.bf16.msra.mxu0 0
        %2823 = vmatprep.subr.bf16.mxu0 0
        %2824 = vmatpush1.bf16.msra.mxu0 0
        %2825 = vmatprep.subr.bf16.mxu0 0
        %2826 = vmatpush1.bf16.msra.mxu0 0
        %2827 = vmatprep.subr.bf16.mxu0 0
        %2828 = vmatpush1.bf16.msra.mxu0 0
        %2829 = vmatprep.subr.bf16.mxu0 0
        %2830 = vmatpush1.bf16.msra.mxu0 %v2813
        %2831 = vmatprep.subr.bf16.mxu0 0
        %2832 = vmatpush2.bf16.msra.mxu0 0
        %2833 = vmatprep.subr.bf16.mxu0 0
        %2834 = vmatpush2.bf16.msra.mxu0 0
        %2835 = vmatprep.subr.bf16.mxu0 0
        %2836 = vmatpush2.bf16.msra.mxu0 0
        %2837 = vmatprep.subr.bf16.mxu0 0
        %2838 = vmatpush2.bf16.msra.mxu0 0
        %2839 = vmatprep.subr.bf16.mxu0 0
        %2840 = vmatpush2.bf16.msra.mxu0 0
        %2841 = vmatprep.subr.bf16.mxu0 0
        %2842 = vmatpush2.bf16.msra.mxu0 0
        %2843 = vmatprep.subr.bf16.mxu0 0
        %2844 = vmatpush2.bf16.msra.mxu0 0
        %2845 = vmatprep.subr.bf16.mxu0 0
        %2846 = vmatpush2.bf16.msra.mxu0 0
        %2847 = vmatprep.mubr.bf16.mxu0 0
        %2848 = vmatmul.mubr.bf16.gmra.mxu0 %v2765
        %v2849 = vpop.f32.mrf.mxu0
        %v2850 = vadd.f32 0.0, %v2849
        %v2851 = vpop.f32.mrf.mxu0
        %v2852 = vpop.f32.mrf.mxu0
        %v2853 = vadd.f32 0.0, %v2852
        %v2854 = vpop.f32.mrf.mxu0
        %2855 = vmatprep.mubr.bf16.mxu0 0
        %2856 = vmatmul.mubr.bf16.gmra.mxu0 %v2768
        %v2857 = vpop.f32.mrf.mxu0
        %v2858 = vadd.f32 0.0, %v2857
        %v2859 = vpop.f32.mrf.mxu0
        %v2860 = vpop.f32.mrf.mxu0
        %v2861 = vadd.f32 0.0, %v2860
        %v2862 = vpop.f32.mrf.mxu0
        %2863 = vmatprep.mubr.bf16.mxu0 0
        %2864 = vmatmul.mubr.bf16.gmra.mxu0 %v2771
        %v2865 = vpop.f32.mrf.mxu0
        %v2866 = vadd.f32 0.0, %v2865
        %v2867 = vpop.f32.mrf.mxu0
        %v2868 = vpop.f32.mrf.mxu0
        %v2869 = vadd.f32 0.0, %v2868
        %v2870 = vpop.f32.mrf.mxu0
        %2871 = vmatprep.mubr.bf16.mxu0 0
        %2872 = vmatmul.mubr.bf16.gmra.mxu0 %v2774
        %v2873 = vpop.f32.mrf.mxu0
        %v2874 = vadd.f32 0.0, %v2873
        %v2875 = vpop.f32.mrf.mxu0
        %v2876 = vpop.f32.mrf.mxu0
        %v2877 = vadd.f32 0.0, %v2876
        %v2878 = vpop.f32.mrf.mxu0
        %2879 = vmatprep.mubr.bf16.mxu0 0
        %2880 = vmatmul.mubr.bf16.gmra.mxu0 %v2777
        %v2881 = vpop.f32.mrf.mxu0
        %v2882 = vadd.f32 0.0, %v2881
        %v2883 = vpop.f32.mrf.mxu0
        %v2884 = vpop.f32.mrf.mxu0
        %v2885 = vadd.f32 0.0, %v2884
        %v2886 = vpop.f32.mrf.mxu0
        %2887 = vmatprep.mubr.bf16.mxu0 0
        %2888 = vmatmul.mubr.bf16.gmra.mxu0 %v2780
        %v2889 = vpop.f32.mrf.mxu0
        %v2890 = vadd.f32 0.0, %v2889
        %v2891 = vpop.f32.mrf.mxu0
        %v2892 = vpop.f32.mrf.mxu0
        %v2893 = vadd.f32 0.0, %v2892
        %v2894 = vpop.f32.mrf.mxu0
        %2895 = vmatprep.mubr.bf16.mxu0 0
        %2896 = vmatmul.mubr.bf16.gmra.mxu0 %v2783
        %v2897 = vpop.f32.mrf.mxu0
        %v2898 = vadd.f32 0.0, %v2897
        %v2899 = vpop.f32.mrf.mxu0
        %v2900 = vpop.f32.mrf.mxu0
        %v2901 = vadd.f32 0.0, %v2900
        %v2902 = vpop.f32.mrf.mxu0
        %2903 = vmatprep.mubr.bf16.mxu0 0
        %2904 = vmatmul.mubr.bf16.gmra.mxu0 %v2786
        %v2905 = vpop.f32.mrf.mxu0
        %v2906 = vadd.f32 0.0, %v2905
        %v2907 = vpop.f32.mrf.mxu0
        %v2908 = vpop.f32.mrf.mxu0
        %v2909 = vadd.f32 0.0, %v2908
        %v2910 = vpop.f32.mrf.mxu0
        %2911 = vmatprep.mubr.bf16.mxu0 0
        %2912 = vmatmul.mubr.bf16.gmra.mxu0 %v2789
        %v2913 = vpop.f32.mrf.mxu0
        %v2914 = vadd.f32 0.0, %v2913
        %v2915 = vpop.f32.mrf.mxu0
        %v2916 = vpop.f32.mrf.mxu0
        %v2917 = vadd.f32 0.0, %v2916
        %v2918 = vpop.f32.mrf.mxu0
        %2919 = vmatprep.mubr.bf16.mxu0 0
        %2920 = vmatmul.mubr.bf16.gmra.mxu0 %v2792
        %v2921 = vpop.f32.mrf.mxu0
        %v2922 = vadd.f32 0.0, %v2921
        %v2923 = vpop.f32.mrf.mxu0
        %v2924 = vpop.f32.mrf.mxu0
        %v2925 = vadd.f32 0.0, %v2924
        %v2926 = vpop.f32.mrf.mxu0
        %2927 = vmatprep.mubr.bf16.mxu0 0
        %2928 = vmatmul.mubr.bf16.gmra.mxu0 %v2795
        %v2929 = vpop.f32.mrf.mxu0
        %v2930 = vadd.f32 0.0, %v2929
        %v2931 = vpop.f32.mrf.mxu0
        %v2932 = vpop.f32.mrf.mxu0
        %v2933 = vadd.f32 0.0, %v2932
        %v2934 = vpop.f32.mrf.mxu0
        %2935 = vmatprep.mubr.bf16.mxu0 0
        %2936 = vmatmul.mubr.bf16.gmra.mxu0 %v2798
        %v2937 = vpop.f32.mrf.mxu0
        %v2938 = vadd.f32 0.0, %v2937
        %v2939 = vpop.f32.mrf.mxu0
        %v2940 = vpop.f32.mrf.mxu0
        %v2941 = vadd.f32 0.0, %v2940
        %v2942 = vpop.f32.mrf.mxu0
        %2943 = vmatprep.mubr.bf16.mxu0 0
        %2944 = vmatmul.mubr.bf16.gmra.mxu0 %v2801
        %v2945 = vpop.f32.mrf.mxu0
        %v2946 = vadd.f32 0.0, %v2945
        %v2947 = vpop.f32.mrf.mxu0
        %v2948 = vpop.f32.mrf.mxu0
        %v2949 = vadd.f32 0.0, %v2948
        %v2950 = vpop.f32.mrf.mxu0
        %2951 = vmatprep.mubr.bf16.mxu0 0
        %2952 = vmatmul.mubr.bf16.gmra.mxu0 %v2804
        %v2953 = vpop.f32.mrf.mxu0
        %v2954 = vadd.f32 0.0, %v2953
        %v2955 = vpop.f32.mrf.mxu0
        %v2956 = vpop.f32.mrf.mxu0
        %v2957 = vadd.f32 0.0, %v2956
        %v2958 = vpop.f32.mrf.mxu0
        %2959 = vmatprep.mubr.bf16.mxu0 0
        %2960 = vmatmul.mubr.bf16.gmra.mxu0 %v2807
        %v2961 = vpop.f32.mrf.mxu0
        %v2962 = vadd.f32 0.0, %v2961
        %v2963 = vpop.f32.mrf.mxu0
        %v2964 = vpop.f32.mrf.mxu0
        %v2965 = vadd.f32 0.0, %v2964
        %v2966 = vpop.f32.mrf.mxu0
        %2967 = vmatprep.mubr.bf16.mxu0 0
        %2968 = vmatmul.mubr.bf16.gmra.mxu0 %v2810
        %v2969 = vpop.f32.mrf.mxu0
        %v2970 = vadd.f32 0.0, %v2969
        %v2971 = vpop.f32.mrf.mxu0
        %v2972 = vpop.f32.mrf.mxu0
        %v2973 = vadd.f32 0.0, %v2972
        %v2974 = vpop.f32.mrf.mxu0
        %2975 = vdwg.mxu0
        %v2976 = vadd.f32 %v1683, %v2850
        %v2977 = vadd.f32 %v1686, %v2853
        %v2978 = vadd.f32 %v1691, %v2858
        %v2979 = vadd.f32 %v1694, %v2861
        %v2980 = vadd.f32 %v1699, %v2866
        %v2981 = vadd.f32 %v1702, %v2869
        %v2982 = vadd.f32 %v1707, %v2874
        %v2983 = vadd.f32 %v1710, %v2877
        %v2984 = vadd.f32 %v1715, %v2882
        %v2985 = vadd.f32 %v1718, %v2885
        %v2986 = vadd.f32 %v1723, %v2890
        %v2987 = vadd.f32 %v1726, %v2893
        %v2988 = vadd.f32 %v1731, %v2898
        %v2989 = vadd.f32 %v1734, %v2901
        %v2990 = vadd.f32 %v1739, %v2906
        %v2991 = vadd.f32 %v1742, %v2909
        %v2992 = vadd.f32 %v1747, %v2914
        %v2993 = vadd.f32 %v1750, %v2917
        %v2994 = vadd.f32 %v1755, %v2922
        %v2995 = vadd.f32 %v1758, %v2925
        %v2996 = vadd.f32 %v1763, %v2930
        %v2997 = vadd.f32 %v1766, %v2933
        %v2998 = vadd.f32 %v1771, %v2938
        %v2999 = vadd.f32 %v1774, %v2941
        %v3000 = vadd.f32 %v1779, %v2946
        %v3001 = vadd.f32 %v1782, %v2949
        %v3002 = vadd.f32 %v1787, %v2954
        %v3003 = vadd.f32 %v1790, %v2957
        %v3004 = vadd.f32 %v1795, %v2962
        %v3005 = vadd.f32 %v1798, %v2965
        %v3006 = vadd.f32 %v1803, %v2970
        %v3007 = vadd.f32 %v1806, %v2973
        %v3008 = vld [vmem:[%s3] sm:$0x1]
        %v3010 = vlaneseq
        %v3011 = vshrl.u32 %v3010, 7
        %v3012 = vsub.s32 0, %v3011
        %v3013 = vrot.slane %v3008, %v3012
        %v3015 = vadd.f32 %v2976, %v3013
        %v3016 = vadd.f32 %v2977, %v3013
        %v3017 = vadd.f32 %v2978, %v3013
        %v3018 = vadd.f32 %v2979, %v3013
        %v3019 = vadd.f32 %v2980, %v3013
        %v3020 = vadd.f32 %v2981, %v3013
        %v3021 = vadd.f32 %v2982, %v3013
        %v3022 = vadd.f32 %v2983, %v3013
        %v3023 = vadd.f32 %v2984, %v3013
        %v3024 = vadd.f32 %v2985, %v3013
        %v3025 = vadd.f32 %v2986, %v3013
        %v3026 = vadd.f32 %v2987, %v3013
        %v3027 = vadd.f32 %v2988, %v3013
        %v3028 = vadd.f32 %v2989, %v3013
        %v3029 = vadd.f32 %v2990, %v3013
        %v3030 = vadd.f32 %v2991, %v3013
        %v3031 = vadd.f32 %v2992, %v3013
        %v3032 = vadd.f32 %v2993, %v3013
        %v3033 = vadd.f32 %v2994, %v3013
        %v3034 = vadd.f32 %v2995, %v3013
        %v3035 = vadd.f32 %v2996, %v3013
        %v3036 = vadd.f32 %v2997, %v3013
        %v3037 = vadd.f32 %v2998, %v3013
        %v3038 = vadd.f32 %v2999, %v3013
        %v3039 = vadd.f32 %v3000, %v3013
        %v3040 = vadd.f32 %v3001, %v3013
        %v3041 = vadd.f32 %v3002, %v3013
        %v3042 = vadd.f32 %v3003, %v3013
        %v3043 = vadd.f32 %v3004, %v3013
        %v3044 = vadd.f32 %v3005, %v3013
        %v3045 = vadd.f32 %v3006, %v3013
        %v3046 = vadd.f32 %v3007, %v3013
        %v3047 = vmax.f32 %v3015, 0.0
        %v3048 = vmax.f32 %v3016, 0.0
        %v3049 = vmax.f32 %v3017, 0.0
        %v3050 = vmax.f32 %v3018, 0.0
        %v3051 = vmax.f32 %v3019, 0.0
        %v3052 = vmax.f32 %v3020, 0.0
        %v3053 = vmax.f32 %v3021, 0.0
        %v3054 = vmax.f32 %v3022, 0.0
        %v3055 = vmax.f32 %v3023, 0.0
        %v3056 = vmax.f32 %v3024, 0.0
        %v3057 = vmax.f32 %v3025, 0.0
        %v3058 = vmax.f32 %v3026, 0.0
        %v3059 = vmax.f32 %v3027, 0.0
        %v3060 = vmax.f32 %v3028, 0.0
        %v3061 = vmax.f32 %v3029, 0.0
        %v3062 = vmax.f32 %v3030, 0.0
        %v3063 = vmax.f32 %v3031, 0.0
        %v3064 = vmax.f32 %v3032, 0.0
        %v3065 = vmax.f32 %v3033, 0.0
        %v3066 = vmax.f32 %v3034, 0.0
        %v3067 = vmax.f32 %v3035, 0.0
        %v3068 = vmax.f32 %v3036, 0.0
        %v3069 = vmax.f32 %v3037, 0.0
        %v3070 = vmax.f32 %v3038, 0.0
        %v3071 = vmax.f32 %v3039, 0.0
        %v3072 = vmax.f32 %v3040, 0.0
        %v3073 = vmax.f32 %v3041, 0.0
        %v3074 = vmax.f32 %v3042, 0.0
        %v3075 = vmax.f32 %v3043, 0.0
        %v3076 = vmax.f32 %v3044, 0.0
        %v3077 = vmax.f32 %v3045, 0.0
        %v3078 = vmax.f32 %v3046, 0.0
        %v3079 = vpack.c.bf16 %v3048, %v3047
        %v3080 = vpack.c.bf16 %v3050, %v3049
        %v3081 = vpack.c.bf16 %v3052, %v3051
        %v3082 = vpack.c.bf16 %v3054, %v3053
        %v3083 = vpack.c.bf16 %v3056, %v3055
        %v3084 = vpack.c.bf16 %v3058, %v3057
        %v3085 = vpack.c.bf16 %v3060, %v3059
        %v3086 = vpack.c.bf16 %v3062, %v3061
        %v3087 = vpack.c.bf16 %v3064, %v3063
        %v3088 = vpack.c.bf16 %v3066, %v3065
        %v3089 = vpack.c.bf16 %v3068, %v3067
        %v3090 = vpack.c.bf16 %v3070, %v3069
        %v3091 = vpack.c.bf16 %v3072, %v3071
        %v3092 = vpack.c.bf16 %v3074, %v3073
        %v3093 = vpack.c.bf16 %v3076, %v3075
        %v3094 = vpack.c.bf16 %v3078, %v3077
        %v3111 = vunpack.c.l.b16 %v3079
        %v3112 = vunpack.c.h.b16 %v3079
        %v3113 = vunpack.c.l.b16 %v3080
        %v3114 = vunpack.c.h.b16 %v3080
        %v3115 = vunpack.c.l.b16 %v3081
        %v3116 = vunpack.c.h.b16 %v3081
        %v3117 = vunpack.c.l.b16 %v3082
        %v3118 = vunpack.c.h.b16 %v3082
        %v3119 = vunpack.c.l.b16 %v3083
        %v3120 = vunpack.c.h.b16 %v3083
        %v3121 = vunpack.c.l.b16 %v3084
        %v3122 = vunpack.c.h.b16 %v3084
        %v3123 = vunpack.c.l.b16 %v3085
        %v3124 = vunpack.c.h.b16 %v3085
        %v3125 = vunpack.c.l.b16 %v3086
        %v3126 = vunpack.c.h.b16 %v3086
        %v3127 = vunpack.c.l.b16 %v3087
        %v3128 = vunpack.c.h.b16 %v3087
        %v3129 = vunpack.c.l.b16 %v3088
        %v3130 = vunpack.c.h.b16 %v3088
        %v3131 = vunpack.c.l.b16 %v3089
        %v3132 = vunpack.c.h.b16 %v3089
        %v3133 = vunpack.c.l.b16 %v3090
        %v3134 = vunpack.c.h.b16 %v3090
        %v3135 = vunpack.c.l.b16 %v3091
        %v3136 = vunpack.c.h.b16 %v3091
        %v3137 = vunpack.c.l.b16 %v3092
        %v3138 = vunpack.c.h.b16 %v3092
        %v3139 = vunpack.c.l.b16 %v3093
        %v3140 = vunpack.c.h.b16 %v3093
        %v3141 = vunpack.c.l.b16 %v3094
        %v3142 = vunpack.c.h.b16 %v3094
        %v3143 = vpack.c.b16 %v3111, %v3111
        %v3144 = vpack.c.b16 %v3112, %v3112
        %v3145 = vpack.c.b16 %v3113, %v3113
        %v3146 = vpack.c.b16 %v3114, %v3114
        %v3147 = vpack.c.b16 %v3115, %v3115
        %v3148 = vpack.c.b16 %v3116, %v3116
        %v3149 = vpack.c.b16 %v3117, %v3117
        %v3150 = vpack.c.b16 %v3118, %v3118
        %v3151 = vpack.c.b16 %v3119, %v3119
        %v3152 = vpack.c.b16 %v3120, %v3120
        %v3153 = vpack.c.b16 %v3121, %v3121
        %v3154 = vpack.c.b16 %v3122, %v3122
        %v3155 = vpack.c.b16 %v3123, %v3123
        %v3156 = vpack.c.b16 %v3124, %v3124
        %v3157 = vpack.c.b16 %v3125, %v3125
        %v3158 = vpack.c.b16 %v3126, %v3126
        %v3159 = vpack.c.b16 %v3127, %v3127
        %v3160 = vpack.c.b16 %v3128, %v3128
        %v3161 = vpack.c.b16 %v3129, %v3129
        %v3162 = vpack.c.b16 %v3130, %v3130
        %v3163 = vpack.c.b16 %v3131, %v3131
        %v3164 = vpack.c.b16 %v3132, %v3132
        %v3165 = vpack.c.b16 %v3133, %v3133
        %v3166 = vpack.c.b16 %v3134, %v3134
        %v3167 = vpack.c.b16 %v3135, %v3135
        %v3168 = vpack.c.b16 %v3136, %v3136
        %v3169 = vpack.c.b16 %v3137, %v3137
        %v3170 = vpack.c.b16 %v3138, %v3138
        %v3171 = vpack.c.b16 %v3139, %v3139
        %v3172 = vpack.c.b16 %v3140, %v3140
        %v3173 = vpack.c.b16 %v3141, %v3141
        %v3174 = vpack.c.b16 %v3142, %v3142
        %vm3191 = vcmask 60416
        %3192 = vst.msk [vmem:[#allocation2] sm:$0xf] %vm3191, 0
        %vm3193 = vcmask 57344
        %vm3194 = vsmask.f32 256
        %vm3195 = vmand %vm3193, %vm3194
        %v3196 = vld [vmem:[#allocation2 + $0x4] sm:$0x1]
        %v3197 = vsel %vm3195, 0, %v3196
        %3198 = vst [vmem:[#allocation2 + $0x4] sm:$0x1] %v3197
        %3199 = vst.msk [vmem:[#allocation2 + $0x48] sm:$0xf] %vm3191, 0
        %v3200 = vld [vmem:[#allocation2 + $0x4c] sm:$0x1]
        %v3201 = vsel %vm3195, 0, %v3200
        %3202 = vst [vmem:[#allocation2 + $0x4c] sm:$0x1] %v3201
        %v3203 = vld [vmem:[#allocation2] sm:$0x1]
        %v3204 = vsel %vm3195, 0, %v3203
        %3205 = vst [vmem:[#allocation2] sm:$0x1] %v3204
        %v3206 = vld [vmem:[#allocation2 + $0x8] sm:$0x1]
        %v3207 = vsel %vm3195, 0, %v3206
        %3208 = vst [vmem:[#allocation2 + $0x8] sm:$0x1] %v3207
        %v3209 = vld [vmem:[#allocation2 + $0x10] sm:$0x1]
        %v3210 = vsel %vm3195, 0, %v3209
        %3211 = vst [vmem:[#allocation2 + $0x10] sm:$0x1] %v3210
        %v3212 = vld [vmem:[#allocation2 + $0x18] sm:$0x1]
        %v3213 = vsel %vm3195, 0, %v3212
        %3214 = vst [vmem:[#allocation2 + $0x18] sm:$0x1] %v3213
        %v3215 = vld [vmem:[#allocation2 + $0x20] sm:$0x1]
        %v3216 = vsel %vm3195, 0, %v3215
        %3217 = vst [vmem:[#allocation2 + $0x20] sm:$0x1] %v3216
        %v3218 = vld [vmem:[#allocation2 + $0x28] sm:$0x1]
        %v3219 = vsel %vm3195, 0, %v3218
        %3220 = vst [vmem:[#allocation2 + $0x28] sm:$0x1] %v3219
        %v3221 = vld [vmem:[#allocation2 + $0x30] sm:$0x1]
        %v3222 = vsel %vm3195, 0, %v3221
        %3223 = vst [vmem:[#allocation2 + $0x30] sm:$0x1] %v3222
        %v3224 = vld [vmem:[#allocation2 + $0x38] sm:$0x1]
        %v3225 = vsel %vm3195, 0, %v3224
        %3226 = vst [vmem:[#allocation2 + $0x38] sm:$0x1] %v3225
        %v3227 = vld [vmem:[#allocation2 + $0x40] sm:$0x1]
        %v3228 = vsel %vm3195, 0, %v3227
        %3229 = vst [vmem:[#allocation2 + $0x40] sm:$0x1] %v3228
        %s3230 = scalar_lea.vmem [#allocation2], 144
        %v3231 = vld [vmem:[%s3230] sm:$0x1]
        %v3232 = vsel %vm3195, 0, %v3231
        %3233 = vst [vmem:[%s3230] sm:$0x1] %v3232
        %v3234 = vld [vmem:[%s3230 + $0x8] sm:$0x1]
        %v3235 = vsel %vm3195, 0, %v3234
        %3236 = vst [vmem:[%s3230 + $0x8] sm:$0x1] %v3235
        %v3237 = vld [vmem:[%s3230 + $0x10] sm:$0x1]
        %v3238 = vsel %vm3195, 0, %v3237
        %3239 = vst [vmem:[%s3230 + $0x10] sm:$0x1] %v3238
        %v3240 = vld [vmem:[%s3230 + $0x18] sm:$0x1]
        %v3241 = vsel %vm3195, 0, %v3240
        %3242 = vst [vmem:[%s3230 + $0x18] sm:$0x1] %v3241
        %v3243 = vld [vmem:[%s3230 + $0x20] sm:$0x1]
        %v3244 = vsel %vm3195, 0, %v3243
        %3245 = vst [vmem:[%s3230 + $0x20] sm:$0x1] %v3244
        %v3246 = vld [vmem:[%s3230 + $0x28] sm:$0x1]
        %v3247 = vsel %vm3195, 0, %v3246
        %3248 = vst [vmem:[%s3230 + $0x28] sm:$0x1] %v3247
        %v3249 = vld [vmem:[%s3230 + $0x30] sm:$0x1]
        %v3250 = vsel %vm3195, 0, %v3249
        %3251 = vst [vmem:[%s3230 + $0x30] sm:$0x1] %v3250
        %v3252 = vld [vmem:[%s3230 + $0x38] sm:$0x1]
        %v3253 = vsel %vm3195, 0, %v3252
        %3254 = vst [vmem:[%s3230 + $0x38] sm:$0x1] %v3253
        %v3255 = vld [vmem:[%s3230 + $0x40] sm:$0x1]
        %v3256 = vsel %vm3195, 0, %v3255
        %3257 = vst [vmem:[%s3230 + $0x40] sm:$0x1] %v3256
        %s3258 = scalar_lea.vmem [#allocation2], 216
        %3259 = vst.msk [vmem:[%s3258] sm:$0xf] %vm3191, %v3143
        %3260 = vst.msk [vmem:[%s3258 + $0x8] sm:$0xf] %vm3191, %v3144
        %3261 = vst.msk [vmem:[%s3258 + $0x10] sm:$0xf] %vm3191, %v3145
        %3262 = vst.msk [vmem:[%s3258 + $0x18] sm:$0xf] %vm3191, %v3146
        %3263 = vst.msk [vmem:[%s3258 + $0x20] sm:$0xf] %vm3191, %v3147
        %3264 = vst.msk [vmem:[%s3258 + $0x28] sm:$0xf] %vm3191, %v3148
        %3265 = vst.msk [vmem:[%s3258 + $0x30] sm:$0xf] %vm3191, %v3149
        %3266 = vst.msk [vmem:[%s3258 + $0x38] sm:$0xf] %vm3191, %v3150
        %v3268 = vshrl.u32 %v3151, 16
        %v3270 = vrot.slane %v3268, 7
        %v3271 = vshll.u32 %v3151, 16
        %v3273 = vor.u32 %v3270, %v3271
        %v3274 = vrot.slane %v3270, 4
        %v3276 = vshrl.u32 %v3152, 16
        %v3278 = vrot.slane %v3276, 7
        %v3279 = vshll.u32 %v3152, 16
        %v3281 = vor.u32 %v3278, %v3279
        %v3282 = vrot.slane %v3278, 4
        %v3284 = vshrl.u32 %v3153, 16
        %v3286 = vrot.slane %v3284, 7
        %v3287 = vshll.u32 %v3153, 16
        %v3289 = vor.u32 %v3286, %v3287
        %v3290 = vrot.slane %v3286, 4
        %v3292 = vshrl.u32 %v3154, 16
        %v3294 = vrot.slane %v3292, 7
        %v3295 = vshll.u32 %v3154, 16
        %v3297 = vor.u32 %v3294, %v3295
        %v3298 = vrot.slane %v3294, 4
        %v3300 = vshrl.u32 %v3155, 16
        %v3302 = vrot.slane %v3300, 7
        %v3303 = vshll.u32 %v3155, 16
        %v3305 = vor.u32 %v3302, %v3303
        %v3306 = vrot.slane %v3302, 4
        %v3308 = vshrl.u32 %v3156, 16
        %v3310 = vrot.slane %v3308, 7
        %v3311 = vshll.u32 %v3156, 16
        %v3313 = vor.u32 %v3310, %v3311
        %v3314 = vrot.slane %v3310, 4
        %v3316 = vshrl.u32 %v3157, 16
        %v3318 = vrot.slane %v3316, 7
        %v3319 = vshll.u32 %v3157, 16
        %v3321 = vor.u32 %v3318, %v3319
        %v3322 = vrot.slane %v3318, 4
        %v3324 = vshrl.u32 %v3158, 16
        %v3326 = vrot.slane %v3324, 7
        %v3327 = vshll.u32 %v3158, 16
        %v3329 = vor.u32 %v3326, %v3327
        %v3330 = vrot.slane %v3326, 4
        %vm3347 = vcmask 60416
        %vm3348 = vsmask.f32 7938
        %vm3349 = vmand %vm3347, %vm3348
        %v3350 = vld [vmem:[%s3230] sm:$0xf]
        %v3351 = vsel %vm3349, %v3273, %v3350
        %3352 = vst [vmem:[%s3230] sm:$0xf] %v3351
        %v3353 = vld [vmem:[%s3230 + $0x4] sm:$0x1]
        %v3354 = vsel %vm3195, %v3274, %v3353
        %3355 = vst [vmem:[%s3230 + $0x4] sm:$0x1] %v3354
        %v3356 = vld [vmem:[%s3230 + $0x8] sm:$0xf]
        %v3357 = vsel %vm3349, %v3281, %v3356
        %3358 = vst [vmem:[%s3230 + $0x8] sm:$0xf] %v3357
        %v3359 = vld [vmem:[%s3230 + $0xc] sm:$0x1]
        %v3360 = vsel %vm3195, %v3282, %v3359
        %3361 = vst [vmem:[%s3230 + $0xc] sm:$0x1] %v3360
        %v3362 = vld [vmem:[%s3230 + $0x10] sm:$0xf]
        %v3363 = vsel %vm3349, %v3289, %v3362
        %3364 = vst [vmem:[%s3230 + $0x10] sm:$0xf] %v3363
        %v3365 = vld [vmem:[%s3230 + $0x14] sm:$0x1]
        %v3366 = vsel %vm3195, %v3290, %v3365
        %3367 = vst [vmem:[%s3230 + $0x14] sm:$0x1] %v3366
        %v3368 = vld [vmem:[%s3230 + $0x18] sm:$0xf]
        %v3369 = vsel %vm3349, %v3297, %v3368
        %3370 = vst [vmem:[%s3230 + $0x18] sm:$0xf] %v3369
        %v3371 = vld [vmem:[%s3230 + $0x1c] sm:$0x1]
        %v3372 = vsel %vm3195, %v3298, %v3371
        %3373 = vst [vmem:[%s3230 + $0x1c] sm:$0x1] %v3372
        %v3374 = vld [vmem:[%s3230 + $0x20] sm:$0xf]
        %v3375 = vsel %vm3349, %v3305, %v3374
        %3376 = vst [vmem:[%s3230 + $0x20] sm:$0xf] %v3375
        %v3377 = vld [vmem:[%s3230 + $0x24] sm:$0x1]
        %v3378 = vsel %vm3195, %v3306, %v3377
        %3379 = vst [vmem:[%s3230 + $0x24] sm:$0x1] %v3378
        %v3380 = vld [vmem:[%s3230 + $0x28] sm:$0xf]
        %v3381 = vsel %vm3349, %v3313, %v3380
        %3382 = vst [vmem:[%s3230 + $0x28] sm:$0xf] %v3381
        %v3383 = vld [vmem:[%s3230 + $0x2c] sm:$0x1]
        %v3384 = vsel %vm3195, %v3314, %v3383
        %3385 = vst [vmem:[%s3230 + $0x2c] sm:$0x1] %v3384
        %v3386 = vld [vmem:[%s3230 + $0x30] sm:$0xf]
        %v3387 = vsel %vm3349, %v3321, %v3386
        %3388 = vst [vmem:[%s3230 + $0x30] sm:$0xf] %v3387
        %v3389 = vld [vmem:[%s3230 + $0x34] sm:$0x1]
        %v3390 = vsel %vm3195, %v3322, %v3389
        %3391 = vst [vmem:[%s3230 + $0x34] sm:$0x1] %v3390
        %v3392 = vld [vmem:[%s3230 + $0x38] sm:$0xf]
        %v3393 = vsel %vm3349, %v3329, %v3392
        %3394 = vst [vmem:[%s3230 + $0x38] sm:$0xf] %v3393
        %v3395 = vld [vmem:[%s3230 + $0x3c] sm:$0x1]
        %v3396 = vsel %vm3195, %v3330, %v3395
        %3397 = vst [vmem:[%s3230 + $0x3c] sm:$0x1] %v3396
        %s3398 = scalar_lea.vmem [#allocation2], 80
        %3399 = vst.msk [vmem:[%s3398] sm:$0xf] %vm3191, %v3159
        %3400 = vst.msk [vmem:[%s3398 + $0x8] sm:$0xf] %vm3191, %v3160
        %3401 = vst.msk [vmem:[%s3398 + $0x10] sm:$0xf] %vm3191, %v3161
        %3402 = vst.msk [vmem:[%s3398 + $0x18] sm:$0xf] %vm3191, %v3162
        %3403 = vst.msk [vmem:[%s3398 + $0x20] sm:$0xf] %vm3191, %v3163
        %3404 = vst.msk [vmem:[%s3398 + $0x28] sm:$0xf] %vm3191, %v3164
        %3405 = vst.msk [vmem:[%s3398 + $0x30] sm:$0xf] %vm3191, %v3165
        %3406 = vst.msk [vmem:[%s3398 + $0x38] sm:$0xf] %vm3191, %v3166
        %v3408 = vshrl.u32 %v3167, 16
        %v3410 = vrot.slane %v3408, 7
        %v3411 = vshll.u32 %v3167, 16
        %v3413 = vor.u32 %v3410, %v3411
        %v3414 = vrot.slane %v3410, 4
        %v3416 = vshrl.u32 %v3168, 16
        %v3418 = vrot.slane %v3416, 7
        %v3419 = vshll.u32 %v3168, 16
        %v3421 = vor.u32 %v3418, %v3419
        %v3422 = vrot.slane %v3418, 4
        %v3424 = vshrl.u32 %v3169, 16
        %v3426 = vrot.slane %v3424, 7
        %v3427 = vshll.u32 %v3169, 16
        %v3429 = vor.u32 %v3426, %v3427
        %v3430 = vrot.slane %v3426, 4
        %v3432 = vshrl.u32 %v3170, 16
        %v3434 = vrot.slane %v3432, 7
        %v3435 = vshll.u32 %v3170, 16
        %v3437 = vor.u32 %v3434, %v3435
        %v3438 = vrot.slane %v3434, 4
        %v3440 = vshrl.u32 %v3171, 16
        %v3442 = vrot.slane %v3440, 7
        %v3443 = vshll.u32 %v3171, 16
        %v3445 = vor.u32 %v3442, %v3443
        %v3446 = vrot.slane %v3442, 4
        %v3448 = vshrl.u32 %v3172, 16
        %v3450 = vrot.slane %v3448, 7
        %v3451 = vshll.u32 %v3172, 16
        %v3453 = vor.u32 %v3450, %v3451
        %v3454 = vrot.slane %v3450, 4
        %v3456 = vshrl.u32 %v3173, 16
        %v3458 = vrot.slane %v3456, 7
        %v3459 = vshll.u32 %v3173, 16
        %v3461 = vor.u32 %v3458, %v3459
        %v3462 = vrot.slane %v3458, 4
        %v3464 = vshrl.u32 %v3174, 16
        %v3466 = vrot.slane %v3464, 7
        %v3467 = vshll.u32 %v3174, 16
        %v3469 = vor.u32 %v3466, %v3467
        %v3470 = vrot.slane %v3466, 4
        %s3487 = scalar_lea.vmem [#allocation2], 8
        %v3488 = vld [vmem:[%s3487] sm:$0xf]
        %v3489 = vsel %vm3349, %v3413, %v3488
        %3490 = vst [vmem:[%s3487] sm:$0xf] %v3489
        %v3491 = vld [vmem:[%s3487 + $0x4] sm:$0x1]
        %v3492 = vsel %vm3195, %v3414, %v3491
        %3493 = vst [vmem:[%s3487 + $0x4] sm:$0x1] %v3492
        %v3494 = vld [vmem:[%s3487 + $0x8] sm:$0xf]
        %v3495 = vsel %vm3349, %v3421, %v3494
        %3496 = vst [vmem:[%s3487 + $0x8] sm:$0xf] %v3495
        %v3497 = vld [vmem:[%s3487 + $0xc] sm:$0x1]
        %v3498 = vsel %vm3195, %v3422, %v3497
        %3499 = vst [vmem:[%s3487 + $0xc] sm:$0x1] %v3498
        %v3500 = vld [vmem:[%s3487 + $0x10] sm:$0xf]
        %v3501 = vsel %vm3349, %v3429, %v3500
        %3502 = vst [vmem:[%s3487 + $0x10] sm:$0xf] %v3501
        %v3503 = vld [vmem:[%s3487 + $0x14] sm:$0x1]
        %v3504 = vsel %vm3195, %v3430, %v3503
        %3505 = vst [vmem:[%s3487 + $0x14] sm:$0x1] %v3504
        %v3506 = vld [vmem:[%s3487 + $0x18] sm:$0xf]
        %v3507 = vsel %vm3349, %v3437, %v3506
        %3508 = vst [vmem:[%s3487 + $0x18] sm:$0xf] %v3507
        %v3509 = vld [vmem:[%s3487 + $0x1c] sm:$0x1]
        %v3510 = vsel %vm3195, %v3438, %v3509
        %3511 = vst [vmem:[%s3487 + $0x1c] sm:$0x1] %v3510
        %v3512 = vld [vmem:[%s3487 + $0x20] sm:$0xf]
        %v3513 = vsel %vm3349, %v3445, %v3512
        %3514 = vst [vmem:[%s3487 + $0x20] sm:$0xf] %v3513
        %v3515 = vld [vmem:[%s3487 + $0x24] sm:$0x1]
        %v3516 = vsel %vm3195, %v3446, %v3515
        %3517 = vst [vmem:[%s3487 + $0x24] sm:$0x1] %v3516
        %v3518 = vld [vmem:[%s3487 + $0x28] sm:$0xf]
        %v3519 = vsel %vm3349, %v3453, %v3518
        %3520 = vst [vmem:[%s3487 + $0x28] sm:$0xf] %v3519
        %v3521 = vld [vmem:[%s3487 + $0x2c] sm:$0x1]
        %v3522 = vsel %vm3195, %v3454, %v3521
        %3523 = vst [vmem:[%s3487 + $0x2c] sm:$0x1] %v3522
        %v3524 = vld [vmem:[%s3487 + $0x30] sm:$0xf]
        %v3525 = vsel %vm3349, %v3461, %v3524
        %3526 = vst [vmem:[%s3487 + $0x30] sm:$0xf] %v3525
        %v3527 = vld [vmem:[%s3487 + $0x34] sm:$0x1]
        %v3528 = vsel %vm3195, %v3462, %v3527
        %3529 = vst [vmem:[%s3487 + $0x34] sm:$0x1] %v3528
        %v3530 = vld [vmem:[%s3487 + $0x38] sm:$0xf]
        %v3531 = vsel %vm3349, %v3469, %v3530
        %3532 = vst [vmem:[%s3487 + $0x38] sm:$0xf] %v3531
        %v3533 = vld [vmem:[%s3487 + $0x3c] sm:$0x1]
        %v3534 = vsel %vm3195, %v3470, %v3533
        %3535 = vst [vmem:[%s3487 + $0x3c] sm:$0x1] %v3534
        %v3536 = vld [vmem:[#allocation2] sm:$0xf]
        %v3537 = vld [vmem:[#allocation2 + $0x8] sm:$0xf]
        %v3538 = vld [vmem:[#allocation2 + $0x10] sm:$0xf]
        %v3539 = vld [vmem:[#allocation2 + $0x18] sm:$0xf]
        %v3540 = vld [vmem:[#allocation2 + $0x20] sm:$0xf]
        %v3541 = vld [vmem:[#allocation2 + $0x28] sm:$0xf]
        %v3542 = vld [vmem:[#allocation2 + $0x30] sm:$0xf]
        %v3543 = vld [vmem:[#allocation2 + $0x38] sm:$0xf]
        %s3544 = scalar_lea.vmem [#allocation2], 72
        %v3545 = vld [vmem:[%s3544] sm:$0xf]
        %v3546 = vld [vmem:[%s3544 + $0x8] sm:$0xf]
        %v3547 = vld [vmem:[%s3544 + $0x10] sm:$0xf]
        %v3548 = vld [vmem:[%s3544 + $0x18] sm:$0xf]
        %v3549 = vld [vmem:[%s3544 + $0x20] sm:$0xf]
        %v3550 = vld [vmem:[%s3544 + $0x28] sm:$0xf]
        %v3551 = vld [vmem:[%s3544 + $0x30] sm:$0xf]
        %v3552 = vld [vmem:[%s3544 + $0x38] sm:$0xf]
        %v3553 = vld [vmem:[#allocation2 + $0x4] sm:$0x1]
        %v3554 = vld [vmem:[#allocation2 + $0xc] sm:$0x1]
        %v3555 = vld [vmem:[#allocation2 + $0x14] sm:$0x1]
        %v3556 = vld [vmem:[#allocation2 + $0x1c] sm:$0x1]
        %v3557 = vld [vmem:[#allocation2 + $0x24] sm:$0x1]
        %v3558 = vld [vmem:[#allocation2 + $0x2c] sm:$0x1]
        %v3559 = vld [vmem:[#allocation2 + $0x34] sm:$0x1]
        %v3560 = vld [vmem:[#allocation2 + $0x3c] sm:$0x1]
        %v3562 = vshrl.u32 %v3536, 16
        %v3564 = vrot.slane %v3562, 4
        %v3565 = vshll.u32 %v3536, 16
        %v3567 = vrot.slane %v3565, 5
        %v3568 = vor.u32 %v3564, %v3567
        %v3569 = vrot.slane %v3568, 4
        %v3571 = vshll.u32 %v3553, 16
        %v3573 = vrot.slane %v3571, 5
        %v3574 = vsel %vm2259, %v3569, %v3573
        %v3576 = vshrl.u32 %v3537, 16
        %v3578 = vrot.slane %v3576, 4
        %v3579 = vshll.u32 %v3537, 16
        %v3581 = vrot.slane %v3579, 5
        %v3582 = vor.u32 %v3578, %v3581
        %v3583 = vrot.slane %v3582, 4
        %v3585 = vshll.u32 %v3554, 16
        %v3587 = vrot.slane %v3585, 5
        %v3588 = vsel %vm2259, %v3583, %v3587
        %v3590 = vshrl.u32 %v3538, 16
        %v3592 = vrot.slane %v3590, 4
        %v3593 = vshll.u32 %v3538, 16
        %v3595 = vrot.slane %v3593, 5
        %v3596 = vor.u32 %v3592, %v3595
        %v3597 = vrot.slane %v3596, 4
        %v3599 = vshll.u32 %v3555, 16
        %v3601 = vrot.slane %v3599, 5
        %v3602 = vsel %vm2259, %v3597, %v3601
        %v3604 = vshrl.u32 %v3539, 16
        %v3606 = vrot.slane %v3604, 4
        %v3607 = vshll.u32 %v3539, 16
        %v3609 = vrot.slane %v3607, 5
        %v3610 = vor.u32 %v3606, %v3609
        %v3611 = vrot.slane %v3610, 4
        %v3613 = vshll.u32 %v3556, 16
        %v3615 = vrot.slane %v3613, 5
        %v3616 = vsel %vm2259, %v3611, %v3615
        %v3618 = vshrl.u32 %v3540, 16
        %v3620 = vrot.slane %v3618, 4
        %v3621 = vshll.u32 %v3540, 16
        %v3623 = vrot.slane %v3621, 5
        %v3624 = vor.u32 %v3620, %v3623
        %v3625 = vrot.slane %v3624, 4
        %v3627 = vshll.u32 %v3557, 16
        %v3629 = vrot.slane %v3627, 5
        %v3630 = vsel %vm2259, %v3625, %v3629
        %v3632 = vshrl.u32 %v3541, 16
        %v3634 = vrot.slane %v3632, 4
        %v3635 = vshll.u32 %v3541, 16
        %v3637 = vrot.slane %v3635, 5
        %v3638 = vor.u32 %v3634, %v3637
        %v3639 = vrot.slane %v3638, 4
        %v3641 = vshll.u32 %v3558, 16
        %v3643 = vrot.slane %v3641, 5
        %v3644 = vsel %vm2259, %v3639, %v3643
        %v3646 = vshrl.u32 %v3542, 16
        %v3648 = vrot.slane %v3646, 4
        %v3649 = vshll.u32 %v3542, 16
        %v3651 = vrot.slane %v3649, 5
        %v3652 = vor.u32 %v3648, %v3651
        %v3653 = vrot.slane %v3652, 4
        %v3655 = vshll.u32 %v3559, 16
        %v3657 = vrot.slane %v3655, 5
        %v3658 = vsel %vm2259, %v3653, %v3657
        %v3660 = vshrl.u32 %v3543, 16
        %v3662 = vrot.slane %v3660, 4
        %v3663 = vshll.u32 %v3543, 16
        %v3665 = vrot.slane %v3663, 5
        %v3666 = vor.u32 %v3662, %v3665
        %v3667 = vrot.slane %v3666, 4
        %v3669 = vshll.u32 %v3560, 16
        %v3671 = vrot.slane %v3669, 5
        %v3672 = vsel %vm2259, %v3667, %v3671
        %v3673 = vld [vmem:[%s3230] sm:$0xf]
        %v3674 = vld [vmem:[%s3230 + $0x8] sm:$0xf]
        %v3675 = vld [vmem:[%s3230 + $0x10] sm:$0xf]
        %v3676 = vld [vmem:[%s3230 + $0x18] sm:$0xf]
        %v3677 = vld [vmem:[%s3230 + $0x20] sm:$0xf]
        %v3678 = vld [vmem:[%s3230 + $0x28] sm:$0xf]
        %v3679 = vld [vmem:[%s3230 + $0x30] sm:$0xf]
        %v3680 = vld [vmem:[%s3230 + $0x38] sm:$0xf]
        %v3681 = vld [vmem:[%s3258] sm:$0xf]
        %v3682 = vld [vmem:[%s3258 + $0x8] sm:$0xf]
        %v3683 = vld [vmem:[%s3258 + $0x10] sm:$0xf]
        %v3684 = vld [vmem:[%s3258 + $0x18] sm:$0xf]
        %v3685 = vld [vmem:[%s3258 + $0x20] sm:$0xf]
        %v3686 = vld [vmem:[%s3258 + $0x28] sm:$0xf]
        %v3687 = vld [vmem:[%s3258 + $0x30] sm:$0xf]
        %v3688 = vld [vmem:[%s3258 + $0x38] sm:$0xf]
        %v3689 = vld [vmem:[%s3230 + $0x4] sm:$0x1]
        %v3690 = vld [vmem:[%s3230 + $0xc] sm:$0x1]
        %v3691 = vld [vmem:[%s3230 + $0x14] sm:$0x1]
        %v3692 = vld [vmem:[%s3230 + $0x1c] sm:$0x1]
        %v3693 = vld [vmem:[%s3230 + $0x24] sm:$0x1]
        %v3694 = vld [vmem:[%s3230 + $0x2c] sm:$0x1]
        %v3695 = vld [vmem:[%s3230 + $0x34] sm:$0x1]
        %v3696 = vld [vmem:[%s3230 + $0x3c] sm:$0x1]
        %v3698 = vshrl.u32 %v3673, 16
        %v3700 = vrot.slane %v3698, 4
        %v3701 = vshll.u32 %v3673, 16
        %v3703 = vrot.slane %v3701, 5
        %v3704 = vor.u32 %v3700, %v3703
        %v3705 = vrot.slane %v3704, 4
        %v3707 = vshll.u32 %v3689, 16
        %v3709 = vrot.slane %v3707, 5
        %v3710 = vsel %vm2259, %v3705, %v3709
        %v3712 = vshrl.u32 %v3674, 16
        %v3714 = vrot.slane %v3712, 4
        %v3715 = vshll.u32 %v3674, 16
        %v3717 = vrot.slane %v3715, 5
        %v3718 = vor.u32 %v3714, %v3717
        %v3719 = vrot.slane %v3718, 4
        %v3721 = vshll.u32 %v3690, 16
        %v3723 = vrot.slane %v3721, 5
        %v3724 = vsel %vm2259, %v3719, %v3723
        %v3726 = vshrl.u32 %v3675, 16
        %v3728 = vrot.slane %v3726, 4
        %v3729 = vshll.u32 %v3675, 16
        %v3731 = vrot.slane %v3729, 5
        %v3732 = vor.u32 %v3728, %v3731
        %v3733 = vrot.slane %v3732, 4
        %v3735 = vshll.u32 %v3691, 16
        %v3737 = vrot.slane %v3735, 5
        %v3738 = vsel %vm2259, %v3733, %v3737
        %v3740 = vshrl.u32 %v3676, 16
        %v3742 = vrot.slane %v3740, 4
        %v3743 = vshll.u32 %v3676, 16
        %v3745 = vrot.slane %v3743, 5
        %v3746 = vor.u32 %v3742, %v3745
        %v3747 = vrot.slane %v3746, 4
        %v3749 = vshll.u32 %v3692, 16
        %v3751 = vrot.slane %v3749, 5
        %v3752 = vsel %vm2259, %v3747, %v3751
        %v3754 = vshrl.u32 %v3677, 16
        %v3756 = vrot.slane %v3754, 4
        %v3757 = vshll.u32 %v3677, 16
        %v3759 = vrot.slane %v3757, 5
        %v3760 = vor.u32 %v3756, %v3759
        %v3761 = vrot.slane %v3760, 4
        %v3763 = vshll.u32 %v3693, 16
        %v3765 = vrot.slane %v3763, 5
        %v3766 = vsel %vm2259, %v3761, %v3765
        %v3768 = vshrl.u32 %v3678, 16
        %v3770 = vrot.slane %v3768, 4
        %v3771 = vshll.u32 %v3678, 16
        %v3773 = vrot.slane %v3771, 5
        %v3774 = vor.u32 %v3770, %v3773
        %v3775 = vrot.slane %v3774, 4
        %v3777 = vshll.u32 %v3694, 16
        %v3779 = vrot.slane %v3777, 5
        %v3780 = vsel %vm2259, %v3775, %v3779
        %v3782 = vshrl.u32 %v3679, 16
        %v3784 = vrot.slane %v3782, 4
        %v3785 = vshll.u32 %v3679, 16
        %v3787 = vrot.slane %v3785, 5
        %v3788 = vor.u32 %v3784, %v3787
        %v3789 = vrot.slane %v3788, 4
        %v3791 = vshll.u32 %v3695, 16
        %v3793 = vrot.slane %v3791, 5
        %v3794 = vsel %vm2259, %v3789, %v3793
        %v3796 = vshrl.u32 %v3680, 16
        %v3798 = vrot.slane %v3796, 4
        %v3799 = vshll.u32 %v3680, 16
        %v3801 = vrot.slane %v3799, 5
        %v3802 = vor.u32 %v3798, %v3801
        %v3803 = vrot.slane %v3802, 4
        %v3805 = vshll.u32 %v3696, 16
        %v3807 = vrot.slane %v3805, 5
        %v3808 = vsel %vm2259, %v3803, %v3807
        %v3809 = vld [vmem:[%s3487] sm:$0xf]
        %v3810 = vld [vmem:[%s3487 + $0x8] sm:$0xf]
        %v3811 = vld [vmem:[%s3487 + $0x10] sm:$0xf]
        %v3812 = vld [vmem:[%s3487 + $0x18] sm:$0xf]
        %v3813 = vld [vmem:[%s3487 + $0x20] sm:$0xf]
        %v3814 = vld [vmem:[%s3487 + $0x28] sm:$0xf]
        %v3815 = vld [vmem:[%s3487 + $0x30] sm:$0xf]
        %v3816 = vld [vmem:[%s3487 + $0x38] sm:$0xf]
        %v3817 = vld [vmem:[%s3398] sm:$0xf]
        %v3818 = vld [vmem:[%s3398 + $0x8] sm:$0xf]
        %v3819 = vld [vmem:[%s3398 + $0x10] sm:$0xf]
        %v3820 = vld [vmem:[%s3398 + $0x18] sm:$0xf]
        %v3821 = vld [vmem:[%s3398 + $0x20] sm:$0xf]
        %v3822 = vld [vmem:[%s3398 + $0x28] sm:$0xf]
        %v3823 = vld [vmem:[%s3398 + $0x30] sm:$0xf]
        %v3824 = vld [vmem:[%s3398 + $0x38] sm:$0xf]
        %v3825 = vld [vmem:[%s3487 + $0x4] sm:$0x1]
        %v3826 = vld [vmem:[%s3487 + $0xc] sm:$0x1]
        %v3827 = vld [vmem:[%s3487 + $0x14] sm:$0x1]
        %v3828 = vld [vmem:[%s3487 + $0x1c] sm:$0x1]
        %v3829 = vld [vmem:[%s3487 + $0x24] sm:$0x1]
        %v3830 = vld [vmem:[%s3487 + $0x2c] sm:$0x1]
        %v3831 = vld [vmem:[%s3487 + $0x34] sm:$0x1]
        %v3832 = vld [vmem:[%s3487 + $0x3c] sm:$0x1]
        %v3834 = vshrl.u32 %v3809, 16
        %v3836 = vrot.slane %v3834, 4
        %v3837 = vshll.u32 %v3809, 16
        %v3839 = vrot.slane %v3837, 5
        %v3840 = vor.u32 %v3836, %v3839
        %v3841 = vrot.slane %v3840, 4
        %v3843 = vshll.u32 %v3825, 16
        %v3845 = vrot.slane %v3843, 5
        %v3846 = vsel %vm2259, %v3841, %v3845
        %v3848 = vshrl.u32 %v3810, 16
        %v3850 = vrot.slane %v3848, 4
        %v3851 = vshll.u32 %v3810, 16
        %v3853 = vrot.slane %v3851, 5
        %v3854 = vor.u32 %v3850, %v3853
        %v3855 = vrot.slane %v3854, 4
        %v3857 = vshll.u32 %v3826, 16
        %v3859 = vrot.slane %v3857, 5
        %v3860 = vsel %vm2259, %v3855, %v3859
        %v3862 = vshrl.u32 %v3811, 16
        %v3864 = vrot.slane %v3862, 4
        %v3865 = vshll.u32 %v3811, 16
        %v3867 = vrot.slane %v3865, 5
        %v3868 = vor.u32 %v3864, %v3867
        %v3869 = vrot.slane %v3868, 4
        %v3871 = vshll.u32 %v3827, 16
        %v3873 = vrot.slane %v3871, 5
        %v3874 = vsel %vm2259, %v3869, %v3873
        %v3876 = vshrl.u32 %v3812, 16
        %v3878 = vrot.slane %v3876, 4
        %v3879 = vshll.u32 %v3812, 16
        %v3881 = vrot.slane %v3879, 5
        %v3882 = vor.u32 %v3878, %v3881
        %v3883 = vrot.slane %v3882, 4
        %v3885 = vshll.u32 %v3828, 16
        %v3887 = vrot.slane %v3885, 5
        %v3888 = vsel %vm2259, %v3883, %v3887
        %v3890 = vshrl.u32 %v3813, 16
        %v3892 = vrot.slane %v3890, 4
        %v3893 = vshll.u32 %v3813, 16
        %v3895 = vrot.slane %v3893, 5
        %v3896 = vor.u32 %v3892, %v3895
        %v3897 = vrot.slane %v3896, 4
        %v3899 = vshll.u32 %v3829, 16
        %v3901 = vrot.slane %v3899, 5
        %v3902 = vsel %vm2259, %v3897, %v3901
        %v3904 = vshrl.u32 %v3814, 16
        %v3906 = vrot.slane %v3904, 4
        %v3907 = vshll.u32 %v3814, 16
        %v3909 = vrot.slane %v3907, 5
        %v3910 = vor.u32 %v3906, %v3909
        %v3911 = vrot.slane %v3910, 4
        %v3913 = vshll.u32 %v3830, 16
        %v3915 = vrot.slane %v3913, 5
        %v3916 = vsel %vm2259, %v3911, %v3915
        %v3918 = vshrl.u32 %v3815, 16
        %v3920 = vrot.slane %v3918, 4
        %v3921 = vshll.u32 %v3815, 16
        %v3923 = vrot.slane %v3921, 5
        %v3924 = vor.u32 %v3920, %v3923
        %v3925 = vrot.slane %v3924, 4
        %v3927 = vshll.u32 %v3831, 16
        %v3929 = vrot.slane %v3927, 5
        %v3930 = vsel %vm2259, %v3925, %v3929
        %v3932 = vshrl.u32 %v3816, 16
        %v3934 = vrot.slane %v3932, 4
        %v3935 = vshll.u32 %v3816, 16
        %v3937 = vrot.slane %v3935, 5
        %v3938 = vor.u32 %v3934, %v3937
        %v3939 = vrot.slane %v3938, 4
        %v3941 = vshll.u32 %v3832, 16
        %v3943 = vrot.slane %v3941, 5
        %v3944 = vsel %vm2259, %v3939, %v3943
        %v3945 = vld [vmem:[%s269] sm:$0xf]
        %v3946 = vld [vmem:[%s269 + $0x4] sm:$0xf]
        %v3947 = vld [vmem:[%s269 + $0x8] sm:$0xf]
        %v3948 = vld [vmem:[%s269 + $0xc] sm:$0xf]
        %v3949 = vld [vmem:[%s269 + $0x10] sm:$0xf]
        %v3950 = vld [vmem:[%s269 + $0x14] sm:$0xf]
        %v3951 = vld [vmem:[%s269 + $0x18] sm:$0xf]
        %v3952 = vld [vmem:[%s269 + $0x1c] sm:$0xf]
        %v3961 = vunpack.c.l.b16 %v3536
        %v3962 = vunpack.c.l.b16 %v3537
        %v3963 = vunpack.c.l.b16 %v3538
        %v3964 = vunpack.c.l.b16 %v3539
        %v3965 = vunpack.c.l.b16 %v3540
        %v3966 = vunpack.c.l.b16 %v3541
        %v3967 = vunpack.c.l.b16 %v3542
        %v3968 = vunpack.c.l.b16 %v3543
        %v3969 = vpack.c.b16 %v3962, %v3961
        %v3970 = vpack.c.b16 %v3964, %v3963
        %v3971 = vpack.c.b16 %v3966, %v3965
        %v3972 = vpack.c.b16 %v3968, %v3967
        %v3981 = vunpack.c.l.b16 %v3545
        %v3982 = vunpack.c.l.b16 %v3546
        %v3983 = vunpack.c.l.b16 %v3547
        %v3984 = vunpack.c.l.b16 %v3548
        %v3985 = vunpack.c.l.b16 %v3549
        %v3986 = vunpack.c.l.b16 %v3550
        %v3987 = vunpack.c.l.b16 %v3551
        %v3988 = vunpack.c.l.b16 %v3552
        %v3989 = vpack.c.b16 %v3982, %v3981
        %v3990 = vpack.c.b16 %v3984, %v3983
        %v3991 = vpack.c.b16 %v3986, %v3985
        %v3992 = vpack.c.b16 %v3988, %v3987
        %3993 = vrot.lane.b32.xlu0 %v3989, 8
        %v3994 = vpop.permute.xlu0 %3993
        %3995 = vrot.lane.b32.xlu0 %v3990, 8
        %v3996 = vpop.permute.xlu0 %3995
        %3997 = vrot.lane.b32.xlu0 %v3991, 8
        %v3998 = vpop.permute.xlu0 %3997
        %3999 = vrot.lane.b32.xlu0 %v3992, 8
        %v4000 = vpop.permute.xlu0 %3999
        %v4001 = vunpack.c.l.b16 %v3574
        %v4002 = vunpack.c.l.b16 %v3588
        %v4003 = vunpack.c.l.b16 %v3602
        %v4004 = vunpack.c.l.b16 %v3616
        %v4005 = vunpack.c.l.b16 %v3630
        %v4006 = vunpack.c.l.b16 %v3644
        %v4007 = vunpack.c.l.b16 %v3658
        %v4008 = vunpack.c.l.b16 %v3672
        %v4009 = vpack.c.b16 %v4002, %v4001
        %v4010 = vpack.c.b16 %v4004, %v4003
        %v4011 = vpack.c.b16 %v4006, %v4005
        %v4012 = vpack.c.b16 %v4008, %v4007
        %4013 = vrot.lane.b32.xlu0 %v4009, 16
        %v4014 = vpop.permute.xlu0 %4013
        %4015 = vrot.lane.b32.xlu0 %v4010, 16
        %v4016 = vpop.permute.xlu0 %4015
        %4017 = vrot.lane.b32.xlu0 %v4011, 16
        %v4018 = vpop.permute.xlu0 %4017
        %4019 = vrot.lane.b32.xlu0 %v4012, 16
        %v4020 = vpop.permute.xlu0 %4019
        %v4029 = vunpack.c.l.b16 %v3673
        %v4030 = vunpack.c.l.b16 %v3674
        %v4031 = vunpack.c.l.b16 %v3675
        %v4032 = vunpack.c.l.b16 %v3676
        %v4033 = vunpack.c.l.b16 %v3677
        %v4034 = vunpack.c.l.b16 %v3678
        %v4035 = vunpack.c.l.b16 %v3679
        %v4036 = vunpack.c.l.b16 %v3680
        %v4037 = vpack.c.b16 %v4030, %v4029
        %v4038 = vpack.c.b16 %v4032, %v4031
        %v4039 = vpack.c.b16 %v4034, %v4033
        %v4040 = vpack.c.b16 %v4036, %v4035
        %4041 = vrot.lane.b32.xlu0 %v4037, 24
        %v4042 = vpop.permute.xlu0 %4041
        %4043 = vrot.lane.b32.xlu0 %v4038, 24
        %v4044 = vpop.permute.xlu0 %4043
        %4045 = vrot.lane.b32.xlu0 %v4039, 24
        %v4046 = vpop.permute.xlu0 %4045
        %4047 = vrot.lane.b32.xlu0 %v4040, 24
        %v4048 = vpop.permute.xlu0 %4047
        %v4057 = vunpack.c.l.b16 %v3681
        %v4058 = vunpack.c.l.b16 %v3682
        %v4059 = vunpack.c.l.b16 %v3683
        %v4060 = vunpack.c.l.b16 %v3684
        %v4061 = vunpack.c.l.b16 %v3685
        %v4062 = vunpack.c.l.b16 %v3686
        %v4063 = vunpack.c.l.b16 %v3687
        %v4064 = vunpack.c.l.b16 %v3688
        %v4065 = vpack.c.b16 %v4058, %v4057
        %v4066 = vpack.c.b16 %v4060, %v4059
        %v4067 = vpack.c.b16 %v4062, %v4061
        %v4068 = vpack.c.b16 %v4064, %v4063
        %4069 = vrot.lane.b32.xlu0 %v4065, 32
        %v4070 = vpop.permute.xlu0 %4069
        %4071 = vrot.lane.b32.xlu0 %v4066, 32
        %v4072 = vpop.permute.xlu0 %4071
        %4073 = vrot.lane.b32.xlu0 %v4067, 32
        %v4074 = vpop.permute.xlu0 %4073
        %4075 = vrot.lane.b32.xlu0 %v4068, 32
        %v4076 = vpop.permute.xlu0 %4075
        %v4077 = vunpack.c.l.b16 %v3710
        %v4078 = vunpack.c.l.b16 %v3724
        %v4079 = vunpack.c.l.b16 %v3738
        %v4080 = vunpack.c.l.b16 %v3752
        %v4081 = vunpack.c.l.b16 %v3766
        %v4082 = vunpack.c.l.b16 %v3780
        %v4083 = vunpack.c.l.b16 %v3794
        %v4084 = vunpack.c.l.b16 %v3808
        %v4085 = vpack.c.b16 %v4078, %v4077
        %v4086 = vpack.c.b16 %v4080, %v4079
        %v4087 = vpack.c.b16 %v4082, %v4081
        %v4088 = vpack.c.b16 %v4084, %v4083
        %4089 = vrot.lane.b32.xlu0 %v4085, 40
        %v4090 = vpop.permute.xlu0 %4089
        %4091 = vrot.lane.b32.xlu0 %v4086, 40
        %v4092 = vpop.permute.xlu0 %4091
        %4093 = vrot.lane.b32.xlu0 %v4087, 40
        %v4094 = vpop.permute.xlu0 %4093
        %4095 = vrot.lane.b32.xlu0 %v4088, 40
        %v4096 = vpop.permute.xlu0 %4095
        %v4105 = vunpack.c.l.b16 %v3809
        %v4106 = vunpack.c.l.b16 %v3810
        %v4107 = vunpack.c.l.b16 %v3811
        %v4108 = vunpack.c.l.b16 %v3812
        %v4109 = vunpack.c.l.b16 %v3813
        %v4110 = vunpack.c.l.b16 %v3814
        %v4111 = vunpack.c.l.b16 %v3815
        %v4112 = vunpack.c.l.b16 %v3816
        %v4113 = vpack.c.b16 %v4106, %v4105
        %v4114 = vpack.c.b16 %v4108, %v4107
        %v4115 = vpack.c.b16 %v4110, %v4109
        %v4116 = vpack.c.b16 %v4112, %v4111
        %4117 = vrot.lane.b32.xlu0 %v4113, 48
        %v4118 = vpop.permute.xlu0 %4117
        %4119 = vrot.lane.b32.xlu0 %v4114, 48
        %v4120 = vpop.permute.xlu0 %4119
        %4121 = vrot.lane.b32.xlu0 %v4115, 48
        %v4122 = vpop.permute.xlu0 %4121
        %4123 = vrot.lane.b32.xlu0 %v4116, 48
        %v4124 = vpop.permute.xlu0 %4123
        %v4133 = vunpack.c.l.b16 %v3817
        %v4134 = vunpack.c.l.b16 %v3818
        %v4135 = vunpack.c.l.b16 %v3819
        %v4136 = vunpack.c.l.b16 %v3820
        %v4137 = vunpack.c.l.b16 %v3821
        %v4138 = vunpack.c.l.b16 %v3822
        %v4139 = vunpack.c.l.b16 %v3823
        %v4140 = vunpack.c.l.b16 %v3824
        %v4141 = vpack.c.b16 %v4134, %v4133
        %v4142 = vpack.c.b16 %v4136, %v4135
        %v4143 = vpack.c.b16 %v4138, %v4137
        %v4144 = vpack.c.b16 %v4140, %v4139
        %4145 = vrot.lane.b32.xlu0 %v4141, 56
        %v4146 = vpop.permute.xlu0 %4145
        %4147 = vrot.lane.b32.xlu0 %v4142, 56
        %v4148 = vpop.permute.xlu0 %4147
        %4149 = vrot.lane.b32.xlu0 %v4143, 56
        %v4150 = vpop.permute.xlu0 %4149
        %4151 = vrot.lane.b32.xlu0 %v4144, 56
        %v4152 = vpop.permute.xlu0 %4151
        %v4153 = vunpack.c.l.b16 %v3846
        %v4154 = vunpack.c.l.b16 %v3860
        %v4155 = vunpack.c.l.b16 %v3874
        %v4156 = vunpack.c.l.b16 %v3888
        %v4157 = vunpack.c.l.b16 %v3902
        %v4158 = vunpack.c.l.b16 %v3916
        %v4159 = vunpack.c.l.b16 %v3930
        %v4160 = vunpack.c.l.b16 %v3944
        %v4161 = vpack.c.b16 %v4154, %v4153
        %v4162 = vpack.c.b16 %v4156, %v4155
        %v4163 = vpack.c.b16 %v4158, %v4157
        %v4164 = vpack.c.b16 %v4160, %v4159
        %4165 = vrot.lane.b32.xlu0 %v4161, 64
        %v4166 = vpop.permute.xlu0 %4165
        %4167 = vrot.lane.b32.xlu0 %v4162, 64
        %v4168 = vpop.permute.xlu0 %4167
        %4169 = vrot.lane.b32.xlu0 %v4163, 64
        %v4170 = vpop.permute.xlu0 %4169
        %4171 = vrot.lane.b32.xlu0 %v4164, 64
        %v4172 = vpop.permute.xlu0 %4171
        %v4181 = vunpack.c.l.b16 %v3945
        %v4182 = vunpack.c.l.b16 %v3946
        %v4183 = vunpack.c.l.b16 %v3947
        %v4184 = vunpack.c.l.b16 %v3948
        %v4185 = vunpack.c.l.b16 %v3949
        %v4186 = vunpack.c.l.b16 %v3950
        %v4187 = vunpack.c.l.b16 %v3951
        %v4188 = vunpack.c.l.b16 %v3952
        %v4189 = vpack.c.b16 %v4182, %v4181
        %v4190 = vpack.c.b16 %v4184, %v4183
        %v4191 = vpack.c.b16 %v4186, %v4185
        %v4192 = vpack.c.b16 %v4188, %v4187
        %4193 = vrot.lane.b32.xlu0 %v4189, 72
        %v4194 = vpop.permute.xlu0 %4193
        %4195 = vrot.lane.b32.xlu0 %v4190, 72
        %v4196 = vpop.permute.xlu0 %4195
        %4197 = vrot.lane.b32.xlu0 %v4191, 72
        %v4198 = vpop.permute.xlu0 %4197
        %4199 = vrot.lane.b32.xlu0 %v4192, 72
        %v4200 = vpop.permute.xlu0 %4199
        %v4203 = vsel %vm535, %v3969, %v3994
        %v4206 = vsel %vm535, %v3970, %v3996
        %v4209 = vsel %vm535, %v3971, %v3998
        %v4212 = vsel %vm535, %v3972, %v4000
        %vm4213 = vcmask 130048
        %v4215 = vsel %vm4213, %v4203, %v4014
        %v4217 = vsel %vm4213, %v4206, %v4016
        %v4219 = vsel %vm4213, %v4209, %v4018
        %v4221 = vsel %vm4213, %v4212, %v4020
        %vm4222 = vcmask 195584
        %v4224 = vsel %vm4222, %v4215, %v4042
        %v4226 = vsel %vm4222, %v4217, %v4044
        %v4228 = vsel %vm4222, %v4219, %v4046
        %v4230 = vsel %vm4222, %v4221, %v4048
        %vm4231 = vcmask 261120
        %v4233 = vsel %vm4231, %v4224, %v4070
        %v4235 = vsel %vm4231, %v4226, %v4072
        %v4237 = vsel %vm4231, %v4228, %v4074
        %v4239 = vsel %vm4231, %v4230, %v4076
        %vm4240 = vcmask 326656
        %v4242 = vsel %vm4240, %v4233, %v4090
        %v4244 = vsel %vm4240, %v4235, %v4092
        %v4246 = vsel %vm4240, %v4237, %v4094
        %v4248 = vsel %vm4240, %v4239, %v4096
        %vm4249 = vcmask 392192
        %v4251 = vsel %vm4249, %v4242, %v4118
        %v4253 = vsel %vm4249, %v4244, %v4120
        %v4255 = vsel %vm4249, %v4246, %v4122
        %v4257 = vsel %vm4249, %v4248, %v4124
        %vm4258 = vcmask 457728
        %v4260 = vsel %vm4258, %v4251, %v4146
        %v4262 = vsel %vm4258, %v4253, %v4148
        %v4264 = vsel %vm4258, %v4255, %v4150
        %v4266 = vsel %vm4258, %v4257, %v4152
        %vm4267 = vcmask 523264
        %v4269 = vsel %vm4267, %v4260, %v4166
        %v4271 = vsel %vm4267, %v4262, %v4168
        %v4273 = vsel %vm4267, %v4264, %v4170
        %v4275 = vsel %vm4267, %v4266, %v4172
        %vm4276 = vcmask 588800
        %v4278 = vsel %vm4276, %v4269, %v4194
        %v4280 = vsel %vm4276, %v4271, %v4196
        %v4282 = vsel %vm4276, %v4273, %v4198
        %v4284 = vsel %vm4276, %v4275, %v4200
        %v4285 = vld [vmem:[%s4] sm:$0xf]
        %v4286 = vld [vmem:[%s5] sm:$0xff]
        %4288 = vset.pattern.permute.xlu0 0
        %4289 = vperm.xlu0 %4288, %v4286
        %v4290 = vpop.permute.xlu0 %4289
        %vm4292 = vcmask 621568
        %v4294 = vsel %vm4292, %v4285, 0
        %v4296 = vsel %vm4292, %v4278, 0
        %v4298 = vsel %vm4292, %v4280, 0
        %v4300 = vsel %vm4292, %v4282, 0
        %v4302 = vsel %vm4292, %v4284, 0
        %4304 = vmatprep.subr.bf16.mxu0 0
        %4305 = vmatpush1.bf16.xpose.msra.mxu0 0
        %4306 = vmatprep.subr.bf16.mxu0 0
        %4307 = vmatpush1.bf16.xpose.msra.mxu0 0
        %4308 = vmatprep.subr.bf16.mxu0 0
        %4309 = vmatpush1.bf16.xpose.msra.mxu0 0
        %4310 = vmatprep.subr.bf16.mxu0 0
        %4311 = vmatpush1.bf16.xpose.msra.mxu0 0
        %4312 = vmatprep.subr.bf16.mxu0 0
        %4313 = vmatpush1.bf16.xpose.msra.mxu0 %v4302
        %4314 = vmatprep.subr.bf16.mxu0 0
        %4315 = vmatpush1.bf16.xpose.msra.mxu0 %v4300
        %4316 = vmatprep.subr.bf16.mxu0 0
        %4317 = vmatpush1.bf16.xpose.msra.mxu0 %v4298
        %4318 = vmatprep.subr.bf16.mxu0 0
        %4319 = vmatpush1.bf16.xpose.msra.mxu0 %v4296
        %4320 = vmatprep.subr.bf16.mxu0 0
        %4321 = vmatpush2.bf16.xpose.msra.mxu0 0
        %4322 = vmatprep.subr.bf16.mxu0 0
        %4323 = vmatpush2.bf16.xpose.msra.mxu0 0
        %4324 = vmatprep.subr.bf16.mxu0 0
        %4325 = vmatpush2.bf16.xpose.msra.mxu0 0
        %4326 = vmatprep.subr.bf16.mxu0 0
        %4327 = vmatpush2.bf16.xpose.msra.mxu0 0
        %4328 = vmatprep.subr.bf16.mxu0 0
        %4329 = vmatpush2.bf16.xpose.msra.mxu0 0
        %4330 = vmatprep.subr.bf16.mxu0 0
        %4331 = vmatpush2.bf16.xpose.msra.mxu0 0
        %4332 = vmatprep.subr.bf16.mxu0 0
        %4333 = vmatpush2.bf16.xpose.msra.mxu0 0
        %4334 = vmatprep.subr.bf16.mxu0 0
        %4335 = vmatpush2.bf16.xpose.msra.mxu0 0
        %4336 = vmatprep.mubr.bf16.mxu0 0
        %4337 = vmatmul.mubr.bf16.gmra.mxu0 %v4294
        %v4338 = vpop.f32.mrf.mxu0
        %v4339 = vadd.f32 %v4290, %v4338
        %v4340 = vpop.f32.mrf.mxu0
        %v4341 = vpop.f32.mrf.mxu0
        %v4342 = vpop.f32.mrf.mxu0
        %4343 = vdwg.mxu0
        %4344 = vst.msk [vmem:[%s259] sm:$0xff] %vm4267, %v4339
        %s4345 = sand.u32 %s164, 1
        %s4346 = scalar_lea.sflag [#allocation4], %s4345
        %s4347 = sand.u32 %s164, 1
        %s4348 = smul.addr %s4347, 8
        %s4349 = scalar_lea.vmem [#allocation3], %s4348
        // Predicated region
        $region45: #{tpu_custom_call.1} parent=43 // pred_check
          %p4350 = pneg %p174
        $region46: #{tpu_custom_call.1} parent=43 // pred_check_branch
          %4352 = sbr.rel (%p4350) target = $region48
        $region47: #{tpu_custom_call.1} parent=43 // pred_region
          %s4354 = ssub.s32 128, 128
          %4355 = vsyncadd %s4346, %s4354
          %s4356 = smul.addr %s20, 128
          %s4357 = scalar_lea.hbm %s6, %s4356
          %s4359 = sshll.u32 %s4349, 4
          %s4360 = int_to_ptr.vmem [resolvable:$true] %s4359
          %4362 = dma.vmem_to_hbm [thread:$0]  %s4360, 128, %s4357, %s4346
        $region48: #{tpu_custom_call.1} parent=43 // pred_fallthru
          _
      $region44: #{tpu_custom_call.1} parent=5 // pred_fallthru
        _
      %p4363 = scmp.le.s32.totalorder 2, %s15
      // Predicated region
      $region49: #{tpu_custom_call.1} parent=5 // pred_check
        %p4364 = pneg %p4363
      $region50: #{tpu_custom_call.1} parent=5 // pred_check_branch
        %4366 = sbr.rel (%p4364) target = $region52
      $region51: #{tpu_custom_call.1} parent=5 // pred_region
        %s4367 = ssub.s32 %s15, 2
        // Predicated region
        $region53: #{tpu_custom_call.1} parent=51 // pred_check
          %p4368 = pneg %p180
        $region54: #{tpu_custom_call.1} parent=51 // pred_check_branch
          %4370 = sbr.rel (%p4368) target = $region56
        $region55: #{tpu_custom_call.1} parent=51 // pred_region
          %s4371 = sand.u32 %s165, 1
          %s4372 = scalar_lea.sflag [#allocation4], %s4371
          %s4373 = sand.u32 %s165, 1
          %s4374 = smul.addr %s4373, 8
          %s4375 = scalar_lea.vmem [#allocation3], %s4374
          %4376 = dma.done %s4372, 128
        $region56: #{tpu_custom_call.1} parent=51 // pred_fallthru
          _
      $region52: #{tpu_custom_call.1} parent=5 // pred_fallthru
        _
    $region6: #{tpu_custom_call.1} parent=1 // loop_footer
      %s19 = sadd.s32 1, %s15
    $region7: #{tpu_custom_call.1} parent=1 // loop_footer_branch
      %14 = sbr.rel target = $region3
    $region8: #{tpu_custom_call.1} parent=1 // loop_exit
      _
    %4377 = vsyncpa [#allocation4], 1
    %s4378 = scalar_lea.sflag [#allocation4], 1
    %4379 = vsyncpa %s4378, 1

</llo_original>
